<compile_context>
chip_gen: v7x
topology: tpu7x:2x2x1
jax: 0.10.0
libtpu: 0.0.40
codegen_flags: <defaults>
</compile_context>

<pallas_src>
import jax
import jax.numpy as jnp
from jax.experimental import pallas as pl
from jax.experimental.pallas import tpu as pltpu

SIGMA = 0.25
OMEGA = 100.0
EPS = 1e-8

_COMPILER_PARAMS = pltpu.CompilerParams(
    dimension_semantics=("parallel",),          # batch axis: both TCs on v7x
    vmem_limit_bytes=32 * 1024 * 1024,
)


# ----------------------------------------------------------------------------
# Shared conv body: 3x3 same-padding conv + bias + ReLU as ONE im2col matmul.
#   x_hwc   : (H, W, Cin)   f32 value (already in registers/VMEM)
#   w_ref   : (9*Cin, Cf)   bf16 reshaped conv weights
#   b_ref   : (1, Cf)       f32 bias
#   xpad_ref: (H+2, W+2, Cin) f32 VMEM scratch for the halo
# returns   : (Cf, H*W)     f32, channels on sublanes / spatial on lanes
# ----------------------------------------------------------------------------
def _conv3x3_relu(x_hwc, w_ref, b_ref, xpad_ref):
    H, W, Cin = x_hwc.shape
    # Pad in VMEM (no HBM padded copy).  Zero every step: correct under a
    # megacore-split parallel grid where each core owns its own scratch.
    xpad_ref[...] = jnp.zeros_like(xpad_ref)
    xpad_ref[1:H + 1, 1:W + 1, :] = x_hwc
    xt = xpad_ref[...]                                     # (H+2, W+2, Cin)

    # im2col: 9 shifted views concatenated along channels -> one K=9*Cin matmul.
    taps = [xt[dy:dy + H, dx:dx + W, :] for dy in range(3) for dx in range(3)]
    patches = jnp.concatenate(taps, axis=-1).reshape(H * W, 9 * Cin)
    patches = patches.astype(jnp.bfloat16)                 # bf16 feeds the MXU

    acc = jnp.dot(patches, w_ref[...],
                  preferred_element_type=jnp.float32)      # (H*W, Cf) f32 acc
    acc = jnp.maximum(acc + b_ref[...], 0.0)               # bias + ReLU
    return acc.T                                           # (Cf, H*W) lane-dense


# ----------------------------------------------------------------------------
# Kernel 1: grad_layer forward on the original image (one batch elem per step).
# ----------------------------------------------------------------------------
def conv3x3_relu_kernel(x_ref, w_ref, b_ref, f_ref, xpad_ref):
    # x_ref: (1, H, W, Cin) bf16   w_ref: (9Cin, Cf) bf16   b_ref: (1, Cf) f32
    # f_ref: (1, Cf, H*W)   f32
    x = x_ref[0].astype(jnp.float32)
    f_ref[0] = _conv3x3_relu(x, w_ref, b_ref, xpad_ref)


def conv_relu(img_hwc_bf16, w2, b2):
    B, H, W, Cin = img_hwc_bf16.shape
    Cf = w2.shape[1]
    return pl.pallas_call(
        conv3x3_relu_kernel,
        out_shape=jax.ShapeDtypeStruct((B, Cf, H * W), jnp.float32),
        grid=(B,),
        in_specs=[
            pl.BlockSpec((1, H, W, Cin), lambda b: (b, 0, 0, 0)),
            pl.BlockSpec((9 * Cin, Cf), lambda b: (0, 0)),
            pl.BlockSpec((1, Cf), lambda b: (0, 0)),
        ],
        out_specs=pl.BlockSpec((1, Cf, H * W), lambda b: (b, 0, 0)),
        scratch_shapes=[pltpu.VMEM((H + 2, W + 2, Cin), jnp.float32)],
        compiler_params=_COMPILER_PARAMS,
    )(img_hwc_bf16, w2, b2)


# ----------------------------------------------------------------------------
# Kernel 2: attention map Ac = ReLU(sum_c f * w_c) + per-batch min/max partials.
# Global min/max is finished with a 2-scalar reduce in the wrapper (pass 2 of a
# two-pass reduction), so the grid stays parallel over batch.
# ----------------------------------------------------------------------------
def attention_minmax_kernel(f_ref, wg_ref, ac_ref, mn_ref, mx_ref):
    # f_ref: (1, Cf, HW) f32   wg_ref: (1, Cf, 1) f32
    # ac_ref: (1, 1, HW) f32   mn_ref/mx_ref: (1, 1, 1) f32
    f = f_ref[0]                                           # (Cf, HW)
    wg = wg_ref[0]                                         # (Cf, 1)
    ac = jnp.maximum(jnp.sum(f * wg, axis=0, keepdims=True), 0.0)   # (1, HW)
    ac_ref[0] = ac
    mn_ref[0] = jnp.min(ac, keepdims=True)
    mx_ref[0] = jnp.max(ac, keepdims=True)


def attention_map(f, gw):
    B, Cf, HW = f.shape
    return pl.pallas_call(
        attention_minmax_kernel,
        out_shape=(jax.ShapeDtypeStruct((B, 1, HW), jnp.float32),
                   jax.ShapeDtypeStruct((B, 1, 1), jnp.float32),
                   jax.ShapeDtypeStruct((B, 1, 1), jnp.float32)),
        grid=(B,),
        in_specs=[
            pl.BlockSpec((1, Cf, HW), lambda b: (b, 0, 0)),
            pl.BlockSpec((1, Cf, 1), lambda b: (b, 0, 0)),
        ],
        out_specs=(pl.BlockSpec((1, 1, HW), lambda b: (b, 0, 0)),
                   pl.BlockSpec((1, 1, 1), lambda b: (b, 0, 0)),
                   pl.BlockSpec((1, 1, 1), lambda b: (b, 0, 0))),
        compiler_params=_COMPILER_PARAMS,
    )(f, gw)


# ----------------------------------------------------------------------------
# Kernel 3 (fused): soft-mask + masked image + second grad_layer pass.
# The masked image lives only in VMEM/registers -> no HBM round trip.
# ----------------------------------------------------------------------------
def mask_conv3x3_relu_kernel(ac_ref, mn_ref, mx_ref, x_ref, w_ref, b_ref,
                             fam_ref, xpad_ref):
    # ac_ref: (1, 1, HW) f32     mn_ref/mx_ref: (1, 1) f32 (global scalars)
    # x_ref : (1, H, W, Cin) bf16  w_ref: (9Cin, Cf) bf16   b_ref: (1, Cf) f32
    # fam_ref: (1, Cf, HW) f32
    H, W, Cin = x_ref.shape[1], x_ref.shape[2], x_ref.shape[3]

    ac_col = jnp.transpose(ac_ref[0])                      # (HW, 1)
    denom = mx_ref[...] - mn_ref[...] + EPS                # (1, 1), NaN guard
    scaled = (ac_col - mn_ref[...]) / denom                # (HW, 1)
    keep = 1.0 - jax.nn.sigmoid(OMEGA * (scaled - SIGMA))  # (HW, 1)

    # masked_image = images - images * mask = images * (1 - mask)
    x_flat = x_ref[0].reshape(H * W, Cin).astype(jnp.float32)   # (HW, Cin)
    xm = (x_flat * keep).reshape(H, W, Cin)                     # (H, W, Cin)

    fam_ref[0] = _conv3x3_relu(xm, w_ref, b_ref, xpad_ref)


def mask_conv_relu(ac, ac_min, ac_max, img_hwc_bf16, w2, b2):
    B, H, W, Cin = img_hwc_bf16.shape
    Cf = w2.shape[1]
    HW = H * W
    return pl.pallas_call(
        mask_conv3x3_relu_kernel,
        out_shape=jax.ShapeDtypeStruct((B, Cf, HW), jnp.float32),
        grid=(B,),
        in_specs=[
            pl.BlockSpec((1, 1, HW), lambda b: (b, 0, 0)),
            pl.BlockSpec((1, 1), lambda b: (0, 0)),
            pl.BlockSpec((1, 1), lambda b: (0, 0)),
            pl.BlockSpec((1, H, W, Cin), lambda b: (b, 0, 0, 0)),
            pl.BlockSpec((9 * Cin, Cf), lambda b: (0, 0)),
            pl.BlockSpec((1, Cf), lambda b: (0, 0)),
        ],
        out_specs=pl.BlockSpec((1, Cf, HW), lambda b: (b, 0, 0)),
        scratch_shapes=[pltpu.VMEM((H + 2, W + 2, Cin), jnp.float32)],
        compiler_params=_COMPILER_PARAMS,
    )(ac, ac_min, ac_max, img_hwc_bf16, w2, b2)


# ----------------------------------------------------------------------------
# Full GAIN_regression forward
# ----------------------------------------------------------------------------
def gain_forward(images_nchw, params):
    # images_nchw: (B, Cin, H, W) -- torch layout at the interface.
    B, Cin, H, W = images_nchw.shape
    Cf = params["conv_w"].shape[-1]

    img_hwc = jnp.transpose(images_nchw, (0, 2, 3, 1)).astype(jnp.bfloat16)
    w2 = params["conv_w"].reshape(9 * Cin, Cf).astype(jnp.bfloat16)   # (dy,dx,c)->rows
    b2 = params["conv_b"].reshape(1, Cf).astype(jnp.float32)

    # grad_layer forward (Pallas im2col-conv kernel), f: (B, Cf, H*W)
    f = conv_relu(img_hwc, w2, b2)

    def head(feat_cfhw):
        # tiny classifier head: global avg pool + linear (XLA glue, (B,Cf)@(Cf,K))
        p = jnp.mean(feat_cfhw, axis=-1)
        return p @ params["fc_w"] + params["fc_b"]

    logits = head(f)

    # Backward-hook equivalent, closed form: for an avgpool+linear head the
    # gradient of sum(sigmoid(logits)) wrt the grad_layer output is spatially
    # constant, so weights = adaptive_avg_pool2d(backward_features, 1) equals
    #   (sigmoid'(logits) @ fc_w.T) / (H*W)
    s = jax.nn.sigmoid(logits)
    gw = ((s * (1.0 - s)) @ params["fc_w"].T) / float(H * W)          # (B, Cf)
    gw = gw.reshape(B, Cf, 1).astype(jnp.float32)

    # attention map + per-batch min/max partials (Pallas), then global combine
    ac, mins, maxs = attention_map(f, gw)            # (B,1,HW), (B,1,1), (B,1,1)
    ac_min = jnp.min(mins).reshape(1, 1)
    ac_max = jnp.max(maxs).reshape(1, 1)

    # fused: soft mask + masked image + second grad_layer pass (Pallas)
    f_am = mask_conv_relu(ac, ac_min, ac_max, img_hwc, w2, b2)        # (B, Cf, HW)
    logits_am = head(f_am)

    # heatmap = Ac (post-ReLU); bilinear upsample is identity at stride 1
    heatmap = ac.reshape(B, 1, H, W)                                  # torch layout
    return logits, logits_am, heatmap


if __name__ == "__main__":
    B, Cin, H, W = 2, 4, 16, 16
    Cf, num_classes = 32, 3

    key = jax.random.PRNGKey(0)
    k_img, k_cw, k_cb, k_fw = jax.random.split(key, 4)

    images = jax.random.normal(k_img, (B, Cin, H, W), jnp.float32)
    params = {
        "conv_w": 0.1 * jax.random.normal(k_cw, (3, 3, Cin, Cf), jnp.float32),
        "conv_b": 0.01 * jax.random.normal(k_cb, (Cf,), jnp.float32),
        "fc_w": 0.1 * jax.random.normal(k_fw, (Cf, num_classes), jnp.float32),
        "fc_b": jnp.zeros((num_classes,), jnp.float32),
    }

    logits, logits_am, heatmap = jax.jit(gain_forward)(images, params)
    jax.block_until_ready((logits, logits_am, heatmap))

    assert logits.shape == (B, num_classes)
    assert logits_am.shape == (B, num_classes)
    assert heatmap.shape == (B, 1, H, W)
    assert bool(jnp.all(jnp.isfinite(logits)))
    assert bool(jnp.all(jnp.isfinite(logits_am)))
    assert bool(jnp.all(jnp.isfinite(heatmap)))
    print("KERNEL_OK")
</pallas_src>

<mosaic_0001>
module attributes {stable_mosaic.version = 11 : i64} {
  func.func @conv3x3_relu_kernel(%arg0: i32, %arg1: memref<1x16x16x4xbf16, #tpu.memory_space<vmem>>, %arg2: memref<36x32xbf16, #tpu.memory_space<vmem>>, %arg3: memref<1x32xf32, #tpu.memory_space<vmem>>, %arg4: memref<1x32x256xf32, #tpu.memory_space<vmem>>, %arg5: memref<18x18x4xf32, #tpu.memory_space<vmem>>) attributes {dimension_semantics = [#tpu.dimension_semantics<parallel>], iteration_bounds = array<i64: 2>, scalar_prefetch = 0 : i64, scratch_operands = 1 : i64, tpu.core_type = #tpu.core_type<tc>, window_params = [{transform_indices = @transform_0, window_bounds = array<i64: 1, 16, 16, 4>}, {pipeline_mode = #tpu.pipeline_mode<synchronous>, transform_indices = @transform_1, window_bounds = array<i64: 36, 32>}, {pipeline_mode = #tpu.pipeline_mode<synchronous>, transform_indices = @transform_2, window_bounds = array<i64: 1, 32>}, {transform_indices = @transform_3, window_bounds = array<i64: 1, 32, 256>}]} {
    %c0 = arith.constant 0 : index
    %c0_0 = arith.constant 0 : index
    %c0_1 = arith.constant 0 : index
    %c0_2 = arith.constant 0 : index
    %0 = vector.load %arg1[%c0, %c0_0, %c0_1, %c0_2] : memref<1x16x16x4xbf16, #tpu.memory_space<vmem>>, vector<1x16x16x4xbf16>
    %1 = vector.shape_cast %0 : vector<1x16x16x4xbf16> to vector<16x16x4xbf16>
    %2 = arith.extf %1 : vector<16x16x4xbf16> to vector<16x16x4xf32>
    %cst = arith.constant 0.000000e+00 : f32
    %3 = vector.broadcast %cst : f32 to vector<18x18x4xf32>
    %c0_3 = arith.constant 0 : index
    %c0_4 = arith.constant 0 : index
    %c0_5 = arith.constant 0 : index
    %4 = vector.load %arg5[%c0_3, %c0_4, %c0_5] : memref<18x18x4xf32, #tpu.memory_space<vmem>>, vector<18x18x4xf32>
    tpu.vector_store %arg5[%c0_3, %c0_4, %c0_5], %3 {strides = array<i32>} : memref<18x18x4xf32, #tpu.memory_space<vmem>>, vector<18x18x4xf32>,
    %c1 = arith.constant 1 : index
    %c1_6 = arith.constant 1 : index
    %c0_7 = arith.constant 0 : index
    %5 = vector.load %arg5[%c1, %c1_6, %c0_7] : memref<18x18x4xf32, #tpu.memory_space<vmem>>, vector<16x16x4xf32>
    tpu.vector_store %arg5[%c1, %c1_6, %c0_7], %2 {strides = array<i32>} : memref<18x18x4xf32, #tpu.memory_space<vmem>>, vector<16x16x4xf32>,
    %c0_8 = arith.constant 0 : index
    %c0_9 = arith.constant 0 : index
    %c0_10 = arith.constant 0 : index
    %6 = vector.load %arg5[%c0_8, %c0_9, %c0_10] : memref<18x18x4xf32, #tpu.memory_space<vmem>>, vector<18x18x4xf32>
    %7 = vector.extract_strided_slice %6 {offsets = [0, 0, 0], sizes = [16, 16, 4], strides = [1, 1, 1]} : vector<18x18x4xf32> to vector<16x16x4xf32>
    %8 = vector.extract_strided_slice %6 {offsets = [0, 1, 0], sizes = [16, 16, 4], strides = [1, 1, 1]} : vector<18x18x4xf32> to vector<16x16x4xf32>
    %9 = vector.extract_strided_slice %6 {offsets = [0, 2, 0], sizes = [16, 16, 4], strides = [1, 1, 1]} : vector<18x18x4xf32> to vector<16x16x4xf32>
    %10 = vector.extract_strided_slice %6 {offsets = [1, 0, 0], sizes = [16, 16, 4], strides = [1, 1, 1]} : vector<18x18x4xf32> to vector<16x16x4xf32>
    %11 = vector.extract_strided_slice %6 {offsets = [1, 1, 0], sizes = [16, 16, 4], strides = [1, 1, 1]} : vector<18x18x4xf32> to vector<16x16x4xf32>
    %12 = vector.extract_strided_slice %6 {offsets = [1, 2, 0], sizes = [16, 16, 4], strides = [1, 1, 1]} : vector<18x18x4xf32> to vector<16x16x4xf32>
    %13 = vector.extract_strided_slice %6 {offsets = [2, 0, 0], sizes = [16, 16, 4], strides = [1, 1, 1]} : vector<18x18x4xf32> to vector<16x16x4xf32>
    %14 = vector.extract_strided_slice %6 {offsets = [2, 1, 0], sizes = [16, 16, 4], strides = [1, 1, 1]} : vector<18x18x4xf32> to vector<16x16x4xf32>
    %15 = vector.extract_strided_slice %6 {offsets = [2, 2, 0], sizes = [16, 16, 4], strides = [1, 1, 1]} : vector<18x18x4xf32> to vector<16x16x4xf32>
    %16 = tpu.concatenate %7, %8, %9, %10, %11, %12, %13, %14, %15 in 2 : vector<16x16x4xf32>, vector<16x16x4xf32>, vector<16x16x4xf32>, vector<16x16x4xf32>, vector<16x16x4xf32>, vector<16x16x4xf32>, vector<16x16x4xf32>, vector<16x16x4xf32>, vector<16x16x4xf32> -> vector<16x16x36xf32>
    %17 = vector.shape_cast %16 : vector<16x16x36xf32> to vector<256x36xf32>
    %18 = arith.truncf %17 : vector<256x36xf32> to vector<256x36xbf16>
    %c0_11 = arith.constant 0 : index
    %c0_12 = arith.constant 0 : index
    %19 = vector.load %arg2[%c0_11, %c0_12] : memref<36x32xbf16, #tpu.memory_space<vmem>>, vector<36x32xbf16>
    %cst_13 = arith.constant dense<0.000000e+00> : vector<256x32xf32>
    %20 = tpu.matmul %18, %19, %cst_13 {dimension_numbers = #tpu.dot_dimension_numbers<[1], [0], [0], [1], [0, 0, 1, 1], [], []>} : vector<256x36xbf16>, vector<36x32xbf16>, vector<256x32xf32> -> vector<256x32xf32>
    %c0_14 = arith.constant 0 : index
    %c0_15 = arith.constant 0 : index
    %21 = vector.load %arg3[%c0_14, %c0_15] : memref<1x32xf32, #tpu.memory_space<vmem>>, vector<1x32xf32>
    %22 = vector.broadcast %21 : vector<1x32xf32> to vector<256x32xf32>
    %23 = arith.addf %20, %22 : vector<256x32xf32>
    %cst_16 = arith.constant 0.000000e+00 : f32
    %24 = vector.broadcast %cst_16 : f32 to vector<256x32xf32>
    %25 = arith.maximumf %23, %24 : vector<256x32xf32>
    %26 = tpu.transpose %25, [1, 0] : vector<256x32xf32> -> vector<32x256xf32>
    %c0_17 = arith.constant 0 : index
    %c0_18 = arith.constant 0 : index
    %c0_19 = arith.constant 0 : index
    %27 = vector.load %arg4[%c0_17, %c0_18, %c0_19] : memref<1x32x256xf32, #tpu.memory_space<vmem>>, vector<1x32x256xf32>
    %28 = vector.shape_cast %27 : vector<1x32x256xf32> to vector<32x256xf32>
    %29 = vector.shape_cast %26 : vector<32x256xf32> to vector<1x32x256xf32>
    tpu.vector_store %arg4[%c0_17, %c0_18, %c0_19], %29 {strides = array<i32>} : memref<1x32x256xf32, #tpu.memory_space<vmem>>, vector<1x32x256xf32>,
    return
  }
  func.func @transform_0(%arg0: i32) -> (i32, i32, i32, i32) {
    %c0_i32 = arith.constant 0 : i32
    %c0_i32_0 = arith.constant 0 : i32
    %c0_i32_1 = arith.constant 0 : i32
    %c0_i32_2 = arith.constant 0 : i32
    return %arg0, %c0_i32, %c0_i32_0, %c0_i32_1 : i32, i32, i32, i32
  }
  func.func @transform_1(%arg0: i32) -> (i32, i32) {
    %c0_i32 = arith.constant 0 : i32
    %c0_i32_0 = arith.constant 0 : i32
    %c0_i32_1 = arith.constant 0 : i32
    return %c0_i32, %c0_i32_0 : i32, i32
  }
  func.func @transform_2(%arg0: i32) -> (i32, i32) {
    %c0_i32 = arith.constant 0 : i32
    %c0_i32_0 = arith.constant 0 : i32
    %c0_i32_1 = arith.constant 0 : i32
    return %c0_i32, %c0_i32_0 : i32, i32
  }
  func.func @transform_3(%arg0: i32) -> (i32, i32, i32) {
    %c0_i32 = arith.constant 0 : i32
    %c0_i32_0 = arith.constant 0 : i32
    %c0_i32_1 = arith.constant 0 : i32
    return %arg0, %c0_i32, %c0_i32_0 : i32, i32, i32
  }
}

module attributes {stable_mosaic.version = 11 : i64} {
  func.func @attention_minmax_kernel(%arg0: i32, %arg1: memref<1x32x256xf32, #tpu.memory_space<vmem>>, %arg2: memref<1x32x1xf32, #tpu.memory_space<vmem>>, %arg3: memref<1x1x256xf32, #tpu.memory_space<vmem>>, %arg4: memref<1x1x1xf32, #tpu.memory_space<vmem>>, %arg5: memref<1x1x1xf32, #tpu.memory_space<vmem>>) attributes {dimension_semantics = [#tpu.dimension_semantics<parallel>], iteration_bounds = array<i64: 2>, scalar_prefetch = 0 : i64, scratch_operands = 0 : i64, tpu.core_type = #tpu.core_type<tc>, window_params = [{transform_indices = @transform_0, window_bounds = array<i64: 1, 32, 256>}, {transform_indices = @transform_1, window_bounds = array<i64: 1, 32, 1>}, {transform_indices = @transform_2, window_bounds = array<i64: 1, 1, 256>}, {transform_indices = @transform_3, window_bounds = array<i64: 1, 1, 1>}, {transform_indices = @transform_4, window_bounds = array<i64: 1, 1, 1>}]} {
    %c0 = arith.constant 0 : index
    %c0_0 = arith.constant 0 : index
    %c0_1 = arith.constant 0 : index
    %0 = vector.load %arg1[%c0, %c0_0, %c0_1] : memref<1x32x256xf32, #tpu.memory_space<vmem>>, vector<1x32x256xf32>
    %1 = vector.shape_cast %0 : vector<1x32x256xf32> to vector<32x256xf32>
    %c0_2 = arith.constant 0 : index
    %c0_3 = arith.constant 0 : index
    %c0_4 = arith.constant 0 : index
    %2 = vector.load %arg2[%c0_2, %c0_3, %c0_4] : memref<1x32x1xf32, #tpu.memory_space<vmem>>, vector<1x32x1xf32>
    %3 = vector.shape_cast %2 : vector<1x32x1xf32> to vector<32x1xf32>
    %4 = vector.broadcast %3 : vector<32x1xf32> to vector<32x256xf32>
    %5 = arith.mulf %1, %4 : vector<32x256xf32>
    %cst = arith.constant dense<0.000000e+00> : vector<256xf32>
    %6 = vector.multi_reduction <add>, %5, %cst [0] : vector<32x256xf32> to vector<256xf32>
    %7 = vector.shape_cast %6 : vector<256xf32> to vector<1x256xf32>
    %cst_5 = arith.constant 0.000000e+00 : f32
    %8 = vector.broadcast %cst_5 : f32 to vector<1x256xf32>
    %9 = arith.maximumf %7, %8 : vector<1x256xf32>
    %c0_6 = arith.constant 0 : index
    %c0_7 = arith.constant 0 : index
    %c0_8 = arith.constant 0 : index
    %10 = vector.load %arg3[%c0_6, %c0_7, %c0_8] : memref<1x1x256xf32, #tpu.memory_space<vmem>>, vector<1x1x256xf32>
    %11 = vector.shape_cast %10 : vector<1x1x256xf32> to vector<1x256xf32>
    %12 = vector.shape_cast %9 : vector<1x256xf32> to vector<1x1x256xf32>
    tpu.vector_store %arg3[%c0_6, %c0_7, %c0_8], %12 {strides = array<i32>} : memref<1x1x256xf32, #tpu.memory_space<vmem>>, vector<1x1x256xf32>,
    %13 = vector.shape_cast %9 : vector<1x256xf32> to vector<1x1x256xf32>
    %cst_9 = arith.constant dense<0x7F800000> : vector<1xf32>
    %14 = vector.multi_reduction <minimumf>, %13, %cst_9 [1, 2] : vector<1x1x256xf32> to vector<1xf32>
    %15 = vector.shape_cast %14 : vector<1xf32> to vector<1x1x1xf32>
    %16 = vector.extract %15[0, 0, 0] : f32 from vector<1x1x1xf32>
    %17 = vector.broadcast %16 : f32 to vector<1x1xf32>
    %c0_10 = arith.constant 0 : index
    %c0_11 = arith.constant 0 : index
    %c0_12 = arith.constant 0 : index
    %18 = vector.load %arg4[%c0_10, %c0_11, %c0_12] : memref<1x1x1xf32, #tpu.memory_space<vmem>>, vector<1x1x1xf32>
    %19 = vector.shape_cast %18 : vector<1x1x1xf32> to vector<1x1xf32>
    %20 = vector.shape_cast %17 : vector<1x1xf32> to vector<1x1x1xf32>
    tpu.vector_store %arg4[%c0_10, %c0_11, %c0_12], %20 {strides = array<i32>} : memref<1x1x1xf32, #tpu.memory_space<vmem>>, vector<1x1x1xf32>,
    %21 = vector.shape_cast %9 : vector<1x256xf32> to vector<1x1x256xf32>
    %cst_13 = arith.constant dense<0xFF800000> : vector<1xf32>
    %22 = vector.multi_reduction <maximumf>, %21, %cst_13 [1, 2] : vector<1x1x256xf32> to vector<1xf32>
    %23 = vector.shape_cast %22 : vector<1xf32> to vector<1x1x1xf32>
    %24 = vector.extract %23[0, 0, 0] : f32 from vector<1x1x1xf32>
    %25 = vector.broadcast %24 : f32 to vector<1x1xf32>
    %c0_14 = arith.constant 0 : index
    %c0_15 = arith.constant 0 : index
    %c0_16 = arith.constant 0 : index
    %26 = vector.load %arg5[%c0_14, %c0_15, %c0_16] : memref<1x1x1xf32, #tpu.memory_space<vmem>>, vector<1x1x1xf32>
    %27 = vector.shape_cast %26 : vector<1x1x1xf32> to vector<1x1xf32>
    %28 = vector.shape_cast %25 : vector<1x1xf32> to vector<1x1x1xf32>
    tpu.vector_store %arg5[%c0_14, %c0_15, %c0_16], %28 {strides = array<i32>} : memref<1x1x1xf32, #tpu.memory_space<vmem>>, vector<1x1x1xf32>,
    return
  }
  func.func @transform_0(%arg0: i32) -> (i32, i32, i32) {
    %c0_i32 = arith.constant 0 : i32
    %c0_i32_0 = arith.constant 0 : i32
    %c0_i32_1 = arith.constant 0 : i32
    return %arg0, %c0_i32, %c0_i32_0 : i32, i32, i32
  }
  func.func @transform_1(%arg0: i32) -> (i32, i32, i32) {
    %c0_i32 = arith.constant 0 : i32
    %c0_i32_0 = arith.constant 0 : i32
    %c0_i32_1 = arith.constant 0 : i32
    return %arg0, %c0_i32, %c0_i32_0 : i32, i32, i32
  }
  func.func @transform_2(%arg0: i32) -> (i32, i32, i32) {
    %c0_i32 = arith.constant 0 : i32
    %c0_i32_0 = arith.constant 0 : i32
    %c0_i32_1 = arith.constant 0 : i32
    return %arg0, %c0_i32, %c0_i32_0 : i32, i32, i32
  }
  func.func @transform_3(%arg0: i32) -> (i32, i32, i32) {
    %c0_i32 = arith.constant 0 : i32
    %c0_i32_0 = arith.constant 0 : i32
    %c0_i32_1 = arith.constant 0 : i32
    return %arg0, %c0_i32, %c0_i32_0 : i32, i32, i32
  }
  func.func @transform_4(%arg0: i32) -> (i32, i32, i32) {
    %c0_i32 = arith.constant 0 : i32
    %c0_i32_0 = arith.constant 0 : i32
    %c0_i32_1 = arith.constant 0 : i32
    return %arg0, %c0_i32, %c0_i32_0 : i32, i32, i32
  }
}

module attributes {stable_mosaic.version = 11 : i64} {
  func.func @mask_conv3x3_relu_kernel(%arg0: i32, %arg1: memref<1x1x256xf32, #tpu.memory_space<vmem>>, %arg2: memref<1x1xf32, #tpu.memory_space<vmem>>, %arg3: memref<1x1xf32, #tpu.memory_space<vmem>>, %arg4: memref<1x16x16x4xbf16, #tpu.memory_space<vmem>>, %arg5: memref<36x32xbf16, #tpu.memory_space<vmem>>, %arg6: memref<1x32xf32, #tpu.memory_space<vmem>>, %arg7: memref<1x32x256xf32, #tpu.memory_space<vmem>>, %arg8: memref<18x18x4xf32, #tpu.memory_space<vmem>>) attributes {dimension_semantics = [#tpu.dimension_semantics<parallel>], iteration_bounds = array<i64: 2>, scalar_prefetch = 0 : i64, scratch_operands = 1 : i64, tpu.core_type = #tpu.core_type<tc>, window_params = [{transform_indices = @transform_0, window_bounds = array<i64: 1, 1, 256>}, {pipeline_mode = #tpu.pipeline_mode<synchronous>, transform_indices = @transform_1, window_bounds = array<i64: 1, 1>}, {pipeline_mode = #tpu.pipeline_mode<synchronous>, transform_indices = @transform_2, window_bounds = array<i64: 1, 1>}, {transform_indices = @transform_3, window_bounds = array<i64: 1, 16, 16, 4>}, {pipeline_mode = #tpu.pipeline_mode<synchronous>, transform_indices = @transform_4, window_bounds = array<i64: 36, 32>}, {pipeline_mode = #tpu.pipeline_mode<synchronous>, transform_indices = @transform_5, window_bounds = array<i64: 1, 32>}, {transform_indices = @transform_6, window_bounds = array<i64: 1, 32, 256>}]} {
    %c0 = arith.constant 0 : index
    %c0_0 = arith.constant 0 : index
    %c0_1 = arith.constant 0 : index
    %0 = vector.load %arg1[%c0, %c0_0, %c0_1] : memref<1x1x256xf32, #tpu.memory_space<vmem>>, vector<1x1x256xf32>
    %1 = vector.shape_cast %0 : vector<1x1x256xf32> to vector<1x256xf32>
    %2 = tpu.transpose %1, [1, 0] : vector<1x256xf32> -> vector<256x1xf32>
    %c0_2 = arith.constant 0 : index
    %c0_3 = arith.constant 0 : index
    %3 = vector.load %arg3[%c0_2, %c0_3] : memref<1x1xf32, #tpu.memory_space<vmem>>, vector<1x1xf32>
    %c0_4 = arith.constant 0 : index
    %c0_5 = arith.constant 0 : index
    %4 = vector.load %arg2[%c0_4, %c0_5] : memref<1x1xf32, #tpu.memory_space<vmem>>, vector<1x1xf32>
    %5 = arith.subf %3, %4 : vector<1x1xf32>
    %cst = arith.constant 9.99999993E-9 : f32
    %6 = vector.broadcast %cst : f32 to vector<1x1xf32>
    %7 = arith.addf %5, %6 : vector<1x1xf32>
    %c0_6 = arith.constant 0 : index
    %c0_7 = arith.constant 0 : index
    %8 = vector.load %arg2[%c0_6, %c0_7] : memref<1x1xf32, #tpu.memory_space<vmem>>, vector<1x1xf32>
    %9 = vector.broadcast %8 : vector<1x1xf32> to vector<256x1xf32>
    %10 = arith.subf %2, %9 : vector<256x1xf32>
    %11 = vector.broadcast %7 : vector<1x1xf32> to vector<256x1xf32>
    %12 = arith.divf %10, %11 : vector<256x1xf32>
    %cst_8 = arith.constant 2.500000e-01 : f32
    %13 = vector.broadcast %cst_8 : f32 to vector<256x1xf32>
    %14 = arith.subf %12, %13 : vector<256x1xf32>
    %cst_9 = arith.constant 1.000000e+02 : f32
    %15 = vector.broadcast %cst_9 : f32 to vector<256x1xf32>
    %16 = arith.mulf %15, %14 : vector<256x1xf32>
    %17 = arith.negf %16 : vector<256x1xf32>
    %18 = math.exp %17 : vector<256x1xf32>
    %cst_10 = arith.constant 1.000000e+00 : f32
    %19 = vector.broadcast %cst_10 : f32 to vector<256x1xf32>
    %20 = arith.addf %19, %18 : vector<256x1xf32>
    %21 = arith.divf %19, %20 : vector<256x1xf32>
    %cst_11 = arith.constant 1.000000e+00 : f32
    %22 = vector.broadcast %cst_11 : f32 to vector<256x1xf32>
    %23 = arith.subf %22, %21 : vector<256x1xf32>
    %c0_12 = arith.constant 0 : index
    %c0_13 = arith.constant 0 : index
    %c0_14 = arith.constant 0 : index
    %c0_15 = arith.constant 0 : index
    %24 = vector.load %arg4[%c0_12, %c0_13, %c0_14, %c0_15] : memref<1x16x16x4xbf16, #tpu.memory_space<vmem>>, vector<1x16x16x4xbf16>
    %25 = vector.shape_cast %24 : vector<1x16x16x4xbf16> to vector<16x16x4xbf16>
    %26 = vector.shape_cast %25 : vector<16x16x4xbf16> to vector<256x4xbf16>
    %27 = arith.extf %26 : vector<256x4xbf16> to vector<256x4xf32>
    %28 = vector.broadcast %23 : vector<256x1xf32> to vector<256x4xf32>
    %29 = arith.mulf %27, %28 : vector<256x4xf32>
    %30 = vector.shape_cast %29 : vector<256x4xf32> to vector<16x16x4xf32>
    %cst_16 = arith.constant 0.000000e+00 : f32
    %31 = vector.broadcast %cst_16 : f32 to vector<18x18x4xf32>
    %c0_17 = arith.constant 0 : index
    %c0_18 = arith.constant 0 : index
    %c0_19 = arith.constant 0 : index
    %32 = vector.load %arg8[%c0_17, %c0_18, %c0_19] : memref<18x18x4xf32, #tpu.memory_space<vmem>>, vector<18x18x4xf32>
    tpu.vector_store %arg8[%c0_17, %c0_18, %c0_19], %31 {strides = array<i32>} : memref<18x18x4xf32, #tpu.memory_space<vmem>>, vector<18x18x4xf32>,
    %c1 = arith.constant 1 : index
    %c1_20 = arith.constant 1 : index
    %c0_21 = arith.constant 0 : index
    %33 = vector.load %arg8[%c1, %c1_20, %c0_21] : memref<18x18x4xf32, #tpu.memory_space<vmem>>, vector<16x16x4xf32>
    tpu.vector_store %arg8[%c1, %c1_20, %c0_21], %30 {strides = array<i32>} : memref<18x18x4xf32, #tpu.memory_space<vmem>>, vector<16x16x4xf32>,
    %c0_22 = arith.constant 0 : index
    %c0_23 = arith.constant 0 : index
    %c0_24 = arith.constant 0 : index
    %34 = vector.load %arg8[%c0_22, %c0_23, %c0_24] : memref<18x18x4xf32, #tpu.memory_space<vmem>>, vector<18x18x4xf32>
    %35 = vector.extract_strided_slice %34 {offsets = [0, 0, 0], sizes = [16, 16, 4], strides = [1, 1, 1]} : vector<18x18x4xf32> to vector<16x16x4xf32>
    %36 = vector.extract_strided_slice %34 {offsets = [0, 1, 0], sizes = [16, 16, 4], strides = [1, 1, 1]} : vector<18x18x4xf32> to vector<16x16x4xf32>
    %37 = vector.extract_strided_slice %34 {offsets = [0, 2, 0], sizes = [16, 16, 4], strides = [1, 1, 1]} : vector<18x18x4xf32> to vector<16x16x4xf32>
    %38 = vector.extract_strided_slice %34 {offsets = [1, 0, 0], sizes = [16, 16, 4], strides = [1, 1, 1]} : vector<18x18x4xf32> to vector<16x16x4xf32>
    %39 = vector.extract_strided_slice %34 {offsets = [1, 1, 0], sizes = [16, 16, 4], strides = [1, 1, 1]} : vector<18x18x4xf32> to vector<16x16x4xf32>
    %40 = vector.extract_strided_slice %34 {offsets = [1, 2, 0], sizes = [16, 16, 4], strides = [1, 1, 1]} : vector<18x18x4xf32> to vector<16x16x4xf32>
    %41 = vector.extract_strided_slice %34 {offsets = [2, 0, 0], sizes = [16, 16, 4], strides = [1, 1, 1]} : vector<18x18x4xf32> to vector<16x16x4xf32>
    %42 = vector.extract_strided_slice %34 {offsets = [2, 1, 0], sizes = [16, 16, 4], strides = [1, 1, 1]} : vector<18x18x4xf32> to vector<16x16x4xf32>
    %43 = vector.extract_strided_slice %34 {offsets = [2, 2, 0], sizes = [16, 16, 4], strides = [1, 1, 1]} : vector<18x18x4xf32> to vector<16x16x4xf32>
    %44 = tpu.concatenate %35, %36, %37, %38, %39, %40, %41, %42, %43 in 2 : vector<16x16x4xf32>, vector<16x16x4xf32>, vector<16x16x4xf32>, vector<16x16x4xf32>, vector<16x16x4xf32>, vector<16x16x4xf32>, vector<16x16x4xf32>, vector<16x16x4xf32>, vector<16x16x4xf32> -> vector<16x16x36xf32>
    %45 = vector.shape_cast %44 : vector<16x16x36xf32> to vector<256x36xf32>
    %46 = arith.truncf %45 : vector<256x36xf32> to vector<256x36xbf16>
    %c0_25 = arith.constant 0 : index
    %c0_26 = arith.constant 0 : index
    %47 = vector.load %arg5[%c0_25, %c0_26] : memref<36x32xbf16, #tpu.memory_space<vmem>>, vector<36x32xbf16>
    %cst_27 = arith.constant dense<0.000000e+00> : vector<256x32xf32>
    %48 = tpu.matmul %46, %47, %cst_27 {dimension_numbers = #tpu.dot_dimension_numbers<[1], [0], [0], [1], [0, 0, 1, 1], [], []>} : vector<256x36xbf16>, vector<36x32xbf16>, vector<256x32xf32> -> vector<256x32xf32>
    %c0_28 = arith.constant 0 : index
    %c0_29 = arith.constant 0 : index
    %49 = vector.load %arg6[%c0_28, %c0_29] : memref<1x32xf32, #tpu.memory_space<vmem>>, vector<1x32xf32>
    %50 = vector.broadcast %49 : vector<1x32xf32> to vector<256x32xf32>
    %51 = arith.addf %48, %50 : vector<256x32xf32>
    %cst_30 = arith.constant 0.000000e+00 : f32
    %52 = vector.broadcast %cst_30 : f32 to vector<256x32xf32>
    %53 = arith.maximumf %51, %52 : vector<256x32xf32>
    %54 = tpu.transpose %53, [1, 0] : vector<256x32xf32> -> vector<32x256xf32>
    %c0_31 = arith.constant 0 : index
    %c0_32 = arith.constant 0 : index
    %c0_33 = arith.constant 0 : index
    %55 = vector.load %arg7[%c0_31, %c0_32, %c0_33] : memref<1x32x256xf32, #tpu.memory_space<vmem>>, vector<1x32x256xf32>
    %56 = vector.shape_cast %55 : vector<1x32x256xf32> to vector<32x256xf32>
    %57 = vector.shape_cast %54 : vector<32x256xf32> to vector<1x32x256xf32>
    tpu.vector_store %arg7[%c0_31, %c0_32, %c0_33], %57 {strides = array<i32>} : memref<1x32x256xf32, #tpu.memory_space<vmem>>, vector<1x32x256xf32>,
    return
  }
  func.func @transform_0(%arg0: i32) -> (i32, i32, i32) {
    %c0_i32 = arith.constant 0 : i32
    %c0_i32_0 = arith.constant 0 : i32
    %c0_i32_1 = arith.constant 0 : i32
    return %arg0, %c0_i32, %c0_i32_0 : i32, i32, i32
  }
  func.func @transform_1(%arg0: i32) -> (i32, i32) {
    %c0_i32 = arith.constant 0 : i32
    %c0_i32_0 = arith.constant 0 : i32
    %c0_i32_1 = arith.constant 0 : i32
    return %c0_i32, %c0_i32_0 : i32, i32
  }
  func.func @transform_2(%arg0: i32) -> (i32, i32) {
    %c0_i32 = arith.constant 0 : i32
    %c0_i32_0 = arith.constant 0 : i32
    %c0_i32_1 = arith.constant 0 : i32
    return %c0_i32, %c0_i32_0 : i32, i32
  }
  func.func @transform_3(%arg0: i32) -> (i32, i32, i32, i32) {
    %c0_i32 = arith.constant 0 : i32
    %c0_i32_0 = arith.constant 0 : i32
    %c0_i32_1 = arith.constant 0 : i32
    %c0_i32_2 = arith.constant 0 : i32
    return %arg0, %c0_i32, %c0_i32_0, %c0_i32_1 : i32, i32, i32, i32
  }
  func.func @transform_4(%arg0: i32) -> (i32, i32) {
    %c0_i32 = arith.constant 0 : i32
    %c0_i32_0 = arith.constant 0 : i32
    %c0_i32_1 = arith.constant 0 : i32
    return %c0_i32, %c0_i32_0 : i32, i32
  }
  func.func @transform_5(%arg0: i32) -> (i32, i32) {
    %c0_i32 = arith.constant 0 : i32
    %c0_i32_0 = arith.constant 0 : i32
    %c0_i32_1 = arith.constant 0 : i32
    return %c0_i32, %c0_i32_0 : i32, i32
  }
  func.func @transform_6(%arg0: i32) -> (i32, i32, i32) {
    %c0_i32 = arith.constant 0 : i32
    %c0_i32_0 = arith.constant 0 : i32
    %c0_i32_1 = arith.constant 0 : i32
    return %arg0, %c0_i32, %c0_i32_0 : i32, i32, i32
  }
}

</mosaic_0001>

<llo_original>
// kernel: gain_forward.4
$region0: #{gain_forward.4}
  #allocation0 [shape = 'u32[]', space=smem, size = 0x4, offset = 0x4, fixed_abs, tag = 'smem constant byte address 0x4 - core index']
  #allocation1 [shape = 'u32[144,128]{1,0:T(1,128)}', space=vmem, size = 0x12000, scoped, tag = 'internal scratch']
  %s0 = inlined_call_operand.vmem [shape: f32[2,32,256], index: 0, kind: input, shape index: {}]
  %s1 = inlined_call_operand.vmem [shape: f32[2,32,1], index: 1, kind: input, shape index: {}]
  %s2 = inlined_call_operand.vmem [shape: f32[2,1,256], index: 2, kind: output, shape index: {0}]
  %s3 = inlined_call_operand.vmem [shape: f32[2,1,1], index: 3, kind: output, shape index: {1}]
  %s4 = inlined_call_operand.vmem [shape: f32[2,1,1], index: 4, kind: output, shape index: {2}]
  %5 = xla_tuple %s2, %s3, %s4
  %s6 = sld [smem:[#allocation0]]
  $region57: #{gain_forward.4} parent=0
    _
  %s8 = ssub.s32 1, %s6
  %s9 = scalar_select 0, %s8, %s6
  loop: start=0, step=1, limit=4
  $region2: #{gain_forward.4} parent=0 // loop_pre_header
    _
  $region3: #{gain_forward.4} parent=0 // loop_header
    %s11 = sphi 0, %s15
    %p12 = scmp.ge.s32.totalorder %s11, 4
    %s21 = sphi 0, %s23
    %s24 = sphi 0, %s21
    %s25 = sphi 0, %s24
    %s41 = sphi 0, %s25
    %s47 = sphi 0, %s49
    %s50 = sphi 0, %s47
    %s51 = sphi 0, %s50
    %s67 = sphi 0, %s51
    %s73 = sphi 0, %s75
    %s76 = sphi 0, %s73
    %s77 = sphi 0, %s76
    %s93 = sphi 0, %s77
    %s99 = sphi 0, %s101
    %s102 = sphi 0, %s99
    %s103 = sphi 0, %s102
    %s119 = sphi 0, %s103
    %s125 = sphi 0, %s127
    %s128 = sphi 0, %s125
    %s129 = sphi 0, %s128
    %s145 = sphi 0, %s129
  $region4: #{gain_forward.4} parent=0 // loop_header_branch
    %14 = sbr.rel (%p12) target = $region8
  $region5: #{gain_forward.4} parent=0 // loop_body
    %s16 = ssub.s32 %s11, 1
    %s17 = ssub.s32 %s11, 2
    %s18 = sadd.s32 %s11, 1
    %s19 = ssub.s32 %s11, %s18
    %p20 = scmp.eq.s32.totalorder %s19, 0
    %s22 = sadd.s32 %s21, 1
    %s23 = scalar_select %p20, %s21, %s22
    %p26 = pneg %p20
    %p27 = scmp.eq.s32.totalorder %s11, 1
    %p28 = por %p26, %p27
    %p29 = scmp.ne.s32.totalorder %s21, %s24
    %p30 = scmp.eq.s32.totalorder %s11, 0
    %p31 = por %p29, %p30
    %p32 = scmp.ne.s32.totalorder %s21, %s24
    %p33 = scmp.eq.s32.totalorder %s16, 1
    %p34 = por %p32, %p33
    %p35 = scmp.ne.s32.totalorder %s24, %s25
    %p36 = scmp.eq.s32.totalorder %s16, 0
    %p37 = por %p35, %p36
    %p38 = scmp.ne.s32.totalorder %s24, %s25
    %p39 = scmp.eq.s32.totalorder %s17, 1
    %p40 = por %p38, %p39
    %p42 = scmp.ne.s32.totalorder %s25, %s41
    %p43 = scmp.eq.s32.totalorder %s17, 0
    %p44 = por %p42, %p43
    %s45 = ssub.s32 %s11, %s18
    %p46 = scmp.eq.s32.totalorder %s45, 0
    %s48 = sadd.s32 %s47, 1
    %s49 = scalar_select %p46, %s47, %s48
    %p52 = pneg %p46
    %p53 = scmp.eq.s32.totalorder %s11, 1
    %p54 = por %p52, %p53
    %p55 = scmp.ne.s32.totalorder %s47, %s50
    %p56 = scmp.eq.s32.totalorder %s11, 0
    %p57 = por %p55, %p56
    %p58 = scmp.ne.s32.totalorder %s47, %s50
    %p59 = scmp.eq.s32.totalorder %s16, 1
    %p60 = por %p58, %p59
    %p61 = scmp.ne.s32.totalorder %s50, %s51
    %p62 = scmp.eq.s32.totalorder %s16, 0
    %p63 = por %p61, %p62
    %p64 = scmp.ne.s32.totalorder %s50, %s51
    %p65 = scmp.eq.s32.totalorder %s17, 1
    %p66 = por %p64, %p65
    %p68 = scmp.ne.s32.totalorder %s51, %s67
    %p69 = scmp.eq.s32.totalorder %s17, 0
    %p70 = por %p68, %p69
    %s71 = ssub.s32 %s11, %s18
    %p72 = scmp.eq.s32.totalorder %s71, 0
    %s74 = sadd.s32 %s73, 1
    %s75 = scalar_select %p72, %s73, %s74
    %p78 = pneg %p72
    %p79 = scmp.eq.s32.totalorder %s11, 1
    %p80 = por %p78, %p79
    %p81 = scmp.ne.s32.totalorder %s73, %s76
    %p82 = scmp.eq.s32.totalorder %s11, 0
    %p83 = por %p81, %p82
    %p84 = scmp.ne.s32.totalorder %s73, %s76
    %p85 = scmp.eq.s32.totalorder %s16, 1
    %p86 = por %p84, %p85
    %p87 = scmp.ne.s32.totalorder %s76, %s77
    %p88 = scmp.eq.s32.totalorder %s16, 0
    %p89 = por %p87, %p88
    %p90 = scmp.ne.s32.totalorder %s76, %s77
    %p91 = scmp.eq.s32.totalorder %s17, 1
    %p92 = por %p90, %p91
    %p94 = scmp.ne.s32.totalorder %s77, %s93
    %p95 = scmp.eq.s32.totalorder %s17, 0
    %p96 = por %p94, %p95
    %s97 = ssub.s32 %s11, %s18
    %p98 = scmp.eq.s32.totalorder %s97, 0
    %s100 = sadd.s32 %s99, 1
    %s101 = scalar_select %p98, %s99, %s100
    %p104 = pneg %p98
    %p105 = scmp.eq.s32.totalorder %s11, 1
    %p106 = por %p104, %p105
    %p107 = scmp.ne.s32.totalorder %s99, %s102
    %p108 = scmp.eq.s32.totalorder %s11, 0
    %p109 = por %p107, %p108
    %p110 = scmp.ne.s32.totalorder %s99, %s102
    %p111 = scmp.eq.s32.totalorder %s16, 1
    %p112 = por %p110, %p111
    %p113 = scmp.ne.s32.totalorder %s102, %s103
    %p114 = scmp.eq.s32.totalorder %s16, 0
    %p115 = por %p113, %p114
    %p116 = scmp.ne.s32.totalorder %s102, %s103
    %p117 = scmp.eq.s32.totalorder %s17, 1
    %p118 = por %p116, %p117
    %p120 = scmp.ne.s32.totalorder %s103, %s119
    %p121 = scmp.eq.s32.totalorder %s17, 0
    %p122 = por %p120, %p121
    %s123 = ssub.s32 %s11, %s18
    %p124 = scmp.eq.s32.totalorder %s123, 0
    %s126 = sadd.s32 %s125, 1
    %s127 = scalar_select %p124, %s125, %s126
    %p130 = pneg %p124
    %p131 = scmp.eq.s32.totalorder %s11, 1
    %p132 = por %p130, %p131
    %p133 = scmp.ne.s32.totalorder %s125, %s128
    %p134 = scmp.eq.s32.totalorder %s11, 0
    %p135 = por %p133, %p134
    %p136 = scmp.ne.s32.totalorder %s125, %s128
    %p137 = scmp.eq.s32.totalorder %s16, 1
    %p138 = por %p136, %p137
    %p139 = scmp.ne.s32.totalorder %s128, %s129
    %p140 = scmp.eq.s32.totalorder %s16, 0
    %p141 = por %p139, %p140
    %p142 = scmp.ne.s32.totalorder %s128, %s129
    %p143 = scmp.eq.s32.totalorder %s17, 1
    %p144 = por %p142, %p143
    %p146 = scmp.ne.s32.totalorder %s129, %s145
    %p147 = scmp.eq.s32.totalorder %s17, 0
    %p148 = por %p146, %p147
    %p149 = scmp.le.s32.totalorder 1, %s11
    %p150 = scmp.lt.s32.totalorder %s11, 3
    %p151 = pnand %p149, %p150
    %p152 = pneg %p151
    // Predicated region
    $region9: #{gain_forward.4} parent=5 // pred_check
      _
    $region10: #{gain_forward.4} parent=5 // pred_check_branch
      %154 = sbr.rel (%p151) target = $region12
    $region11: #{gain_forward.4} parent=5 // pred_region
      %s155 = ssub.s32 %s11, 1
    $region12: #{gain_forward.4} parent=5 // pred_fallthru
      _
    %p156 = scmp.lt.s32.totalorder %s11, 2
    // Predicated region
    $region13: #{gain_forward.4} parent=5 // pred_check
      %p157 = pneg %p156
    $region14: #{gain_forward.4} parent=5 // pred_check_branch
      %159 = sbr.rel (%p157) target = $region16
    $region15: #{gain_forward.4} parent=5 // pred_region
      // Predicated region
      $region17: #{gain_forward.4} parent=15 // pred_check
        %p160 = pneg %p31
      $region18: #{gain_forward.4} parent=15 // pred_check_branch
        %162 = sbr.rel (%p160) target = $region20
      $region19: #{gain_forward.4} parent=15 // pred_region
        %p163 = scmp.lt.s32.totalorder %s11, 1
        %s164 = scalar_select %p163, %s11, 1
        %s165 = smul.addr %s164, 8
        %s166 = smul.addr %s165, 8
        %s167 = scalar_lea.vmem %s0, %s166
      $region20: #{gain_forward.4} parent=15 // pred_fallthru
        _
      // Predicated region
      $region21: #{gain_forward.4} parent=15 // pred_check
        %p168 = pneg %p57
      $region22: #{gain_forward.4} parent=15 // pred_check_branch
        %170 = sbr.rel (%p168) target = $region24
      $region23: #{gain_forward.4} parent=15 // pred_region
        %p171 = scmp.lt.s32.totalorder %s11, 1
        %s172 = scalar_select %p171, %s11, 1
        %s173 = smul.addr %s172, 4
        %s174 = smul.addr %s173, 8
        %s175 = scalar_lea.vmem %s1, %s174
      $region24: #{gain_forward.4} parent=15 // pred_fallthru
        _
    $region16: #{gain_forward.4} parent=5 // pred_fallthru
      _
    %p176 = scmp.le.s32.totalorder 1, %s11
    %p177 = scmp.lt.s32.totalorder %s11, 3
    %p178 = pnand %p176, %p177
    %p179 = pneg %p178
    // Predicated region
    $region25: #{gain_forward.4} parent=5 // pred_check
      _
    $region26: #{gain_forward.4} parent=5 // pred_check_branch
      %181 = sbr.rel (%p178) target = $region28
    $region27: #{gain_forward.4} parent=5 // pred_region
      %s182 = ssub.s32 %s11, 1
      %p183 = scmp.lt.s32.totalorder %s16, 1
      %s184 = scalar_select %p183, %s16, 1
      %s185 = smul.addr %s184, 8
      %s186 = smul.addr %s185, 8
      %s187 = scalar_lea.vmem %s0, %s186
      %p188 = pneg %p37
      %p189 = pneg %p34
      %p190 = scmp.lt.s32.totalorder %s16, 1
      %s191 = scalar_select %p190, %s16, 1
      %s192 = smul.addr %s191, 4
      %s193 = smul.addr %s192, 8
      %s194 = scalar_lea.vmem %s1, %s193
      %p195 = pneg %p63
      %p196 = pneg %p60
      %p197 = pneg %p89
      %p198 = pneg %p86
      %p199 = scmp.lt.s32.totalorder %s16, 1
      %s200 = scalar_select %p199, %s16, 1
      %s201 = smul.addr %s200, 2
      %s202 = scalar_lea.vmem %s2, %s201
      %p203 = pneg %p115
      %p204 = pneg %p112
      %p205 = scmp.lt.s32.totalorder %s16, 1
      %s206 = scalar_select %p205, %s16, 1
      %s207 = scalar_lea.vmem %s3, %s206
      %p208 = pneg %p141
      %p209 = pneg %p138
      %p210 = scmp.lt.s32.totalorder %s16, 1
      %s211 = scalar_select %p210, %s16, 1
      %s212 = scalar_lea.vmem %s4, %s211
      %p213 = scmp.lt.s32.totalorder %s16, 1
      %s214 = scalar_select %p213, %s16, 1
      %s215 = smul.addr %s214, 8
      %s216 = smul.addr %s215, 8
      %s217 = scalar_lea.vmem %s0, %s216
      %p218 = scmp.lt.s32.totalorder %s16, 1
      %s219 = scalar_select %p218, %s16, 1
      %s220 = smul.addr %s219, 4
      %s221 = smul.addr %s220, 8
      %s222 = scalar_lea.vmem %s1, %s221
      %p223 = scmp.lt.s32.totalorder %s16, 1
      %s224 = scalar_select %p223, %s16, 1
      %s225 = smul.addr %s224, 2
      %s226 = scalar_lea.vmem %s2, %s225
      %p227 = scmp.lt.s32.totalorder %s16, 1
      %s228 = scalar_select %p227, %s16, 1
      %s229 = scalar_lea.vmem %s3, %s228
      %p230 = scmp.lt.s32.totalorder %s16, 1
      %s231 = scalar_select %p230, %s16, 1
      %s232 = scalar_lea.vmem %s4, %s231
      %v233 = vld [vmem:[%s217] sm:$0xff]
      %v234 = vld [vmem:[%s217 + $0x8] sm:$0xff]
      %v235 = vld [vmem:[%s217 + $0x10] sm:$0xff]
      %v236 = vld [vmem:[%s217 + $0x18] sm:$0xff]
      %v237 = vld [vmem:[%s217 + $0x20] sm:$0xff]
      %v238 = vld [vmem:[%s217 + $0x28] sm:$0xff]
      %v239 = vld [vmem:[%s217 + $0x30] sm:$0xff]
      %v240 = vld [vmem:[%s217 + $0x38] sm:$0xff]
      %v241 = vld [vmem:[%s222] sm:$0xff]
      %v242 = vld [vmem:[%s222 + $0x8] sm:$0xff]
      %v243 = vld [vmem:[%s222 + $0x10] sm:$0xff]
      %v244 = vld [vmem:[%s222 + $0x18] sm:$0xff]
      %246 = vset.pattern.permute.xlu0 0
      %247 = vperm.xlu0 %246, %v241
      %v248 = vpop.permute.xlu0 %247
      %251 = vset.pattern.permute.xlu0 0
      %252 = vperm.xlu0 %251, %v242
      %v253 = vpop.permute.xlu0 %252
      %256 = vset.pattern.permute.xlu0 0
      %257 = vperm.xlu0 %256, %v243
      %v258 = vpop.permute.xlu0 %257
      %261 = vset.pattern.permute.xlu0 0
      %262 = vperm.xlu0 %261, %v244
      %v263 = vpop.permute.xlu0 %262
      %v265 = vmul.f32 %v233, %v248
      %v266 = vmul.f32 %v234, %v248
      %v267 = vmul.f32 %v235, %v253
      %v268 = vmul.f32 %v236, %v253
      %v269 = vmul.f32 %v237, %v258
      %v270 = vmul.f32 %v238, %v258
      %v271 = vmul.f32 %v239, %v263
      %v272 = vmul.f32 %v240, %v263
      %v273 = vadd.f32 %v265, %v267
      %v274 = vadd.f32 %v273, %v269
      %v275 = vadd.f32 %v274, %v271
      %v276 = vrot.slane %v275, 4
      %v277 = vadd.f32 %v275, %v276
      %v278 = vrot.slane %v277, 2
      %v279 = vadd.f32 %v277, %v278
      %v280 = vrot.slane %v279, 1
      %v281 = vadd.f32 %v279, %v280
      %v282 = vadd.f32 %v266, %v268
      %v283 = vadd.f32 %v282, %v270
      %v284 = vadd.f32 %v283, %v272
      %v285 = vrot.slane %v284, 4
      %v286 = vadd.f32 %v284, %v285
      %v287 = vrot.slane %v286, 2
      %v288 = vadd.f32 %v286, %v287
      %v289 = vrot.slane %v288, 1
      %v290 = vadd.f32 %v288, %v289
      %v291 = vmax.f32 %v281, 0.0
      %v292 = vmax.f32 %v290, 0.0
      %v295 = vcombine.low %v291, %v292
      %v297 = vunpack.c.l.s4 1966171168
      %v298 = vunpack.c.0.s8 %v297
      %v299 = vlaneseq
      %v300 = vshrl.u32 %v299, 7
      %v301 = vsub.s32 %v298, %v300
      %v302 = vrot.slane %v295, %v301
      %v304 = vunpack.c.l.s4 1966171168
      %v305 = vunpack.c.0.s8 %v304
      %v306 = vlaneseq
      %v307 = vshrl.u32 %v306, 7
      %v308 = vsub.s32 %v305, %v307
      %v309 = vrot.slane %v302, %v308
      %v311 = vlaneseq
      %vm312 = vcmp.ge.s32.totalorder %v311, 0
      %vm313 = vcmp.lt.s32.totalorder %v311, 256
      %vm314 = vmand %vm312, %vm313
      %315 = vst.msk [vmem:[%s226] sm:$0x3] %vm314, %v309
      %v316 = vmin.f32 %v291, %v292
      %317 = vmin.xlane.f32.xlu0 %v316
      %v318 = vpop.xlane.xlu0 %317
      %s319 = vtos %v318
      %v320 = vstv %s319
      %vm321 = vcmask 0
      %322 = vst.msk [vmem:[%s229] sm:$0x1] %vm321, %v320
      %v323 = vmax.f32 %v291, %v292
      %324 = vmax.xlane.f32.xlu0 %v323
      %v325 = vpop.xlane.xlu0 %324
      %s326 = vtos %v325
      %v327 = vstv %s326
      %328 = vst.msk [vmem:[%s232] sm:$0x1] %vm321, %v327
      %p329 = scmp.lt.s32.totalorder %s16, 1
      %s330 = scalar_select %p329, %s16, 1
      %s331 = smul.addr %s330, 2
      %s332 = scalar_lea.vmem %s2, %s331
      %p333 = scmp.lt.s32.totalorder %s16, 1
      %s334 = scalar_select %p333, %s16, 1
      %s335 = scalar_lea.vmem %s3, %s334
      %p336 = scmp.lt.s32.totalorder %s16, 1
      %s337 = scalar_select %p336, %s16, 1
      %s338 = scalar_lea.vmem %s4, %s337
      // Predicated region
      $region29: #{gain_forward.4} parent=27 // pred_check
        %p339 = pneg %p86
      $region30: #{gain_forward.4} parent=27 // pred_check_branch
        %341 = sbr.rel (%p339) target = $region32
      $region31: #{gain_forward.4} parent=27 // pred_region
        _
      $region32: #{gain_forward.4} parent=27 // pred_fallthru
        _
      // Predicated region
      $region33: #{gain_forward.4} parent=27 // pred_check
        %p342 = pneg %p112
      $region34: #{gain_forward.4} parent=27 // pred_check_branch
        %344 = sbr.rel (%p342) target = $region36
      $region35: #{gain_forward.4} parent=27 // pred_region
        _
      $region36: #{gain_forward.4} parent=27 // pred_fallthru
        _
      // Predicated region
      $region37: #{gain_forward.4} parent=27 // pred_check
        %p345 = pneg %p138
      $region38: #{gain_forward.4} parent=27 // pred_check_branch
        %347 = sbr.rel (%p345) target = $region40
      $region39: #{gain_forward.4} parent=27 // pred_region
        _
      $region40: #{gain_forward.4} parent=27 // pred_fallthru
        _
    $region28: #{gain_forward.4} parent=5 // pred_fallthru
      _
    %p348 = scmp.le.s32.totalorder 2, %s11
    // Predicated region
    $region41: #{gain_forward.4} parent=5 // pred_check
      %p349 = pneg %p348
    $region42: #{gain_forward.4} parent=5 // pred_check_branch
      %351 = sbr.rel (%p349) target = $region44
    $region43: #{gain_forward.4} parent=5 // pred_region
      %s352 = ssub.s32 %s11, 2
      // Predicated region
      $region45: #{gain_forward.4} parent=43 // pred_check
        %p353 = pneg %p92
      $region46: #{gain_forward.4} parent=43 // pred_check_branch
        %355 = sbr.rel (%p353) target = $region48
      $region47: #{gain_forward.4} parent=43 // pred_region
        %p356 = scmp.lt.s32.totalorder %s17, 1
        %s357 = scalar_select %p356, %s17, 1
        %s358 = smul.addr %s357, 2
        %s359 = scalar_lea.vmem %s2, %s358
      $region48: #{gain_forward.4} parent=43 // pred_fallthru
        _
      // Predicated region
      $region49: #{gain_forward.4} parent=43 // pred_check
        %p360 = pneg %p118
      $region50: #{gain_forward.4} parent=43 // pred_check_branch
        %362 = sbr.rel (%p360) target = $region52
      $region51: #{gain_forward.4} parent=43 // pred_region
        %p363 = scmp.lt.s32.totalorder %s17, 1
        %s364 = scalar_select %p363, %s17, 1
        %s365 = scalar_lea.vmem %s3, %s364
      $region52: #{gain_forward.4} parent=43 // pred_fallthru
        _
      // Predicated region
      $region53: #{gain_forward.4} parent=43 // pred_check
        %p366 = pneg %p144
      $region54: #{gain_forward.4} parent=43 // pred_check_branch
        %368 = sbr.rel (%p366) target = $region56
      $region55: #{gain_forward.4} parent=43 // pred_region
        %p369 = scmp.lt.s32.totalorder %s17, 1
        %s370 = scalar_select %p369, %s17, 1
        %s371 = scalar_lea.vmem %s4, %s370
      $region56: #{gain_forward.4} parent=43 // pred_fallthru
        _
    $region44: #{gain_forward.4} parent=5 // pred_fallthru
      _
  $region6: #{gain_forward.4} parent=0 // loop_footer
    %s15 = sadd.s32 1, %s11
  $region7: #{gain_forward.4} parent=0 // loop_footer_branch
    %10 = sbr.rel target = $region3
  $region8: #{gain_forward.4} parent=0 // loop_exit
    _

// kernel: gain_forward.3
$region0: #{gain_forward.3}
  #allocation0 [shape = 'u32[]', space=smem, size = 0x4, offset = 0x4, fixed_abs, tag = 'smem constant byte address 0x4 - core index']
  #allocation1 [shape = 'u32[144,128]{1,0:T(1,128)}', space=vmem, size = 0x12000, scoped, tag = 'internal scratch']
  #allocation2 [shape = 'f32[18,18,4]{2,1,0:T(8,128)}', space=vmem, size = 0x36000, scoped, tag = 'scratch operand']
  %s0 = inlined_call_operand.vmem [shape: bf16[2,16,16,4], index: 0, kind: input, shape index: {}]
  %s1 = inlined_call_operand.vmem [shape: bf16[36,32], index: 1, kind: input, shape index: {}]
  %s2 = inlined_call_operand.vmem [shape: f32[1,32], index: 2, kind: input, shape index: {}]
  %s3 = inlined_call_operand.vmem [shape: f32[2,32,256], index: 3, kind: output, shape index: {}]
  %s4 = sld [smem:[#allocation0]]
  $region45: #{gain_forward.3} parent=0
    _
  %s6 = ssub.s32 1, %s4
  %s7 = scalar_select 0, %s6, %s4
  loop: start=0, step=1, limit=4
  $region2: #{gain_forward.3} parent=0 // loop_pre_header
    _
  $region3: #{gain_forward.3} parent=0 // loop_header
    %s9 = sphi 0, %s13
    %p10 = scmp.ge.s32.totalorder %s9, 4
    %s19 = sphi 0, %s21
    %s22 = sphi 0, %s19
    %s23 = sphi 0, %s22
    %s39 = sphi 0, %s23
    %s43 = sphi 0, %s43
    %s45 = sphi 0, %s43
    %s46 = sphi 0, %s45
    %s60 = sphi 0, %s46
    %s64 = sphi 0, %s64
    %s66 = sphi 0, %s64
    %s67 = sphi 0, %s66
    %s81 = sphi 0, %s67
    %s87 = sphi 0, %s89
    %s90 = sphi 0, %s87
    %s91 = sphi 0, %s90
    %s107 = sphi 0, %s91
  $region4: #{gain_forward.3} parent=0 // loop_header_branch
    %12 = sbr.rel (%p10) target = $region8
  $region5: #{gain_forward.3} parent=0 // loop_body
    %s14 = ssub.s32 %s9, 1
    %s15 = ssub.s32 %s9, 2
    %s16 = sadd.s32 %s9, 1
    %s17 = ssub.s32 %s9, %s16
    %p18 = scmp.eq.s32.totalorder %s17, 0
    %s20 = sadd.s32 %s19, 1
    %s21 = scalar_select %p18, %s19, %s20
    %p24 = pneg %p18
    %p25 = scmp.eq.s32.totalorder %s9, 1
    %p26 = por %p24, %p25
    %p27 = scmp.ne.s32.totalorder %s19, %s22
    %p28 = scmp.eq.s32.totalorder %s9, 0
    %p29 = por %p27, %p28
    %p30 = scmp.ne.s32.totalorder %s19, %s22
    %p31 = scmp.eq.s32.totalorder %s14, 1
    %p32 = por %p30, %p31
    %p33 = scmp.ne.s32.totalorder %s22, %s23
    %p34 = scmp.eq.s32.totalorder %s14, 0
    %p35 = por %p33, %p34
    %p36 = scmp.ne.s32.totalorder %s22, %s23
    %p37 = scmp.eq.s32.totalorder %s15, 1
    %p38 = por %p36, %p37
    %p40 = scmp.ne.s32.totalorder %s23, %s39
    %p41 = scmp.eq.s32.totalorder %s15, 0
    %p42 = por %p40, %p41
    %s44 = sadd.s32 %s43, 1
    %p47 = scmp.eq.s32.totalorder %s9, 1
    %p48 = scmp.ne.s32.totalorder %s43, %s45
    %p49 = scmp.eq.s32.totalorder %s9, 0
    %p50 = por %p48, %p49
    %p51 = scmp.ne.s32.totalorder %s43, %s45
    %p52 = scmp.eq.s32.totalorder %s14, 1
    %p53 = por %p51, %p52
    %p54 = scmp.ne.s32.totalorder %s45, %s46
    %p55 = scmp.eq.s32.totalorder %s14, 0
    %p56 = por %p54, %p55
    %p57 = scmp.ne.s32.totalorder %s45, %s46
    %p58 = scmp.eq.s32.totalorder %s15, 1
    %p59 = por %p57, %p58
    %p61 = scmp.ne.s32.totalorder %s46, %s60
    %p62 = scmp.eq.s32.totalorder %s15, 0
    %p63 = por %p61, %p62
    %s65 = sadd.s32 %s64, 1
    %p68 = scmp.eq.s32.totalorder %s9, 1
    %p69 = scmp.ne.s32.totalorder %s64, %s66
    %p70 = scmp.eq.s32.totalorder %s9, 0
    %p71 = por %p69, %p70
    %p72 = scmp.ne.s32.totalorder %s64, %s66
    %p73 = scmp.eq.s32.totalorder %s14, 1
    %p74 = por %p72, %p73
    %p75 = scmp.ne.s32.totalorder %s66, %s67
    %p76 = scmp.eq.s32.totalorder %s14, 0
    %p77 = por %p75, %p76
    %p78 = scmp.ne.s32.totalorder %s66, %s67
    %p79 = scmp.eq.s32.totalorder %s15, 1
    %p80 = por %p78, %p79
    %p82 = scmp.ne.s32.totalorder %s67, %s81
    %p83 = scmp.eq.s32.totalorder %s15, 0
    %p84 = por %p82, %p83
    %s85 = ssub.s32 %s9, %s16
    %p86 = scmp.eq.s32.totalorder %s85, 0
    %s88 = sadd.s32 %s87, 1
    %s89 = scalar_select %p86, %s87, %s88
    %p92 = pneg %p86
    %p93 = scmp.eq.s32.totalorder %s9, 1
    %p94 = por %p92, %p93
    %p95 = scmp.ne.s32.totalorder %s87, %s90
    %p96 = scmp.eq.s32.totalorder %s9, 0
    %p97 = por %p95, %p96
    %p98 = scmp.ne.s32.totalorder %s87, %s90
    %p99 = scmp.eq.s32.totalorder %s14, 1
    %p100 = por %p98, %p99
    %p101 = scmp.ne.s32.totalorder %s90, %s91
    %p102 = scmp.eq.s32.totalorder %s14, 0
    %p103 = por %p101, %p102
    %p104 = scmp.ne.s32.totalorder %s90, %s91
    %p105 = scmp.eq.s32.totalorder %s15, 1
    %p106 = por %p104, %p105
    %p108 = scmp.ne.s32.totalorder %s91, %s107
    %p109 = scmp.eq.s32.totalorder %s15, 0
    %p110 = por %p108, %p109
    %p111 = scmp.le.s32.totalorder 1, %s9
    %p112 = scmp.lt.s32.totalorder %s9, 3
    %p113 = pnand %p111, %p112
    %p114 = pneg %p113
    // Predicated region
    $region9: #{gain_forward.3} parent=5 // pred_check
      _
    $region10: #{gain_forward.3} parent=5 // pred_check_branch
      %116 = sbr.rel (%p113) target = $region12
    $region11: #{gain_forward.3} parent=5 // pred_region
      %s117 = ssub.s32 %s9, 1
      // Predicated region
      $region13: #{gain_forward.3} parent=11 // pred_check
        %p118 = pneg %p56
      $region14: #{gain_forward.3} parent=11 // pred_check_branch
        %120 = sbr.rel (%p118) target = $region16
      $region15: #{gain_forward.3} parent=11 // pred_region
        _
      $region16: #{gain_forward.3} parent=11 // pred_fallthru
        _
      // Predicated region
      $region17: #{gain_forward.3} parent=11 // pred_check
        %p121 = pneg %p77
      $region18: #{gain_forward.3} parent=11 // pred_check_branch
        %123 = sbr.rel (%p121) target = $region20
      $region19: #{gain_forward.3} parent=11 // pred_region
        _
      $region20: #{gain_forward.3} parent=11 // pred_fallthru
        _
    $region12: #{gain_forward.3} parent=5 // pred_fallthru
      _
    %p124 = scmp.lt.s32.totalorder %s9, 2
    // Predicated region
    $region21: #{gain_forward.3} parent=5 // pred_check
      %p125 = pneg %p124
    $region22: #{gain_forward.3} parent=5 // pred_check_branch
      %127 = sbr.rel (%p125) target = $region24
    $region23: #{gain_forward.3} parent=5 // pred_region
      // Predicated region
      $region25: #{gain_forward.3} parent=23 // pred_check
        %p128 = pneg %p29
      $region26: #{gain_forward.3} parent=23 // pred_check_branch
        %130 = sbr.rel (%p128) target = $region28
      $region27: #{gain_forward.3} parent=23 // pred_region
        %p131 = scmp.lt.s32.totalorder %s9, 1
        %s132 = scalar_select %p131, %s9, 1
        %s133 = smul.addr %s132, 32
        %s134 = smul.addr %s133, 4
        %s135 = scalar_lea.vmem %s0, %s134
      $region28: #{gain_forward.3} parent=23 // pred_fallthru
        _
    $region24: #{gain_forward.3} parent=5 // pred_fallthru
      _
    %p136 = scmp.le.s32.totalorder 1, %s9
    %p137 = scmp.lt.s32.totalorder %s9, 3
    %p138 = pnand %p136, %p137
    %p139 = pneg %p138
    // Predicated region
    $region29: #{gain_forward.3} parent=5 // pred_check
      _
    $region30: #{gain_forward.3} parent=5 // pred_check_branch
      %141 = sbr.rel (%p138) target = $region32
    $region31: #{gain_forward.3} parent=5 // pred_region
      %s142 = ssub.s32 %s9, 1
      %p143 = scmp.lt.s32.totalorder %s14, 1
      %s144 = scalar_select %p143, %s14, 1
      %s145 = smul.addr %s144, 32
      %s146 = smul.addr %s145, 4
      %s147 = scalar_lea.vmem %s0, %s146
      %p148 = pneg %p35
      %p149 = pneg %p32
      %p150 = pneg %p56
      %p151 = pneg %p53
      %p152 = pneg %p77
      %p153 = pneg %p74
      %p154 = pneg %p103
      %p155 = pneg %p100
      %p156 = scmp.lt.s32.totalorder %s14, 1
      %s157 = scalar_select %p156, %s14, 1
      %s158 = smul.addr %s157, 8
      %s159 = smul.addr %s158, 8
      %s160 = scalar_lea.vmem %s3, %s159
      %p161 = scmp.lt.s32.totalorder %s14, 1
      %s162 = scalar_select %p161, %s14, 1
      %s163 = smul.addr %s162, 32
      %s164 = smul.addr %s163, 4
      %s165 = scalar_lea.vmem %s0, %s164
      %p166 = scmp.lt.s32.totalorder %s14, 1
      %s167 = scalar_select %p166, %s14, 1
      %s168 = smul.addr %s167, 8
      %s169 = smul.addr %s168, 8
      %s170 = scalar_lea.vmem %s3, %s169
      %v172 = vld [vmem:[%s165] sm:$0xf]
      %v173 = vld [vmem:[%s165 + $0x4] sm:$0xf]
      %v174 = vld [vmem:[%s165 + $0x8] sm:$0xf]
      %v175 = vld [vmem:[%s165 + $0xc] sm:$0xf]
      %v176 = vld [vmem:[%s165 + $0x10] sm:$0xf]
      %v177 = vld [vmem:[%s165 + $0x14] sm:$0xf]
      %v178 = vld [vmem:[%s165 + $0x18] sm:$0xf]
      %v179 = vld [vmem:[%s165 + $0x1c] sm:$0xf]
      %v180 = vld [vmem:[%s165 + $0x20] sm:$0xf]
      %v181 = vld [vmem:[%s165 + $0x24] sm:$0xf]
      %v182 = vld [vmem:[%s165 + $0x28] sm:$0xf]
      %v183 = vld [vmem:[%s165 + $0x2c] sm:$0xf]
      %v184 = vld [vmem:[%s165 + $0x30] sm:$0xf]
      %v185 = vld [vmem:[%s165 + $0x34] sm:$0xf]
      %v186 = vld [vmem:[%s165 + $0x38] sm:$0xf]
      %v187 = vld [vmem:[%s165 + $0x3c] sm:$0xf]
      %v188 = vld [vmem:[%s165 + $0x40] sm:$0xf]
      %v189 = vld [vmem:[%s165 + $0x44] sm:$0xf]
      %v190 = vld [vmem:[%s165 + $0x48] sm:$0xf]
      %v191 = vld [vmem:[%s165 + $0x4c] sm:$0xf]
      %v192 = vld [vmem:[%s165 + $0x50] sm:$0xf]
      %v193 = vld [vmem:[%s165 + $0x54] sm:$0xf]
      %v194 = vld [vmem:[%s165 + $0x58] sm:$0xf]
      %v195 = vld [vmem:[%s165 + $0x5c] sm:$0xf]
      %v196 = vld [vmem:[%s165 + $0x60] sm:$0xf]
      %v197 = vld [vmem:[%s165 + $0x64] sm:$0xf]
      %v198 = vld [vmem:[%s165 + $0x68] sm:$0xf]
      %v199 = vld [vmem:[%s165 + $0x6c] sm:$0xf]
      %v200 = vld [vmem:[%s165 + $0x70] sm:$0xf]
      %v201 = vld [vmem:[%s165 + $0x74] sm:$0xf]
      %v202 = vld [vmem:[%s165 + $0x78] sm:$0xf]
      %v203 = vld [vmem:[%s165 + $0x7c] sm:$0xf]
      %v204 = vunpack.c.l.bf16 %v172
      %v205 = vunpack.c.l.bf16 %v173
      %v206 = vunpack.c.l.bf16 %v174
      %v207 = vunpack.c.l.bf16 %v175
      %v208 = vunpack.c.l.bf16 %v176
      %v209 = vunpack.c.l.bf16 %v177
      %v210 = vunpack.c.l.bf16 %v178
      %v211 = vunpack.c.l.bf16 %v179
      %v212 = vunpack.c.l.bf16 %v180
      %v213 = vunpack.c.l.bf16 %v181
      %v214 = vunpack.c.l.bf16 %v182
      %v215 = vunpack.c.l.bf16 %v183
      %v216 = vunpack.c.l.bf16 %v184
      %v217 = vunpack.c.l.bf16 %v185
      %v218 = vunpack.c.l.bf16 %v186
      %v219 = vunpack.c.l.bf16 %v187
      %v220 = vunpack.c.l.bf16 %v188
      %v221 = vunpack.c.l.bf16 %v189
      %v222 = vunpack.c.l.bf16 %v190
      %v223 = vunpack.c.l.bf16 %v191
      %v224 = vunpack.c.l.bf16 %v192
      %v225 = vunpack.c.l.bf16 %v193
      %v226 = vunpack.c.l.bf16 %v194
      %v227 = vunpack.c.l.bf16 %v195
      %v228 = vunpack.c.l.bf16 %v196
      %v229 = vunpack.c.l.bf16 %v197
      %v230 = vunpack.c.l.bf16 %v198
      %v231 = vunpack.c.l.bf16 %v199
      %v232 = vunpack.c.l.bf16 %v200
      %v233 = vunpack.c.l.bf16 %v201
      %v234 = vunpack.c.l.bf16 %v202
      %v235 = vunpack.c.l.bf16 %v203
      %vm236 = vcmask 31744
      %237 = vst.msk [vmem:[#allocation2] sm:$0xff] %vm236, 0.0
      %238 = vst.msk [vmem:[#allocation2 + $0x8] sm:$0xff] %vm236, 0.0
      %vm239 = vcmask 25600
      %240 = vst.msk [vmem:[#allocation2 + $0x10] sm:$0x3] %vm239, 0.0
      %241 = vst.msk [vmem:[#allocation2 + $0x18] sm:$0xff] %vm236, 0.0
      %242 = vst.msk [vmem:[#allocation2 + $0x20] sm:$0xff] %vm236, 0.0
      %243 = vst.msk [vmem:[#allocation2 + $0x28] sm:$0x3] %vm239, 0.0
      %244 = vst.msk [vmem:[#allocation2 + $0x30] sm:$0xff] %vm236, 0.0
      %245 = vst.msk [vmem:[#allocation2 + $0x38] sm:$0xff] %vm236, 0.0
      %246 = vst.msk [vmem:[#allocation2 + $0x40] sm:$0x3] %vm239, 0.0
      %247 = vst.msk [vmem:[#allocation2 + $0x48] sm:$0xff] %vm236, 0.0
      %248 = vst.msk [vmem:[#allocation2 + $0x50] sm:$0xff] %vm236, 0.0
      %249 = vst.msk [vmem:[#allocation2 + $0x58] sm:$0x3] %vm239, 0.0
      %250 = vst.msk [vmem:[#allocation2 + $0x60] sm:$0xff] %vm236, 0.0
      %251 = vst.msk [vmem:[#allocation2 + $0x68] sm:$0xff] %vm236, 0.0
      %252 = vst.msk [vmem:[#allocation2 + $0x70] sm:$0x3] %vm239, 0.0
      %253 = vst.msk [vmem:[#allocation2 + $0x78] sm:$0xff] %vm236, 0.0
      %254 = vst.msk [vmem:[#allocation2 + $0x80] sm:$0xff] %vm236, 0.0
      %255 = vst.msk [vmem:[#allocation2 + $0x88] sm:$0x3] %vm239, 0.0
      %256 = vst.msk [vmem:[#allocation2 + $0x90] sm:$0xff] %vm236, 0.0
      %257 = vst.msk [vmem:[#allocation2 + $0x98] sm:$0xff] %vm236, 0.0
      %258 = vst.msk [vmem:[#allocation2 + $0xa0] sm:$0x3] %vm239, 0.0
      %259 = vst.msk [vmem:[#allocation2 + $0xa8] sm:$0xff] %vm236, 0.0
      %260 = vst.msk [vmem:[#allocation2 + $0xb0] sm:$0xff] %vm236, 0.0
      %261 = vst.msk [vmem:[#allocation2 + $0xb8] sm:$0x3] %vm239, 0.0
      %262 = vst.msk [vmem:[#allocation2 + $0xc0] sm:$0xff] %vm236, 0.0
      %263 = vst.msk [vmem:[#allocation2 + $0xc8] sm:$0xff] %vm236, 0.0
      %264 = vst.msk [vmem:[#allocation2 + $0xd0] sm:$0x3] %vm239, 0.0
      %265 = vst.msk [vmem:[#allocation2 + $0xd8] sm:$0xff] %vm236, 0.0
      %266 = vst.msk [vmem:[#allocation2 + $0xe0] sm:$0xff] %vm236, 0.0
      %267 = vst.msk [vmem:[#allocation2 + $0xe8] sm:$0x3] %vm239, 0.0
      %268 = vst.msk [vmem:[#allocation2 + $0xf0] sm:$0xff] %vm236, 0.0
      %269 = vst.msk [vmem:[#allocation2 + $0xf8] sm:$0xff] %vm236, 0.0
      %270 = vst.msk [vmem:[#allocation2 + $0x100] sm:$0x3] %vm239, 0.0
      %271 = vst.msk [vmem:[#allocation2 + $0x108] sm:$0xff] %vm236, 0.0
      %272 = vst.msk [vmem:[#allocation2 + $0x110] sm:$0xff] %vm236, 0.0
      %273 = vst.msk [vmem:[#allocation2 + $0x118] sm:$0x3] %vm239, 0.0
      %274 = vst.msk [vmem:[#allocation2 + $0x120] sm:$0xff] %vm236, 0.0
      %275 = vst.msk [vmem:[#allocation2 + $0x128] sm:$0xff] %vm236, 0.0
      %276 = vst.msk [vmem:[#allocation2 + $0x130] sm:$0x3] %vm239, 0.0
      %277 = vst.msk [vmem:[#allocation2 + $0x138] sm:$0xff] %vm236, 0.0
      %278 = vst.msk [vmem:[#allocation2 + $0x140] sm:$0xff] %vm236, 0.0
      %279 = vst.msk [vmem:[#allocation2 + $0x148] sm:$0x3] %vm239, 0.0
      %280 = vst.msk [vmem:[#allocation2 + $0x150] sm:$0xff] %vm236, 0.0
      %281 = vst.msk [vmem:[#allocation2 + $0x158] sm:$0xff] %vm236, 0.0
      %282 = vst.msk [vmem:[#allocation2 + $0x160] sm:$0x3] %vm239, 0.0
      %283 = vst.msk [vmem:[#allocation2 + $0x168] sm:$0xff] %vm236, 0.0
      %284 = vst.msk [vmem:[#allocation2 + $0x170] sm:$0xff] %vm236, 0.0
      %285 = vst.msk [vmem:[#allocation2 + $0x178] sm:$0x3] %vm239, 0.0
      %286 = vst.msk [vmem:[#allocation2 + $0x180] sm:$0xff] %vm236, 0.0
      %287 = vst.msk [vmem:[#allocation2 + $0x188] sm:$0xff] %vm236, 0.0
      %288 = vst.msk [vmem:[#allocation2 + $0x190] sm:$0x3] %vm239, 0.0
      %289 = vst.msk [vmem:[#allocation2 + $0x198] sm:$0xff] %vm236, 0.0
      %290 = vst.msk [vmem:[#allocation2 + $0x1a0] sm:$0xff] %vm236, 0.0
      %291 = vst.msk [vmem:[#allocation2 + $0x1a8] sm:$0x3] %vm239, 0.0
      %s292 = scalar_lea.vmem [#allocation2], 24
      %293 = vst.msk [vmem:[%s292 + $0x1] sm:$0xff] %vm236, %v204
      %294 = vst.msk [vmem:[%s292 + $0x9] sm:$0xff] %vm236, %v205
      %295 = vst.msk [vmem:[%s292 + $0x19] sm:$0xff] %vm236, %v206
      %296 = vst.msk [vmem:[%s292 + $0x21] sm:$0xff] %vm236, %v207
      %297 = vst.msk [vmem:[%s292 + $0x31] sm:$0xff] %vm236, %v208
      %298 = vst.msk [vmem:[%s292 + $0x39] sm:$0xff] %vm236, %v209
      %299 = vst.msk [vmem:[%s292 + $0x49] sm:$0xff] %vm236, %v210
      %300 = vst.msk [vmem:[%s292 + $0x51] sm:$0xff] %vm236, %v211
      %301 = vst.msk [vmem:[%s292 + $0x61] sm:$0xff] %vm236, %v212
      %302 = vst.msk [vmem:[%s292 + $0x69] sm:$0xff] %vm236, %v213
      %303 = vst.msk [vmem:[%s292 + $0x79] sm:$0xff] %vm236, %v214
      %304 = vst.msk [vmem:[%s292 + $0x81] sm:$0xff] %vm236, %v215
      %305 = vst.msk [vmem:[%s292 + $0x91] sm:$0xff] %vm236, %v216
      %306 = vst.msk [vmem:[%s292 + $0x99] sm:$0xff] %vm236, %v217
      %307 = vst.msk [vmem:[%s292 + $0xa9] sm:$0xff] %vm236, %v218
      %308 = vst.msk [vmem:[%s292 + $0xb1] sm:$0xff] %vm236, %v219
      %309 = vst.msk [vmem:[%s292 + $0xc1] sm:$0xff] %vm236, %v220
      %310 = vst.msk [vmem:[%s292 + $0xc9] sm:$0xff] %vm236, %v221
      %311 = vst.msk [vmem:[%s292 + $0xd9] sm:$0xff] %vm236, %v222
      %312 = vst.msk [vmem:[%s292 + $0xe1] sm:$0xff] %vm236, %v223
      %313 = vst.msk [vmem:[%s292 + $0xf1] sm:$0xff] %vm236, %v224
      %314 = vst.msk [vmem:[%s292 + $0xf9] sm:$0xff] %vm236, %v225
      %315 = vst.msk [vmem:[%s292 + $0x109] sm:$0xff] %vm236, %v226
      %316 = vst.msk [vmem:[%s292 + $0x111] sm:$0xff] %vm236, %v227
      %317 = vst.msk [vmem:[%s292 + $0x121] sm:$0xff] %vm236, %v228
      %318 = vst.msk [vmem:[%s292 + $0x129] sm:$0xff] %vm236, %v229
      %319 = vst.msk [vmem:[%s292 + $0x139] sm:$0xff] %vm236, %v230
      %320 = vst.msk [vmem:[%s292 + $0x141] sm:$0xff] %vm236, %v231
      %321 = vst.msk [vmem:[%s292 + $0x151] sm:$0xff] %vm236, %v232
      %322 = vst.msk [vmem:[%s292 + $0x159] sm:$0xff] %vm236, %v233
      %323 = vst.msk [vmem:[%s292 + $0x169] sm:$0xff] %vm236, %v234
      %324 = vst.msk [vmem:[%s292 + $0x171] sm:$0xff] %vm236, %v235
      %v325 = vld [vmem:[#allocation2] sm:$0xff]
      %v326 = vld [vmem:[#allocation2 + $0x8] sm:$0xff]
      %v327 = vld [vmem:[#allocation2 + $0x10] sm:$0x3]
      %v328 = vld [vmem:[#allocation2 + $0x18] sm:$0xff]
      %v329 = vld [vmem:[#allocation2 + $0x20] sm:$0xff]
      %v330 = vld [vmem:[#allocation2 + $0x28] sm:$0x3]
      %v331 = vld [vmem:[#allocation2 + $0x30] sm:$0xff]
      %v332 = vld [vmem:[#allocation2 + $0x38] sm:$0xff]
      %v333 = vld [vmem:[#allocation2 + $0x40] sm:$0x3]
      %v334 = vld [vmem:[#allocation2 + $0x48] sm:$0xff]
      %v335 = vld [vmem:[#allocation2 + $0x50] sm:$0xff]
      %v336 = vld [vmem:[#allocation2 + $0x58] sm:$0x3]
      %v337 = vld [vmem:[#allocation2 + $0x60] sm:$0xff]
      %v338 = vld [vmem:[#allocation2 + $0x68] sm:$0xff]
      %v339 = vld [vmem:[#allocation2 + $0x70] sm:$0x3]
      %v340 = vld [vmem:[#allocation2 + $0x78] sm:$0xff]
      %v341 = vld [vmem:[#allocation2 + $0x80] sm:$0xff]
      %v342 = vld [vmem:[#allocation2 + $0x88] sm:$0x3]
      %v343 = vld [vmem:[#allocation2 + $0x90] sm:$0xff]
      %v344 = vld [vmem:[#allocation2 + $0x98] sm:$0xff]
      %v345 = vld [vmem:[#allocation2 + $0xa0] sm:$0x3]
      %v346 = vld [vmem:[#allocation2 + $0xa8] sm:$0xff]
      %v347 = vld [vmem:[#allocation2 + $0xb0] sm:$0xff]
      %v348 = vld [vmem:[#allocation2 + $0xb8] sm:$0x3]
      %v349 = vld [vmem:[#allocation2 + $0xc0] sm:$0xff]
      %v350 = vld [vmem:[#allocation2 + $0xc8] sm:$0xff]
      %v351 = vld [vmem:[#allocation2 + $0xd0] sm:$0x3]
      %v352 = vld [vmem:[#allocation2 + $0xd8] sm:$0xff]
      %v353 = vld [vmem:[#allocation2 + $0xe0] sm:$0xff]
      %v354 = vld [vmem:[#allocation2 + $0xe8] sm:$0x3]
      %v355 = vld [vmem:[#allocation2 + $0xf0] sm:$0xff]
      %v356 = vld [vmem:[#allocation2 + $0xf8] sm:$0xff]
      %v357 = vld [vmem:[#allocation2 + $0x100] sm:$0x3]
      %v358 = vld [vmem:[#allocation2 + $0x108] sm:$0xff]
      %v359 = vld [vmem:[#allocation2 + $0x110] sm:$0xff]
      %v360 = vld [vmem:[#allocation2 + $0x118] sm:$0x3]
      %v361 = vld [vmem:[#allocation2 + $0x120] sm:$0xff]
      %v362 = vld [vmem:[#allocation2 + $0x128] sm:$0xff]
      %v363 = vld [vmem:[#allocation2 + $0x130] sm:$0x3]
      %v364 = vld [vmem:[#allocation2 + $0x138] sm:$0xff]
      %v365 = vld [vmem:[#allocation2 + $0x140] sm:$0xff]
      %v366 = vld [vmem:[#allocation2 + $0x148] sm:$0x3]
      %v367 = vld [vmem:[#allocation2 + $0x150] sm:$0xff]
      %v368 = vld [vmem:[#allocation2 + $0x158] sm:$0xff]
      %v369 = vld [vmem:[#allocation2 + $0x160] sm:$0x3]
      %v370 = vld [vmem:[#allocation2 + $0x168] sm:$0xff]
      %v371 = vld [vmem:[#allocation2 + $0x170] sm:$0xff]
      %v372 = vld [vmem:[#allocation2 + $0x178] sm:$0x3]
      %v373 = vld [vmem:[#allocation2 + $0x180] sm:$0xff]
      %v374 = vld [vmem:[#allocation2 + $0x188] sm:$0xff]
      %v375 = vld [vmem:[#allocation2 + $0x190] sm:$0x3]
      %v376 = vld [vmem:[#allocation2 + $0x198] sm:$0xff]
      %v377 = vld [vmem:[#allocation2 + $0x1a0] sm:$0xff]
      %v378 = vld [vmem:[#allocation2 + $0x1a8] sm:$0x3]
      %vm427 = vcmask 1046528
      %v428 = vrot.slane %v325, 1
      %v429 = vrot.slane %v326, 1
      %v430 = vsel %vm427, %v428, %v429
      %v431 = vrot.slane %v327, 1
      %v432 = vsel %vm427, %v429, %v431
      %v433 = vrot.slane %v328, 1
      %v434 = vrot.slane %v329, 1
      %v435 = vsel %vm427, %v433, %v434
      %v436 = vrot.slane %v330, 1
      %v437 = vsel %vm427, %v434, %v436
      %v438 = vrot.slane %v331, 1
      %v439 = vrot.slane %v332, 1
      %v440 = vsel %vm427, %v438, %v439
      %v441 = vrot.slane %v333, 1
      %v442 = vsel %vm427, %v439, %v441
      %v443 = vrot.slane %v334, 1
      %v444 = vrot.slane %v335, 1
      %v445 = vsel %vm427, %v443, %v444
      %v446 = vrot.slane %v336, 1
      %v447 = vsel %vm427, %v444, %v446
      %v448 = vrot.slane %v337, 1
      %v449 = vrot.slane %v338, 1
      %v450 = vsel %vm427, %v448, %v449
      %v451 = vrot.slane %v339, 1
      %v452 = vsel %vm427, %v449, %v451
      %v453 = vrot.slane %v340, 1
      %v454 = vrot.slane %v341, 1
      %v455 = vsel %vm427, %v453, %v454
      %v456 = vrot.slane %v342, 1
      %v457 = vsel %vm427, %v454, %v456
      %v458 = vrot.slane %v343, 1
      %v459 = vrot.slane %v344, 1
      %v460 = vsel %vm427, %v458, %v459
      %v461 = vrot.slane %v345, 1
      %v462 = vsel %vm427, %v459, %v461
      %v463 = vrot.slane %v346, 1
      %v464 = vrot.slane %v347, 1
      %v465 = vsel %vm427, %v463, %v464
      %v466 = vrot.slane %v348, 1
      %v467 = vsel %vm427, %v464, %v466
      %v468 = vrot.slane %v349, 1
      %v469 = vrot.slane %v350, 1
      %v470 = vsel %vm427, %v468, %v469
      %v471 = vrot.slane %v351, 1
      %v472 = vsel %vm427, %v469, %v471
      %v473 = vrot.slane %v352, 1
      %v474 = vrot.slane %v353, 1
      %v475 = vsel %vm427, %v473, %v474
      %v476 = vrot.slane %v354, 1
      %v477 = vsel %vm427, %v474, %v476
      %v478 = vrot.slane %v355, 1
      %v479 = vrot.slane %v356, 1
      %v480 = vsel %vm427, %v478, %v479
      %v481 = vrot.slane %v357, 1
      %v482 = vsel %vm427, %v479, %v481
      %v483 = vrot.slane %v358, 1
      %v484 = vrot.slane %v359, 1
      %v485 = vsel %vm427, %v483, %v484
      %v486 = vrot.slane %v360, 1
      %v487 = vsel %vm427, %v484, %v486
      %v488 = vrot.slane %v361, 1
      %v489 = vrot.slane %v362, 1
      %v490 = vsel %vm427, %v488, %v489
      %v491 = vrot.slane %v363, 1
      %v492 = vsel %vm427, %v489, %v491
      %v493 = vrot.slane %v364, 1
      %v494 = vrot.slane %v365, 1
      %v495 = vsel %vm427, %v493, %v494
      %v496 = vrot.slane %v366, 1
      %v497 = vsel %vm427, %v494, %v496
      %v498 = vrot.slane %v367, 1
      %v499 = vrot.slane %v368, 1
      %v500 = vsel %vm427, %v498, %v499
      %v501 = vrot.slane %v369, 1
      %v502 = vsel %vm427, %v499, %v501
      %v503 = vrot.slane %v370, 1
      %v504 = vrot.slane %v371, 1
      %v505 = vsel %vm427, %v503, %v504
      %v506 = vrot.slane %v372, 1
      %v507 = vsel %vm427, %v504, %v506
      %508 = vrot.lane.b32.xlu0 %v430, 4
      %v509 = vpop.permute.xlu0 %508
      %510 = vrot.lane.b32.xlu0 %v432, 4
      %v511 = vpop.permute.xlu0 %510
      %512 = vrot.lane.b32.xlu0 %v435, 4
      %v513 = vpop.permute.xlu0 %512
      %514 = vrot.lane.b32.xlu0 %v437, 4
      %v515 = vpop.permute.xlu0 %514
      %516 = vrot.lane.b32.xlu0 %v440, 4
      %v517 = vpop.permute.xlu0 %516
      %518 = vrot.lane.b32.xlu0 %v442, 4
      %v519 = vpop.permute.xlu0 %518
      %520 = vrot.lane.b32.xlu0 %v445, 4
      %v521 = vpop.permute.xlu0 %520
      %522 = vrot.lane.b32.xlu0 %v447, 4
      %v523 = vpop.permute.xlu0 %522
      %524 = vrot.lane.b32.xlu0 %v450, 4
      %v525 = vpop.permute.xlu0 %524
      %526 = vrot.lane.b32.xlu0 %v452, 4
      %v527 = vpop.permute.xlu0 %526
      %528 = vrot.lane.b32.xlu0 %v455, 4
      %v529 = vpop.permute.xlu0 %528
      %530 = vrot.lane.b32.xlu0 %v457, 4
      %v531 = vpop.permute.xlu0 %530
      %532 = vrot.lane.b32.xlu0 %v460, 4
      %v533 = vpop.permute.xlu0 %532
      %534 = vrot.lane.b32.xlu0 %v462, 4
      %v535 = vpop.permute.xlu0 %534
      %536 = vrot.lane.b32.xlu0 %v465, 4
      %v537 = vpop.permute.xlu0 %536
      %538 = vrot.lane.b32.xlu0 %v467, 4
      %v539 = vpop.permute.xlu0 %538
      %540 = vrot.lane.b32.xlu0 %v470, 4
      %v541 = vpop.permute.xlu0 %540
      %542 = vrot.lane.b32.xlu0 %v472, 4
      %v543 = vpop.permute.xlu0 %542
      %544 = vrot.lane.b32.xlu0 %v475, 4
      %v545 = vpop.permute.xlu0 %544
      %546 = vrot.lane.b32.xlu0 %v477, 4
      %v547 = vpop.permute.xlu0 %546
      %548 = vrot.lane.b32.xlu0 %v480, 4
      %v549 = vpop.permute.xlu0 %548
      %550 = vrot.lane.b32.xlu0 %v482, 4
      %v551 = vpop.permute.xlu0 %550
      %552 = vrot.lane.b32.xlu0 %v485, 4
      %v553 = vpop.permute.xlu0 %552
      %554 = vrot.lane.b32.xlu0 %v487, 4
      %v555 = vpop.permute.xlu0 %554
      %556 = vrot.lane.b32.xlu0 %v490, 4
      %v557 = vpop.permute.xlu0 %556
      %558 = vrot.lane.b32.xlu0 %v492, 4
      %v559 = vpop.permute.xlu0 %558
      %560 = vrot.lane.b32.xlu0 %v495, 4
      %v561 = vpop.permute.xlu0 %560
      %562 = vrot.lane.b32.xlu0 %v497, 4
      %v563 = vpop.permute.xlu0 %562
      %564 = vrot.lane.b32.xlu0 %v500, 4
      %v565 = vpop.permute.xlu0 %564
      %566 = vrot.lane.b32.xlu0 %v502, 4
      %v567 = vpop.permute.xlu0 %566
      %568 = vrot.lane.b32.xlu0 %v505, 4
      %v569 = vpop.permute.xlu0 %568
      %570 = vrot.lane.b32.xlu0 %v507, 4
      %v571 = vpop.permute.xlu0 %570
      %vm604 = vcmask 1045504
      %v605 = vrot.slane %v325, 2
      %v606 = vrot.slane %v326, 2
      %v607 = vsel %vm604, %v605, %v606
      %v608 = vrot.slane %v327, 2
      %v609 = vsel %vm604, %v606, %v608
      %v610 = vrot.slane %v328, 2
      %v611 = vrot.slane %v329, 2
      %v612 = vsel %vm604, %v610, %v611
      %v613 = vrot.slane %v330, 2
      %v614 = vsel %vm604, %v611, %v613
      %v615 = vrot.slane %v331, 2
      %v616 = vrot.slane %v332, 2
      %v617 = vsel %vm604, %v615, %v616
      %v618 = vrot.slane %v333, 2
      %v619 = vsel %vm604, %v616, %v618
      %v620 = vrot.slane %v334, 2
      %v621 = vrot.slane %v335, 2
      %v622 = vsel %vm604, %v620, %v621
      %v623 = vrot.slane %v336, 2
      %v624 = vsel %vm604, %v621, %v623
      %v625 = vrot.slane %v337, 2
      %v626 = vrot.slane %v338, 2
      %v627 = vsel %vm604, %v625, %v626
      %v628 = vrot.slane %v339, 2
      %v629 = vsel %vm604, %v626, %v628
      %v630 = vrot.slane %v340, 2
      %v631 = vrot.slane %v341, 2
      %v632 = vsel %vm604, %v630, %v631
      %v633 = vrot.slane %v342, 2
      %v634 = vsel %vm604, %v631, %v633
      %v635 = vrot.slane %v343, 2
      %v636 = vrot.slane %v344, 2
      %v637 = vsel %vm604, %v635, %v636
      %v638 = vrot.slane %v345, 2
      %v639 = vsel %vm604, %v636, %v638
      %v640 = vrot.slane %v346, 2
      %v641 = vrot.slane %v347, 2
      %v642 = vsel %vm604, %v640, %v641
      %v643 = vrot.slane %v348, 2
      %v644 = vsel %vm604, %v641, %v643
      %v645 = vrot.slane %v349, 2
      %v646 = vrot.slane %v350, 2
      %v647 = vsel %vm604, %v645, %v646
      %v648 = vrot.slane %v351, 2
      %v649 = vsel %vm604, %v646, %v648
      %v650 = vrot.slane %v352, 2
      %v651 = vrot.slane %v353, 2
      %v652 = vsel %vm604, %v650, %v651
      %v653 = vrot.slane %v354, 2
      %v654 = vsel %vm604, %v651, %v653
      %v655 = vrot.slane %v355, 2
      %v656 = vrot.slane %v356, 2
      %v657 = vsel %vm604, %v655, %v656
      %v658 = vrot.slane %v357, 2
      %v659 = vsel %vm604, %v656, %v658
      %v660 = vrot.slane %v358, 2
      %v661 = vrot.slane %v359, 2
      %v662 = vsel %vm604, %v660, %v661
      %v663 = vrot.slane %v360, 2
      %v664 = vsel %vm604, %v661, %v663
      %v665 = vrot.slane %v361, 2
      %v666 = vrot.slane %v362, 2
      %v667 = vsel %vm604, %v665, %v666
      %v668 = vrot.slane %v363, 2
      %v669 = vsel %vm604, %v666, %v668
      %v670 = vrot.slane %v364, 2
      %v671 = vrot.slane %v365, 2
      %v672 = vsel %vm604, %v670, %v671
      %v673 = vrot.slane %v366, 2
      %v674 = vsel %vm604, %v671, %v673
      %v675 = vrot.slane %v367, 2
      %v676 = vrot.slane %v368, 2
      %v677 = vsel %vm604, %v675, %v676
      %v678 = vrot.slane %v369, 2
      %v679 = vsel %vm604, %v676, %v678
      %v680 = vrot.slane %v370, 2
      %v681 = vrot.slane %v371, 2
      %v682 = vsel %vm604, %v680, %v681
      %v683 = vrot.slane %v372, 2
      %v684 = vsel %vm604, %v681, %v683
      %685 = vrot.lane.b32.xlu0 %v607, 8
      %v686 = vpop.permute.xlu0 %685
      %687 = vrot.lane.b32.xlu0 %v609, 8
      %v688 = vpop.permute.xlu0 %687
      %689 = vrot.lane.b32.xlu0 %v612, 8
      %v690 = vpop.permute.xlu0 %689
      %691 = vrot.lane.b32.xlu0 %v614, 8
      %v692 = vpop.permute.xlu0 %691
      %693 = vrot.lane.b32.xlu0 %v617, 8
      %v694 = vpop.permute.xlu0 %693
      %695 = vrot.lane.b32.xlu0 %v619, 8
      %v696 = vpop.permute.xlu0 %695
      %697 = vrot.lane.b32.xlu0 %v622, 8
      %v698 = vpop.permute.xlu0 %697
      %699 = vrot.lane.b32.xlu0 %v624, 8
      %v700 = vpop.permute.xlu0 %699
      %701 = vrot.lane.b32.xlu0 %v627, 8
      %v702 = vpop.permute.xlu0 %701
      %703 = vrot.lane.b32.xlu0 %v629, 8
      %v704 = vpop.permute.xlu0 %703
      %705 = vrot.lane.b32.xlu0 %v632, 8
      %v706 = vpop.permute.xlu0 %705
      %707 = vrot.lane.b32.xlu0 %v634, 8
      %v708 = vpop.permute.xlu0 %707
      %709 = vrot.lane.b32.xlu0 %v637, 8
      %v710 = vpop.permute.xlu0 %709
      %711 = vrot.lane.b32.xlu0 %v639, 8
      %v712 = vpop.permute.xlu0 %711
      %713 = vrot.lane.b32.xlu0 %v642, 8
      %v714 = vpop.permute.xlu0 %713
      %715 = vrot.lane.b32.xlu0 %v644, 8
      %v716 = vpop.permute.xlu0 %715
      %717 = vrot.lane.b32.xlu0 %v647, 8
      %v718 = vpop.permute.xlu0 %717
      %719 = vrot.lane.b32.xlu0 %v649, 8
      %v720 = vpop.permute.xlu0 %719
      %721 = vrot.lane.b32.xlu0 %v652, 8
      %v722 = vpop.permute.xlu0 %721
      %723 = vrot.lane.b32.xlu0 %v654, 8
      %v724 = vpop.permute.xlu0 %723
      %725 = vrot.lane.b32.xlu0 %v657, 8
      %v726 = vpop.permute.xlu0 %725
      %727 = vrot.lane.b32.xlu0 %v659, 8
      %v728 = vpop.permute.xlu0 %727
      %729 = vrot.lane.b32.xlu0 %v662, 8
      %v730 = vpop.permute.xlu0 %729
      %731 = vrot.lane.b32.xlu0 %v664, 8
      %v732 = vpop.permute.xlu0 %731
      %733 = vrot.lane.b32.xlu0 %v667, 8
      %v734 = vpop.permute.xlu0 %733
      %735 = vrot.lane.b32.xlu0 %v669, 8
      %v736 = vpop.permute.xlu0 %735
      %737 = vrot.lane.b32.xlu0 %v672, 8
      %v738 = vpop.permute.xlu0 %737
      %739 = vrot.lane.b32.xlu0 %v674, 8
      %v740 = vpop.permute.xlu0 %739
      %741 = vrot.lane.b32.xlu0 %v677, 8
      %v742 = vpop.permute.xlu0 %741
      %743 = vrot.lane.b32.xlu0 %v679, 8
      %v744 = vpop.permute.xlu0 %743
      %745 = vrot.lane.b32.xlu0 %v682, 8
      %v746 = vpop.permute.xlu0 %745
      %747 = vrot.lane.b32.xlu0 %v684, 8
      %v748 = vpop.permute.xlu0 %747
      %783 = vrot.lane.b32.xlu0 %v328, 12
      %v784 = vpop.permute.xlu0 %783
      %785 = vrot.lane.b32.xlu0 %v329, 12
      %v786 = vpop.permute.xlu0 %785
      %787 = vrot.lane.b32.xlu0 %v331, 12
      %v788 = vpop.permute.xlu0 %787
      %789 = vrot.lane.b32.xlu0 %v332, 12
      %v790 = vpop.permute.xlu0 %789
      %791 = vrot.lane.b32.xlu0 %v334, 12
      %v792 = vpop.permute.xlu0 %791
      %793 = vrot.lane.b32.xlu0 %v335, 12
      %v794 = vpop.permute.xlu0 %793
      %795 = vrot.lane.b32.xlu0 %v337, 12
      %v796 = vpop.permute.xlu0 %795
      %797 = vrot.lane.b32.xlu0 %v338, 12
      %v798 = vpop.permute.xlu0 %797
      %799 = vrot.lane.b32.xlu0 %v340, 12
      %v800 = vpop.permute.xlu0 %799
      %801 = vrot.lane.b32.xlu0 %v341, 12
      %v802 = vpop.permute.xlu0 %801
      %803 = vrot.lane.b32.xlu0 %v343, 12
      %v804 = vpop.permute.xlu0 %803
      %805 = vrot.lane.b32.xlu0 %v344, 12
      %v806 = vpop.permute.xlu0 %805
      %807 = vrot.lane.b32.xlu0 %v346, 12
      %v808 = vpop.permute.xlu0 %807
      %809 = vrot.lane.b32.xlu0 %v347, 12
      %v810 = vpop.permute.xlu0 %809
      %811 = vrot.lane.b32.xlu0 %v349, 12
      %v812 = vpop.permute.xlu0 %811
      %813 = vrot.lane.b32.xlu0 %v350, 12
      %v814 = vpop.permute.xlu0 %813
      %815 = vrot.lane.b32.xlu0 %v352, 12
      %v816 = vpop.permute.xlu0 %815
      %817 = vrot.lane.b32.xlu0 %v353, 12
      %v818 = vpop.permute.xlu0 %817
      %819 = vrot.lane.b32.xlu0 %v355, 12
      %v820 = vpop.permute.xlu0 %819
      %821 = vrot.lane.b32.xlu0 %v356, 12
      %v822 = vpop.permute.xlu0 %821
      %823 = vrot.lane.b32.xlu0 %v358, 12
      %v824 = vpop.permute.xlu0 %823
      %825 = vrot.lane.b32.xlu0 %v359, 12
      %v826 = vpop.permute.xlu0 %825
      %827 = vrot.lane.b32.xlu0 %v361, 12
      %v828 = vpop.permute.xlu0 %827
      %829 = vrot.lane.b32.xlu0 %v362, 12
      %v830 = vpop.permute.xlu0 %829
      %831 = vrot.lane.b32.xlu0 %v364, 12
      %v832 = vpop.permute.xlu0 %831
      %833 = vrot.lane.b32.xlu0 %v365, 12
      %v834 = vpop.permute.xlu0 %833
      %835 = vrot.lane.b32.xlu0 %v367, 12
      %v836 = vpop.permute.xlu0 %835
      %837 = vrot.lane.b32.xlu0 %v368, 12
      %v838 = vpop.permute.xlu0 %837
      %839 = vrot.lane.b32.xlu0 %v370, 12
      %v840 = vpop.permute.xlu0 %839
      %841 = vrot.lane.b32.xlu0 %v371, 12
      %v842 = vpop.permute.xlu0 %841
      %843 = vrot.lane.b32.xlu0 %v373, 12
      %v844 = vpop.permute.xlu0 %843
      %845 = vrot.lane.b32.xlu0 %v374, 12
      %v846 = vpop.permute.xlu0 %845
      %v880 = vrot.slane %v373, 1
      %v881 = vrot.slane %v374, 1
      %v882 = vsel %vm427, %v880, %v881
      %v883 = vrot.slane %v375, 1
      %v884 = vsel %vm427, %v881, %v883
      %885 = vrot.lane.b32.xlu0 %v435, 16
      %v886 = vpop.permute.xlu0 %885
      %887 = vrot.lane.b32.xlu0 %v437, 16
      %v888 = vpop.permute.xlu0 %887
      %889 = vrot.lane.b32.xlu0 %v440, 16
      %v890 = vpop.permute.xlu0 %889
      %891 = vrot.lane.b32.xlu0 %v442, 16
      %v892 = vpop.permute.xlu0 %891
      %893 = vrot.lane.b32.xlu0 %v445, 16
      %v894 = vpop.permute.xlu0 %893
      %895 = vrot.lane.b32.xlu0 %v447, 16
      %v896 = vpop.permute.xlu0 %895
      %897 = vrot.lane.b32.xlu0 %v450, 16
      %v898 = vpop.permute.xlu0 %897
      %899 = vrot.lane.b32.xlu0 %v452, 16
      %v900 = vpop.permute.xlu0 %899
      %901 = vrot.lane.b32.xlu0 %v455, 16
      %v902 = vpop.permute.xlu0 %901
      %903 = vrot.lane.b32.xlu0 %v457, 16
      %v904 = vpop.permute.xlu0 %903
      %905 = vrot.lane.b32.xlu0 %v460, 16
      %v906 = vpop.permute.xlu0 %905
      %907 = vrot.lane.b32.xlu0 %v462, 16
      %v908 = vpop.permute.xlu0 %907
      %909 = vrot.lane.b32.xlu0 %v465, 16
      %v910 = vpop.permute.xlu0 %909
      %911 = vrot.lane.b32.xlu0 %v467, 16
      %v912 = vpop.permute.xlu0 %911
      %913 = vrot.lane.b32.xlu0 %v470, 16
      %v914 = vpop.permute.xlu0 %913
      %915 = vrot.lane.b32.xlu0 %v472, 16
      %v916 = vpop.permute.xlu0 %915
      %917 = vrot.lane.b32.xlu0 %v475, 16
      %v918 = vpop.permute.xlu0 %917
      %919 = vrot.lane.b32.xlu0 %v477, 16
      %v920 = vpop.permute.xlu0 %919
      %921 = vrot.lane.b32.xlu0 %v480, 16
      %v922 = vpop.permute.xlu0 %921
      %923 = vrot.lane.b32.xlu0 %v482, 16
      %v924 = vpop.permute.xlu0 %923
      %925 = vrot.lane.b32.xlu0 %v485, 16
      %v926 = vpop.permute.xlu0 %925
      %927 = vrot.lane.b32.xlu0 %v487, 16
      %v928 = vpop.permute.xlu0 %927
      %929 = vrot.lane.b32.xlu0 %v490, 16
      %v930 = vpop.permute.xlu0 %929
      %931 = vrot.lane.b32.xlu0 %v492, 16
      %v932 = vpop.permute.xlu0 %931
      %933 = vrot.lane.b32.xlu0 %v495, 16
      %v934 = vpop.permute.xlu0 %933
      %935 = vrot.lane.b32.xlu0 %v497, 16
      %v936 = vpop.permute.xlu0 %935
      %937 = vrot.lane.b32.xlu0 %v500, 16
      %v938 = vpop.permute.xlu0 %937
      %939 = vrot.lane.b32.xlu0 %v502, 16
      %v940 = vpop.permute.xlu0 %939
      %941 = vrot.lane.b32.xlu0 %v505, 16
      %v942 = vpop.permute.xlu0 %941
      %943 = vrot.lane.b32.xlu0 %v507, 16
      %v944 = vpop.permute.xlu0 %943
      %945 = vrot.lane.b32.xlu0 %v882, 16
      %v946 = vpop.permute.xlu0 %945
      %947 = vrot.lane.b32.xlu0 %v884, 16
      %v948 = vpop.permute.xlu0 %947
      %v981 = vrot.slane %v373, 2
      %v982 = vrot.slane %v374, 2
      %v983 = vsel %vm604, %v981, %v982
      %v984 = vrot.slane %v375, 2
      %v985 = vsel %vm604, %v982, %v984
      %986 = vrot.lane.b32.xlu0 %v612, 20
      %v987 = vpop.permute.xlu0 %986
      %988 = vrot.lane.b32.xlu0 %v614, 20
      %v989 = vpop.permute.xlu0 %988
      %990 = vrot.lane.b32.xlu0 %v617, 20
      %v991 = vpop.permute.xlu0 %990
      %992 = vrot.lane.b32.xlu0 %v619, 20
      %v993 = vpop.permute.xlu0 %992
      %994 = vrot.lane.b32.xlu0 %v622, 20
      %v995 = vpop.permute.xlu0 %994
      %996 = vrot.lane.b32.xlu0 %v624, 20
      %v997 = vpop.permute.xlu0 %996
      %998 = vrot.lane.b32.xlu0 %v627, 20
      %v999 = vpop.permute.xlu0 %998
      %1000 = vrot.lane.b32.xlu0 %v629, 20
      %v1001 = vpop.permute.xlu0 %1000
      %1002 = vrot.lane.b32.xlu0 %v632, 20
      %v1003 = vpop.permute.xlu0 %1002
      %1004 = vrot.lane.b32.xlu0 %v634, 20
      %v1005 = vpop.permute.xlu0 %1004
      %1006 = vrot.lane.b32.xlu0 %v637, 20
      %v1007 = vpop.permute.xlu0 %1006
      %1008 = vrot.lane.b32.xlu0 %v639, 20
      %v1009 = vpop.permute.xlu0 %1008
      %1010 = vrot.lane.b32.xlu0 %v642, 20
      %v1011 = vpop.permute.xlu0 %1010
      %1012 = vrot.lane.b32.xlu0 %v644, 20
      %v1013 = vpop.permute.xlu0 %1012
      %1014 = vrot.lane.b32.xlu0 %v647, 20
      %v1015 = vpop.permute.xlu0 %1014
      %1016 = vrot.lane.b32.xlu0 %v649, 20
      %v1017 = vpop.permute.xlu0 %1016
      %1018 = vrot.lane.b32.xlu0 %v652, 20
      %v1019 = vpop.permute.xlu0 %1018
      %1020 = vrot.lane.b32.xlu0 %v654, 20
      %v1021 = vpop.permute.xlu0 %1020
      %1022 = vrot.lane.b32.xlu0 %v657, 20
      %v1023 = vpop.permute.xlu0 %1022
      %1024 = vrot.lane.b32.xlu0 %v659, 20
      %v1025 = vpop.permute.xlu0 %1024
      %1026 = vrot.lane.b32.xlu0 %v662, 20
      %v1027 = vpop.permute.xlu0 %1026
      %1028 = vrot.lane.b32.xlu0 %v664, 20
      %v1029 = vpop.permute.xlu0 %1028
      %1030 = vrot.lane.b32.xlu0 %v667, 20
      %v1031 = vpop.permute.xlu0 %1030
      %1032 = vrot.lane.b32.xlu0 %v669, 20
      %v1033 = vpop.permute.xlu0 %1032
      %1034 = vrot.lane.b32.xlu0 %v672, 20
      %v1035 = vpop.permute.xlu0 %1034
      %1036 = vrot.lane.b32.xlu0 %v674, 20
      %v1037 = vpop.permute.xlu0 %1036
      %1038 = vrot.lane.b32.xlu0 %v677, 20
      %v1039 = vpop.permute.xlu0 %1038
      %1040 = vrot.lane.b32.xlu0 %v679, 20
      %v1041 = vpop.permute.xlu0 %1040
      %1042 = vrot.lane.b32.xlu0 %v682, 20
      %v1043 = vpop.permute.xlu0 %1042
      %1044 = vrot.lane.b32.xlu0 %v684, 20
      %v1045 = vpop.permute.xlu0 %1044
      %1046 = vrot.lane.b32.xlu0 %v983, 20
      %v1047 = vpop.permute.xlu0 %1046
      %1048 = vrot.lane.b32.xlu0 %v985, 20
      %v1049 = vpop.permute.xlu0 %1048
      %1084 = vrot.lane.b32.xlu0 %v331, 24
      %v1085 = vpop.permute.xlu0 %1084
      %1086 = vrot.lane.b32.xlu0 %v332, 24
      %v1087 = vpop.permute.xlu0 %1086
      %1088 = vrot.lane.b32.xlu0 %v334, 24
      %v1089 = vpop.permute.xlu0 %1088
      %1090 = vrot.lane.b32.xlu0 %v335, 24
      %v1091 = vpop.permute.xlu0 %1090
      %1092 = vrot.lane.b32.xlu0 %v337, 24
      %v1093 = vpop.permute.xlu0 %1092
      %1094 = vrot.lane.b32.xlu0 %v338, 24
      %v1095 = vpop.permute.xlu0 %1094
      %1096 = vrot.lane.b32.xlu0 %v340, 24
      %v1097 = vpop.permute.xlu0 %1096
      %1098 = vrot.lane.b32.xlu0 %v341, 24
      %v1099 = vpop.permute.xlu0 %1098
      %1100 = vrot.lane.b32.xlu0 %v343, 24
      %v1101 = vpop.permute.xlu0 %1100
      %1102 = vrot.lane.b32.xlu0 %v344, 24
      %v1103 = vpop.permute.xlu0 %1102
      %1104 = vrot.lane.b32.xlu0 %v346, 24
      %v1105 = vpop.permute.xlu0 %1104
      %1106 = vrot.lane.b32.xlu0 %v347, 24
      %v1107 = vpop.permute.xlu0 %1106
      %1108 = vrot.lane.b32.xlu0 %v349, 24
      %v1109 = vpop.permute.xlu0 %1108
      %1110 = vrot.lane.b32.xlu0 %v350, 24
      %v1111 = vpop.permute.xlu0 %1110
      %1112 = vrot.lane.b32.xlu0 %v352, 24
      %v1113 = vpop.permute.xlu0 %1112
      %1114 = vrot.lane.b32.xlu0 %v353, 24
      %v1115 = vpop.permute.xlu0 %1114
      %1116 = vrot.lane.b32.xlu0 %v355, 24
      %v1117 = vpop.permute.xlu0 %1116
      %1118 = vrot.lane.b32.xlu0 %v356, 24
      %v1119 = vpop.permute.xlu0 %1118
      %1120 = vrot.lane.b32.xlu0 %v358, 24
      %v1121 = vpop.permute.xlu0 %1120
      %1122 = vrot.lane.b32.xlu0 %v359, 24
      %v1123 = vpop.permute.xlu0 %1122
      %1124 = vrot.lane.b32.xlu0 %v361, 24
      %v1125 = vpop.permute.xlu0 %1124
      %1126 = vrot.lane.b32.xlu0 %v362, 24
      %v1127 = vpop.permute.xlu0 %1126
      %1128 = vrot.lane.b32.xlu0 %v364, 24
      %v1129 = vpop.permute.xlu0 %1128
      %1130 = vrot.lane.b32.xlu0 %v365, 24
      %v1131 = vpop.permute.xlu0 %1130
      %1132 = vrot.lane.b32.xlu0 %v367, 24
      %v1133 = vpop.permute.xlu0 %1132
      %1134 = vrot.lane.b32.xlu0 %v368, 24
      %v1135 = vpop.permute.xlu0 %1134
      %1136 = vrot.lane.b32.xlu0 %v370, 24
      %v1137 = vpop.permute.xlu0 %1136
      %1138 = vrot.lane.b32.xlu0 %v371, 24
      %v1139 = vpop.permute.xlu0 %1138
      %1140 = vrot.lane.b32.xlu0 %v373, 24
      %v1141 = vpop.permute.xlu0 %1140
      %1142 = vrot.lane.b32.xlu0 %v374, 24
      %v1143 = vpop.permute.xlu0 %1142
      %1144 = vrot.lane.b32.xlu0 %v376, 24
      %v1145 = vpop.permute.xlu0 %1144
      %1146 = vrot.lane.b32.xlu0 %v377, 24
      %v1147 = vpop.permute.xlu0 %1146
      %v1181 = vrot.slane %v376, 1
      %v1182 = vrot.slane %v377, 1
      %v1183 = vsel %vm427, %v1181, %v1182
      %v1184 = vrot.slane %v378, 1
      %v1185 = vsel %vm427, %v1182, %v1184
      %1186 = vrot.lane.b32.xlu0 %v440, 28
      %v1187 = vpop.permute.xlu0 %1186
      %1188 = vrot.lane.b32.xlu0 %v442, 28
      %v1189 = vpop.permute.xlu0 %1188
      %1190 = vrot.lane.b32.xlu0 %v445, 28
      %v1191 = vpop.permute.xlu0 %1190
      %1192 = vrot.lane.b32.xlu0 %v447, 28
      %v1193 = vpop.permute.xlu0 %1192
      %1194 = vrot.lane.b32.xlu0 %v450, 28
      %v1195 = vpop.permute.xlu0 %1194
      %1196 = vrot.lane.b32.xlu0 %v452, 28
      %v1197 = vpop.permute.xlu0 %1196
      %1198 = vrot.lane.b32.xlu0 %v455, 28
      %v1199 = vpop.permute.xlu0 %1198
      %1200 = vrot.lane.b32.xlu0 %v457, 28
      %v1201 = vpop.permute.xlu0 %1200
      %1202 = vrot.lane.b32.xlu0 %v460, 28
      %v1203 = vpop.permute.xlu0 %1202
      %1204 = vrot.lane.b32.xlu0 %v462, 28
      %v1205 = vpop.permute.xlu0 %1204
      %1206 = vrot.lane.b32.xlu0 %v465, 28
      %v1207 = vpop.permute.xlu0 %1206
      %1208 = vrot.lane.b32.xlu0 %v467, 28
      %v1209 = vpop.permute.xlu0 %1208
      %1210 = vrot.lane.b32.xlu0 %v470, 28
      %v1211 = vpop.permute.xlu0 %1210
      %1212 = vrot.lane.b32.xlu0 %v472, 28
      %v1213 = vpop.permute.xlu0 %1212
      %1214 = vrot.lane.b32.xlu0 %v475, 28
      %v1215 = vpop.permute.xlu0 %1214
      %1216 = vrot.lane.b32.xlu0 %v477, 28
      %v1217 = vpop.permute.xlu0 %1216
      %1218 = vrot.lane.b32.xlu0 %v480, 28
      %v1219 = vpop.permute.xlu0 %1218
      %1220 = vrot.lane.b32.xlu0 %v482, 28
      %v1221 = vpop.permute.xlu0 %1220
      %1222 = vrot.lane.b32.xlu0 %v485, 28
      %v1223 = vpop.permute.xlu0 %1222
      %1224 = vrot.lane.b32.xlu0 %v487, 28
      %v1225 = vpop.permute.xlu0 %1224
      %1226 = vrot.lane.b32.xlu0 %v490, 28
      %v1227 = vpop.permute.xlu0 %1226
      %1228 = vrot.lane.b32.xlu0 %v492, 28
      %v1229 = vpop.permute.xlu0 %1228
      %1230 = vrot.lane.b32.xlu0 %v495, 28
      %v1231 = vpop.permute.xlu0 %1230
      %1232 = vrot.lane.b32.xlu0 %v497, 28
      %v1233 = vpop.permute.xlu0 %1232
      %1234 = vrot.lane.b32.xlu0 %v500, 28
      %v1235 = vpop.permute.xlu0 %1234
      %1236 = vrot.lane.b32.xlu0 %v502, 28
      %v1237 = vpop.permute.xlu0 %1236
      %1238 = vrot.lane.b32.xlu0 %v505, 28
      %v1239 = vpop.permute.xlu0 %1238
      %1240 = vrot.lane.b32.xlu0 %v507, 28
      %v1241 = vpop.permute.xlu0 %1240
      %1242 = vrot.lane.b32.xlu0 %v882, 28
      %v1243 = vpop.permute.xlu0 %1242
      %1244 = vrot.lane.b32.xlu0 %v884, 28
      %v1245 = vpop.permute.xlu0 %1244
      %1246 = vrot.lane.b32.xlu0 %v1183, 28
      %v1247 = vpop.permute.xlu0 %1246
      %1248 = vrot.lane.b32.xlu0 %v1185, 28
      %v1249 = vpop.permute.xlu0 %1248
      %v1282 = vrot.slane %v376, 2
      %v1283 = vrot.slane %v377, 2
      %v1284 = vsel %vm604, %v1282, %v1283
      %v1285 = vrot.slane %v378, 2
      %v1286 = vsel %vm604, %v1283, %v1285
      %1287 = vrot.lane.b32.xlu0 %v617, 32
      %v1288 = vpop.permute.xlu0 %1287
      %1289 = vrot.lane.b32.xlu0 %v619, 32
      %v1290 = vpop.permute.xlu0 %1289
      %1291 = vrot.lane.b32.xlu0 %v622, 32
      %v1292 = vpop.permute.xlu0 %1291
      %1293 = vrot.lane.b32.xlu0 %v624, 32
      %v1294 = vpop.permute.xlu0 %1293
      %1295 = vrot.lane.b32.xlu0 %v627, 32
      %v1296 = vpop.permute.xlu0 %1295
      %1297 = vrot.lane.b32.xlu0 %v629, 32
      %v1298 = vpop.permute.xlu0 %1297
      %1299 = vrot.lane.b32.xlu0 %v632, 32
      %v1300 = vpop.permute.xlu0 %1299
      %1301 = vrot.lane.b32.xlu0 %v634, 32
      %v1302 = vpop.permute.xlu0 %1301
      %1303 = vrot.lane.b32.xlu0 %v637, 32
      %v1304 = vpop.permute.xlu0 %1303
      %1305 = vrot.lane.b32.xlu0 %v639, 32
      %v1306 = vpop.permute.xlu0 %1305
      %1307 = vrot.lane.b32.xlu0 %v642, 32
      %v1308 = vpop.permute.xlu0 %1307
      %1309 = vrot.lane.b32.xlu0 %v644, 32
      %v1310 = vpop.permute.xlu0 %1309
      %1311 = vrot.lane.b32.xlu0 %v647, 32
      %v1312 = vpop.permute.xlu0 %1311
      %1313 = vrot.lane.b32.xlu0 %v649, 32
      %v1314 = vpop.permute.xlu0 %1313
      %1315 = vrot.lane.b32.xlu0 %v652, 32
      %v1316 = vpop.permute.xlu0 %1315
      %1317 = vrot.lane.b32.xlu0 %v654, 32
      %v1318 = vpop.permute.xlu0 %1317
      %1319 = vrot.lane.b32.xlu0 %v657, 32
      %v1320 = vpop.permute.xlu0 %1319
      %1321 = vrot.lane.b32.xlu0 %v659, 32
      %v1322 = vpop.permute.xlu0 %1321
      %1323 = vrot.lane.b32.xlu0 %v662, 32
      %v1324 = vpop.permute.xlu0 %1323
      %1325 = vrot.lane.b32.xlu0 %v664, 32
      %v1326 = vpop.permute.xlu0 %1325
      %1327 = vrot.lane.b32.xlu0 %v667, 32
      %v1328 = vpop.permute.xlu0 %1327
      %1329 = vrot.lane.b32.xlu0 %v669, 32
      %v1330 = vpop.permute.xlu0 %1329
      %1331 = vrot.lane.b32.xlu0 %v672, 32
      %v1332 = vpop.permute.xlu0 %1331
      %1333 = vrot.lane.b32.xlu0 %v674, 32
      %v1334 = vpop.permute.xlu0 %1333
      %1335 = vrot.lane.b32.xlu0 %v677, 32
      %v1336 = vpop.permute.xlu0 %1335
      %1337 = vrot.lane.b32.xlu0 %v679, 32
      %v1338 = vpop.permute.xlu0 %1337
      %1339 = vrot.lane.b32.xlu0 %v682, 32
      %v1340 = vpop.permute.xlu0 %1339
      %1341 = vrot.lane.b32.xlu0 %v684, 32
      %v1342 = vpop.permute.xlu0 %1341
      %1343 = vrot.lane.b32.xlu0 %v983, 32
      %v1344 = vpop.permute.xlu0 %1343
      %1345 = vrot.lane.b32.xlu0 %v985, 32
      %v1346 = vpop.permute.xlu0 %1345
      %1347 = vrot.lane.b32.xlu0 %v1284, 32
      %v1348 = vpop.permute.xlu0 %1347
      %1349 = vrot.lane.b32.xlu0 %v1286, 32
      %v1350 = vpop.permute.xlu0 %1349
      %v1383 = vsel %vm236, %v325, %v509
      %v1384 = vsel %vm236, %v326, %v511
      %v1385 = vsel %vm236, %v328, %v513
      %v1386 = vsel %vm236, %v329, %v515
      %v1387 = vsel %vm236, %v331, %v517
      %v1388 = vsel %vm236, %v332, %v519
      %v1389 = vsel %vm236, %v334, %v521
      %v1390 = vsel %vm236, %v335, %v523
      %v1391 = vsel %vm236, %v337, %v525
      %v1392 = vsel %vm236, %v338, %v527
      %v1393 = vsel %vm236, %v340, %v529
      %v1394 = vsel %vm236, %v341, %v531
      %v1395 = vsel %vm236, %v343, %v533
      %v1396 = vsel %vm236, %v344, %v535
      %v1397 = vsel %vm236, %v346, %v537
      %v1398 = vsel %vm236, %v347, %v539
      %v1399 = vsel %vm236, %v349, %v541
      %v1400 = vsel %vm236, %v350, %v543
      %v1401 = vsel %vm236, %v352, %v545
      %v1402 = vsel %vm236, %v353, %v547
      %v1403 = vsel %vm236, %v355, %v549
      %v1404 = vsel %vm236, %v356, %v551
      %v1405 = vsel %vm236, %v358, %v553
      %v1406 = vsel %vm236, %v359, %v555
      %v1407 = vsel %vm236, %v361, %v557
      %v1408 = vsel %vm236, %v362, %v559
      %v1409 = vsel %vm236, %v364, %v561
      %v1410 = vsel %vm236, %v365, %v563
      %v1411 = vsel %vm236, %v367, %v565
      %v1412 = vsel %vm236, %v368, %v567
      %v1413 = vsel %vm236, %v370, %v569
      %v1414 = vsel %vm236, %v371, %v571
      %vm1415 = vcmask 64512
      %v1416 = vsel %vm1415, %v1383, %v686
      %v1417 = vsel %vm1415, %v1384, %v688
      %v1418 = vsel %vm1415, %v1385, %v690
      %v1419 = vsel %vm1415, %v1386, %v692
      %v1420 = vsel %vm1415, %v1387, %v694
      %v1421 = vsel %vm1415, %v1388, %v696
      %v1422 = vsel %vm1415, %v1389, %v698
      %v1423 = vsel %vm1415, %v1390, %v700
      %v1424 = vsel %vm1415, %v1391, %v702
      %v1425 = vsel %vm1415, %v1392, %v704
      %v1426 = vsel %vm1415, %v1393, %v706
      %v1427 = vsel %vm1415, %v1394, %v708
      %v1428 = vsel %vm1415, %v1395, %v710
      %v1429 = vsel %vm1415, %v1396, %v712
      %v1430 = vsel %vm1415, %v1397, %v714
      %v1431 = vsel %vm1415, %v1398, %v716
      %v1432 = vsel %vm1415, %v1399, %v718
      %v1433 = vsel %vm1415, %v1400, %v720
      %v1434 = vsel %vm1415, %v1401, %v722
      %v1435 = vsel %vm1415, %v1402, %v724
      %v1436 = vsel %vm1415, %v1403, %v726
      %v1437 = vsel %vm1415, %v1404, %v728
      %v1438 = vsel %vm1415, %v1405, %v730
      %v1439 = vsel %vm1415, %v1406, %v732
      %v1440 = vsel %vm1415, %v1407, %v734
      %v1441 = vsel %vm1415, %v1408, %v736
      %v1442 = vsel %vm1415, %v1409, %v738
      %v1443 = vsel %vm1415, %v1410, %v740
      %v1444 = vsel %vm1415, %v1411, %v742
      %v1445 = vsel %vm1415, %v1412, %v744
      %v1446 = vsel %vm1415, %v1413, %v746
      %v1447 = vsel %vm1415, %v1414, %v748
      %vm1448 = vcmask 97280
      %v1449 = vsel %vm1448, %v1416, %v784
      %v1450 = vsel %vm1448, %v1417, %v786
      %v1451 = vsel %vm1448, %v1418, %v788
      %v1452 = vsel %vm1448, %v1419, %v790
      %v1453 = vsel %vm1448, %v1420, %v792
      %v1454 = vsel %vm1448, %v1421, %v794
      %v1455 = vsel %vm1448, %v1422, %v796
      %v1456 = vsel %vm1448, %v1423, %v798
      %v1457 = vsel %vm1448, %v1424, %v800
      %v1458 = vsel %vm1448, %v1425, %v802
      %v1459 = vsel %vm1448, %v1426, %v804
      %v1460 = vsel %vm1448, %v1427, %v806
      %v1461 = vsel %vm1448, %v1428, %v808
      %v1462 = vsel %vm1448, %v1429, %v810
      %v1463 = vsel %vm1448, %v1430, %v812
      %v1464 = vsel %vm1448, %v1431, %v814
      %v1465 = vsel %vm1448, %v1432, %v816
      %v1466 = vsel %vm1448, %v1433, %v818
      %v1467 = vsel %vm1448, %v1434, %v820
      %v1468 = vsel %vm1448, %v1435, %v822
      %v1469 = vsel %vm1448, %v1436, %v824
      %v1470 = vsel %vm1448, %v1437, %v826
      %v1471 = vsel %vm1448, %v1438, %v828
      %v1472 = vsel %vm1448, %v1439, %v830
      %v1473 = vsel %vm1448, %v1440, %v832
      %v1474 = vsel %vm1448, %v1441, %v834
      %v1475 = vsel %vm1448, %v1442, %v836
      %v1476 = vsel %vm1448, %v1443, %v838
      %v1477 = vsel %vm1448, %v1444, %v840
      %v1478 = vsel %vm1448, %v1445, %v842
      %v1479 = vsel %vm1448, %v1446, %v844
      %v1480 = vsel %vm1448, %v1447, %v846
      %vm1481 = vcmask 130048
      %v1482 = vsel %vm1481, %v1449, %v886
      %v1483 = vsel %vm1481, %v1450, %v888
      %v1484 = vsel %vm1481, %v1451, %v890
      %v1485 = vsel %vm1481, %v1452, %v892
      %v1486 = vsel %vm1481, %v1453, %v894
      %v1487 = vsel %vm1481, %v1454, %v896
      %v1488 = vsel %vm1481, %v1455, %v898
      %v1489 = vsel %vm1481, %v1456, %v900
      %v1490 = vsel %vm1481, %v1457, %v902
      %v1491 = vsel %vm1481, %v1458, %v904
      %v1492 = vsel %vm1481, %v1459, %v906
      %v1493 = vsel %vm1481, %v1460, %v908
      %v1494 = vsel %vm1481, %v1461, %v910
      %v1495 = vsel %vm1481, %v1462, %v912
      %v1496 = vsel %vm1481, %v1463, %v914
      %v1497 = vsel %vm1481, %v1464, %v916
      %v1498 = vsel %vm1481, %v1465, %v918
      %v1499 = vsel %vm1481, %v1466, %v920
      %v1500 = vsel %vm1481, %v1467, %v922
      %v1501 = vsel %vm1481, %v1468, %v924
      %v1502 = vsel %vm1481, %v1469, %v926
      %v1503 = vsel %vm1481, %v1470, %v928
      %v1504 = vsel %vm1481, %v1471, %v930
      %v1505 = vsel %vm1481, %v1472, %v932
      %v1506 = vsel %vm1481, %v1473, %v934
      %v1507 = vsel %vm1481, %v1474, %v936
      %v1508 = vsel %vm1481, %v1475, %v938
      %v1509 = vsel %vm1481, %v1476, %v940
      %v1510 = vsel %vm1481, %v1477, %v942
      %v1511 = vsel %vm1481, %v1478, %v944
      %v1512 = vsel %vm1481, %v1479, %v946
      %v1513 = vsel %vm1481, %v1480, %v948
      %vm1514 = vcmask 162816
      %v1515 = vsel %vm1514, %v1482, %v987
      %v1516 = vsel %vm1514, %v1483, %v989
      %v1517 = vsel %vm1514, %v1484, %v991
      %v1518 = vsel %vm1514, %v1485, %v993
      %v1519 = vsel %vm1514, %v1486, %v995
      %v1520 = vsel %vm1514, %v1487, %v997
      %v1521 = vsel %vm1514, %v1488, %v999
      %v1522 = vsel %vm1514, %v1489, %v1001
      %v1523 = vsel %vm1514, %v1490, %v1003
      %v1524 = vsel %vm1514, %v1491, %v1005
      %v1525 = vsel %vm1514, %v1492, %v1007
      %v1526 = vsel %vm1514, %v1493, %v1009
      %v1527 = vsel %vm1514, %v1494, %v1011
      %v1528 = vsel %vm1514, %v1495, %v1013
      %v1529 = vsel %vm1514, %v1496, %v1015
      %v1530 = vsel %vm1514, %v1497, %v1017
      %v1531 = vsel %vm1514, %v1498, %v1019
      %v1532 = vsel %vm1514, %v1499, %v1021
      %v1533 = vsel %vm1514, %v1500, %v1023
      %v1534 = vsel %vm1514, %v1501, %v1025
      %v1535 = vsel %vm1514, %v1502, %v1027
      %v1536 = vsel %vm1514, %v1503, %v1029
      %v1537 = vsel %vm1514, %v1504, %v1031
      %v1538 = vsel %vm1514, %v1505, %v1033
      %v1539 = vsel %vm1514, %v1506, %v1035
      %v1540 = vsel %vm1514, %v1507, %v1037
      %v1541 = vsel %vm1514, %v1508, %v1039
      %v1542 = vsel %vm1514, %v1509, %v1041
      %v1543 = vsel %vm1514, %v1510, %v1043
      %v1544 = vsel %vm1514, %v1511, %v1045
      %v1545 = vsel %vm1514, %v1512, %v1047
      %v1546 = vsel %vm1514, %v1513, %v1049
      %vm1547 = vcmask 195584
      %v1548 = vsel %vm1547, %v1515, %v1085
      %v1549 = vsel %vm1547, %v1516, %v1087
      %v1550 = vsel %vm1547, %v1517, %v1089
      %v1551 = vsel %vm1547, %v1518, %v1091
      %v1552 = vsel %vm1547, %v1519, %v1093
      %v1553 = vsel %vm1547, %v1520, %v1095
      %v1554 = vsel %vm1547, %v1521, %v1097
      %v1555 = vsel %vm1547, %v1522, %v1099
      %v1556 = vsel %vm1547, %v1523, %v1101
      %v1557 = vsel %vm1547, %v1524, %v1103
      %v1558 = vsel %vm1547, %v1525, %v1105
      %v1559 = vsel %vm1547, %v1526, %v1107
      %v1560 = vsel %vm1547, %v1527, %v1109
      %v1561 = vsel %vm1547, %v1528, %v1111
      %v1562 = vsel %vm1547, %v1529, %v1113
      %v1563 = vsel %vm1547, %v1530, %v1115
      %v1564 = vsel %vm1547, %v1531, %v1117
      %v1565 = vsel %vm1547, %v1532, %v1119
      %v1566 = vsel %vm1547, %v1533, %v1121
      %v1567 = vsel %vm1547, %v1534, %v1123
      %v1568 = vsel %vm1547, %v1535, %v1125
      %v1569 = vsel %vm1547, %v1536, %v1127
      %v1570 = vsel %vm1547, %v1537, %v1129
      %v1571 = vsel %vm1547, %v1538, %v1131
      %v1572 = vsel %vm1547, %v1539, %v1133
      %v1573 = vsel %vm1547, %v1540, %v1135
      %v1574 = vsel %vm1547, %v1541, %v1137
      %v1575 = vsel %vm1547, %v1542, %v1139
      %v1576 = vsel %vm1547, %v1543, %v1141
      %v1577 = vsel %vm1547, %v1544, %v1143
      %v1578 = vsel %vm1547, %v1545, %v1145
      %v1579 = vsel %vm1547, %v1546, %v1147
      %vm1580 = vcmask 228352
      %v1581 = vsel %vm1580, %v1548, %v1187
      %v1582 = vsel %vm1580, %v1549, %v1189
      %v1583 = vsel %vm1580, %v1550, %v1191
      %v1584 = vsel %vm1580, %v1551, %v1193
      %v1585 = vsel %vm1580, %v1552, %v1195
      %v1586 = vsel %vm1580, %v1553, %v1197
      %v1587 = vsel %vm1580, %v1554, %v1199
      %v1588 = vsel %vm1580, %v1555, %v1201
      %v1589 = vsel %vm1580, %v1556, %v1203
      %v1590 = vsel %vm1580, %v1557, %v1205
      %v1591 = vsel %vm1580, %v1558, %v1207
      %v1592 = vsel %vm1580, %v1559, %v1209
      %v1593 = vsel %vm1580, %v1560, %v1211
      %v1594 = vsel %vm1580, %v1561, %v1213
      %v1595 = vsel %vm1580, %v1562, %v1215
      %v1596 = vsel %vm1580, %v1563, %v1217
      %v1597 = vsel %vm1580, %v1564, %v1219
      %v1598 = vsel %vm1580, %v1565, %v1221
      %v1599 = vsel %vm1580, %v1566, %v1223
      %v1600 = vsel %vm1580, %v1567, %v1225
      %v1601 = vsel %vm1580, %v1568, %v1227
      %v1602 = vsel %vm1580, %v1569, %v1229
      %v1603 = vsel %vm1580, %v1570, %v1231
      %v1604 = vsel %vm1580, %v1571, %v1233
      %v1605 = vsel %vm1580, %v1572, %v1235
      %v1606 = vsel %vm1580, %v1573, %v1237
      %v1607 = vsel %vm1580, %v1574, %v1239
      %v1608 = vsel %vm1580, %v1575, %v1241
      %v1609 = vsel %vm1580, %v1576, %v1243
      %v1610 = vsel %vm1580, %v1577, %v1245
      %v1611 = vsel %vm1580, %v1578, %v1247
      %v1612 = vsel %vm1580, %v1579, %v1249
      %vm1613 = vcmask 261120
      %v1614 = vsel %vm1613, %v1581, %v1288
      %v1615 = vsel %vm1613, %v1582, %v1290
      %v1616 = vsel %vm1613, %v1583, %v1292
      %v1617 = vsel %vm1613, %v1584, %v1294
      %v1618 = vsel %vm1613, %v1585, %v1296
      %v1619 = vsel %vm1613, %v1586, %v1298
      %v1620 = vsel %vm1613, %v1587, %v1300
      %v1621 = vsel %vm1613, %v1588, %v1302
      %v1622 = vsel %vm1613, %v1589, %v1304
      %v1623 = vsel %vm1613, %v1590, %v1306
      %v1624 = vsel %vm1613, %v1591, %v1308
      %v1625 = vsel %vm1613, %v1592, %v1310
      %v1626 = vsel %vm1613, %v1593, %v1312
      %v1627 = vsel %vm1613, %v1594, %v1314
      %v1628 = vsel %vm1613, %v1595, %v1316
      %v1629 = vsel %vm1613, %v1596, %v1318
      %v1630 = vsel %vm1613, %v1597, %v1320
      %v1631 = vsel %vm1613, %v1598, %v1322
      %v1632 = vsel %vm1613, %v1599, %v1324
      %v1633 = vsel %vm1613, %v1600, %v1326
      %v1634 = vsel %vm1613, %v1601, %v1328
      %v1635 = vsel %vm1613, %v1602, %v1330
      %v1636 = vsel %vm1613, %v1603, %v1332
      %v1637 = vsel %vm1613, %v1604, %v1334
      %v1638 = vsel %vm1613, %v1605, %v1336
      %v1639 = vsel %vm1613, %v1606, %v1338
      %v1640 = vsel %vm1613, %v1607, %v1340
      %v1641 = vsel %vm1613, %v1608, %v1342
      %v1642 = vsel %vm1613, %v1609, %v1344
      %v1643 = vsel %vm1613, %v1610, %v1346
      %v1644 = vsel %vm1613, %v1611, %v1348
      %v1645 = vsel %vm1613, %v1612, %v1350
      %v1646 = vpack.c.bf16 %v1615, %v1614
      %v1647 = vpack.c.bf16 %v1617, %v1616
      %v1648 = vpack.c.bf16 %v1619, %v1618
      %v1649 = vpack.c.bf16 %v1621, %v1620
      %v1650 = vpack.c.bf16 %v1623, %v1622
      %v1651 = vpack.c.bf16 %v1625, %v1624
      %v1652 = vpack.c.bf16 %v1627, %v1626
      %v1653 = vpack.c.bf16 %v1629, %v1628
      %v1654 = vpack.c.bf16 %v1631, %v1630
      %v1655 = vpack.c.bf16 %v1633, %v1632
      %v1656 = vpack.c.bf16 %v1635, %v1634
      %v1657 = vpack.c.bf16 %v1637, %v1636
      %v1658 = vpack.c.bf16 %v1639, %v1638
      %v1659 = vpack.c.bf16 %v1641, %v1640
      %v1660 = vpack.c.bf16 %v1643, %v1642
      %v1661 = vpack.c.bf16 %v1645, %v1644
      %v1662 = vld [vmem:[%s1] sm:$0xf]
      %v1663 = vld [vmem:[%s1 + $0x4] sm:$0xf]
      %v1664 = vld [vmem:[%s1 + $0x8] sm:$0xf]
      %v1665 = vld [vmem:[%s1 + $0xc] sm:$0xf]
      %v1666 = vld [vmem:[%s1 + $0x10] sm:$0x3]
      %v1667 = vld [vmem:[%s2] sm:$0x1]
      %v1669 = vlaneseq
      %v1670 = vshrl.u32 %v1669, 7
      %v1671 = vsub.s32 0, %v1670
      %v1672 = vrot.slane %v1667, %v1671
      %v1679 = vunpack.c.l.b16 %v1662
      %v1680 = vunpack.c.l.b16 %v1663
      %v1681 = vunpack.c.l.b16 %v1664
      %v1682 = vunpack.c.l.b16 %v1665
      %v1683 = vunpack.c.l.b16 %v1666
      %v1684 = vpack.c.b16 %v1680, %v1679
      %v1685 = vpack.c.b16 %v1682, %v1681
      %v1686 = vpack.c.b16 %v1683, %v1683
      %vm1689 = vcmask 293888
      %v1691 = vsel %vm1689, %v1646, 0
      %v1694 = vsel %vm1689, %v1647, 0
      %v1697 = vsel %vm1689, %v1648, 0
      %v1700 = vsel %vm1689, %v1649, 0
      %v1703 = vsel %vm1689, %v1650, 0
      %v1706 = vsel %vm1689, %v1651, 0
      %v1709 = vsel %vm1689, %v1652, 0
      %v1712 = vsel %vm1689, %v1653, 0
      %v1715 = vsel %vm1689, %v1654, 0
      %v1718 = vsel %vm1689, %v1655, 0
      %v1721 = vsel %vm1689, %v1656, 0
      %v1724 = vsel %vm1689, %v1657, 0
      %v1727 = vsel %vm1689, %v1658, 0
      %v1730 = vsel %vm1689, %v1659, 0
      %v1733 = vsel %vm1689, %v1660, 0
      %v1736 = vsel %vm1689, %v1661, 0
      %vm1738 = vcmask 1041408
      %v1740 = vsel %vm1738, %v1686, 0
      %1742 = vmatprep.subr.bf16.mxu0 0
      %1743 = vmatpush1.bf16.msra.mxu0 %v1684
      %1744 = vmatprep.subr.bf16.mxu0 0
      %1745 = vmatpush1.bf16.msra.mxu0 %v1685
      %1746 = vmatprep.subr.bf16.mxu0 0
      %1747 = vmatpush1.bf16.msra.mxu0 %v1740
      %1748 = vmatprep.subr.bf16.mxu0 0
      %1749 = vmatpush1.bf16.msra.mxu0 0
      %1750 = vmatprep.subr.bf16.mxu0 0
      %1751 = vmatpush1.bf16.msra.mxu0 0
      %1752 = vmatprep.subr.bf16.mxu0 0
      %1753 = vmatpush1.bf16.msra.mxu0 0
      %1754 = vmatprep.subr.bf16.mxu0 0
      %1755 = vmatpush1.bf16.msra.mxu0 0
      %1756 = vmatprep.subr.bf16.mxu0 0
      %1757 = vmatpush1.bf16.msra.mxu0 0
      %1758 = vmatprep.subr.bf16.mxu0 0
      %1759 = vmatpush1.bf16.msra.mxu0 0
      %1760 = vmatprep.subr.bf16.mxu0 0
      %1761 = vmatpush1.bf16.msra.mxu0 0
      %1762 = vmatprep.subr.bf16.mxu0 0
      %1763 = vmatpush1.bf16.msra.mxu0 0
      %1764 = vmatprep.subr.bf16.mxu0 0
      %1765 = vmatpush1.bf16.msra.mxu0 0
      %1766 = vmatprep.subr.bf16.mxu0 0
      %1767 = vmatpush1.bf16.msra.mxu0 0
      %1768 = vmatprep.subr.bf16.mxu0 0
      %1769 = vmatpush1.bf16.msra.mxu0 0
      %1770 = vmatprep.subr.bf16.mxu0 0
      %1771 = vmatpush1.bf16.msra.mxu0 0
      %1772 = vmatprep.subr.bf16.mxu0 0
      %1773 = vmatpush1.bf16.msra.mxu0 0
      %1774 = vmatprep.mubr.bf16.mxu0 0
      %1775 = vmatmul.mubr.bf16.gmra.mrb[0].mxu0 %v1691
      %v1776 = vpop.f32.mrb[0].mxu0
      %v1777 = vadd.f32 %v1672, %v1776
      %v1778 = vpop.f32.mrb[0].mxu0
      %v1779 = vpop.f32.mrb[0].mxu0
      %v1780 = vadd.f32 %v1672, %v1779
      %v1781 = vpop.f32.mrb[0].mxu0
      %1782 = vmatprep.mubr.bf16.mxu0 0
      %1783 = vmatmul.mubr.bf16.gmra.mrb[0].mxu0 %v1694
      %v1784 = vpop.f32.mrb[0].mxu0
      %v1785 = vadd.f32 %v1672, %v1784
      %v1786 = vpop.f32.mrb[0].mxu0
      %v1787 = vpop.f32.mrb[0].mxu0
      %v1788 = vadd.f32 %v1672, %v1787
      %v1789 = vpop.f32.mrb[0].mxu0
      %1790 = vmatprep.mubr.bf16.mxu0 0
      %1791 = vmatmul.mubr.bf16.gmra.mrb[0].mxu0 %v1697
      %v1792 = vpop.f32.mrb[0].mxu0
      %v1793 = vadd.f32 %v1672, %v1792
      %v1794 = vpop.f32.mrb[0].mxu0
      %v1795 = vpop.f32.mrb[0].mxu0
      %v1796 = vadd.f32 %v1672, %v1795
      %v1797 = vpop.f32.mrb[0].mxu0
      %1798 = vmatprep.mubr.bf16.mxu0 0
      %1799 = vmatmul.mubr.bf16.gmra.mrb[0].mxu0 %v1700
      %v1800 = vpop.f32.mrb[0].mxu0
      %v1801 = vadd.f32 %v1672, %v1800
      %v1802 = vpop.f32.mrb[0].mxu0
      %v1803 = vpop.f32.mrb[0].mxu0
      %v1804 = vadd.f32 %v1672, %v1803
      %v1805 = vpop.f32.mrb[0].mxu0
      %1806 = vmatprep.mubr.bf16.mxu0 0
      %1807 = vmatmul.mubr.bf16.gmra.mrb[0].mxu0 %v1703
      %v1808 = vpop.f32.mrb[0].mxu0
      %v1809 = vadd.f32 %v1672, %v1808
      %v1810 = vpop.f32.mrb[0].mxu0
      %v1811 = vpop.f32.mrb[0].mxu0
      %v1812 = vadd.f32 %v1672, %v1811
      %v1813 = vpop.f32.mrb[0].mxu0
      %1814 = vmatprep.mubr.bf16.mxu0 0
      %1815 = vmatmul.mubr.bf16.gmra.mrb[0].mxu0 %v1706
      %v1816 = vpop.f32.mrb[0].mxu0
      %v1817 = vadd.f32 %v1672, %v1816
      %v1818 = vpop.f32.mrb[0].mxu0
      %v1819 = vpop.f32.mrb[0].mxu0
      %v1820 = vadd.f32 %v1672, %v1819
      %v1821 = vpop.f32.mrb[0].mxu0
      %1822 = vmatprep.mubr.bf16.mxu0 0
      %1823 = vmatmul.mubr.bf16.gmra.mrb[0].mxu0 %v1709
      %v1824 = vpop.f32.mrb[0].mxu0
      %v1825 = vadd.f32 %v1672, %v1824
      %v1826 = vpop.f32.mrb[0].mxu0
      %v1827 = vpop.f32.mrb[0].mxu0
      %v1828 = vadd.f32 %v1672, %v1827
      %v1829 = vpop.f32.mrb[0].mxu0
      %1830 = vmatprep.mubr.bf16.mxu0 0
      %1831 = vmatmul.mubr.bf16.gmra.mrb[0].mxu0 %v1712
      %v1832 = vpop.f32.mrb[0].mxu0
      %v1833 = vadd.f32 %v1672, %v1832
      %v1834 = vpop.f32.mrb[0].mxu0
      %v1835 = vpop.f32.mrb[0].mxu0
      %v1836 = vadd.f32 %v1672, %v1835
      %v1837 = vpop.f32.mrb[0].mxu0
      %1838 = vmatprep.mubr.bf16.mxu0 0
      %1839 = vmatmul.mubr.bf16.gmra.mrb[0].mxu0 %v1715
      %v1840 = vpop.f32.mrb[0].mxu0
      %v1841 = vadd.f32 %v1672, %v1840
      %v1842 = vpop.f32.mrb[0].mxu0
      %v1843 = vpop.f32.mrb[0].mxu0
      %v1844 = vadd.f32 %v1672, %v1843
      %v1845 = vpop.f32.mrb[0].mxu0
      %1846 = vmatprep.mubr.bf16.mxu0 0
      %1847 = vmatmul.mubr.bf16.gmra.mrb[0].mxu0 %v1718
      %v1848 = vpop.f32.mrb[0].mxu0
      %v1849 = vadd.f32 %v1672, %v1848
      %v1850 = vpop.f32.mrb[0].mxu0
      %v1851 = vpop.f32.mrb[0].mxu0
      %v1852 = vadd.f32 %v1672, %v1851
      %v1853 = vpop.f32.mrb[0].mxu0
      %1854 = vmatprep.mubr.bf16.mxu0 0
      %1855 = vmatmul.mubr.bf16.gmra.mrb[0].mxu0 %v1721
      %v1856 = vpop.f32.mrb[0].mxu0
      %v1857 = vadd.f32 %v1672, %v1856
      %v1858 = vpop.f32.mrb[0].mxu0
      %v1859 = vpop.f32.mrb[0].mxu0
      %v1860 = vadd.f32 %v1672, %v1859
      %v1861 = vpop.f32.mrb[0].mxu0
      %1862 = vmatprep.mubr.bf16.mxu0 0
      %1863 = vmatmul.mubr.bf16.gmra.mrb[0].mxu0 %v1724
      %v1864 = vpop.f32.mrb[0].mxu0
      %v1865 = vadd.f32 %v1672, %v1864
      %v1866 = vpop.f32.mrb[0].mxu0
      %v1867 = vpop.f32.mrb[0].mxu0
      %v1868 = vadd.f32 %v1672, %v1867
      %v1869 = vpop.f32.mrb[0].mxu0
      %1870 = vmatprep.mubr.bf16.mxu0 0
      %1871 = vmatmul.mubr.bf16.gmra.mrb[0].mxu0 %v1727
      %v1872 = vpop.f32.mrb[0].mxu0
      %v1873 = vadd.f32 %v1672, %v1872
      %v1874 = vpop.f32.mrb[0].mxu0
      %v1875 = vpop.f32.mrb[0].mxu0
      %v1876 = vadd.f32 %v1672, %v1875
      %v1877 = vpop.f32.mrb[0].mxu0
      %1878 = vmatprep.mubr.bf16.mxu0 0
      %1879 = vmatmul.mubr.bf16.gmra.mrb[0].mxu0 %v1730
      %v1880 = vpop.f32.mrb[0].mxu0
      %v1881 = vadd.f32 %v1672, %v1880
      %v1882 = vpop.f32.mrb[0].mxu0
      %v1883 = vpop.f32.mrb[0].mxu0
      %v1884 = vadd.f32 %v1672, %v1883
      %v1885 = vpop.f32.mrb[0].mxu0
      %1886 = vmatprep.mubr.bf16.mxu0 0
      %1887 = vmatmul.mubr.bf16.gmra.mrb[0].mxu0 %v1733
      %v1888 = vpop.f32.mrb[0].mxu0
      %v1889 = vadd.f32 %v1672, %v1888
      %v1890 = vpop.f32.mrb[0].mxu0
      %v1891 = vpop.f32.mrb[0].mxu0
      %v1892 = vadd.f32 %v1672, %v1891
      %v1893 = vpop.f32.mrb[0].mxu0
      %1894 = vmatprep.mubr.bf16.mxu0 0
      %1895 = vmatmul.mubr.bf16.gmra.mrb[0].mxu0 %v1736
      %v1896 = vpop.f32.mrb[0].mxu0
      %v1897 = vadd.f32 %v1672, %v1896
      %v1898 = vpop.f32.mrb[0].mxu0
      %v1899 = vpop.f32.mrb[0].mxu0
      %v1900 = vadd.f32 %v1672, %v1899
      %v1901 = vpop.f32.mrb[0].mxu0
      %1902 = vdwg.mxu0
      %v1903 = vmax.f32 %v1777, 0.0
      %v1904 = vmax.f32 %v1780, 0.0
      %v1905 = vmax.f32 %v1785, 0.0
      %v1906 = vmax.f32 %v1788, 0.0
      %v1907 = vmax.f32 %v1793, 0.0
      %v1908 = vmax.f32 %v1796, 0.0
      %v1909 = vmax.f32 %v1801, 0.0
      %v1910 = vmax.f32 %v1804, 0.0
      %v1911 = vmax.f32 %v1809, 0.0
      %v1912 = vmax.f32 %v1812, 0.0
      %v1913 = vmax.f32 %v1817, 0.0
      %v1914 = vmax.f32 %v1820, 0.0
      %v1915 = vmax.f32 %v1825, 0.0
      %v1916 = vmax.f32 %v1828, 0.0
      %v1917 = vmax.f32 %v1833, 0.0
      %v1918 = vmax.f32 %v1836, 0.0
      %v1919 = vmax.f32 %v1841, 0.0
      %v1920 = vmax.f32 %v1844, 0.0
      %v1921 = vmax.f32 %v1849, 0.0
      %v1922 = vmax.f32 %v1852, 0.0
      %v1923 = vmax.f32 %v1857, 0.0
      %v1924 = vmax.f32 %v1860, 0.0
      %v1925 = vmax.f32 %v1865, 0.0
      %v1926 = vmax.f32 %v1868, 0.0
      %v1927 = vmax.f32 %v1873, 0.0
      %v1928 = vmax.f32 %v1876, 0.0
      %v1929 = vmax.f32 %v1881, 0.0
      %v1930 = vmax.f32 %v1884, 0.0
      %v1931 = vmax.f32 %v1889, 0.0
      %v1932 = vmax.f32 %v1892, 0.0
      %v1933 = vmax.f32 %v1897, 0.0
      %v1934 = vmax.f32 %v1900, 0.0
      %1935 = vxpose.xlu0.b32.start [1/16] %v1903, 128
      %1936 = vxpose.xlu0.b32.cont [2/16] %v1904, 128
      %1937 = vxpose.xlu0.b32.cont [3/16] %v1905, 128
      %1938 = vxpose.xlu0.b32.cont [4/16] %v1906, 128
      %1939 = vxpose.xlu0.b32.cont [5/16] %v1907, 128
      %1940 = vxpose.xlu0.b32.cont [6/16] %v1908, 128
      %1941 = vxpose.xlu0.b32.cont [7/16] %v1909, 128
      %1942 = vxpose.xlu0.b32.cont [8/16] %v1910, 128
      %1943 = vxpose.xlu0.b32.cont [9/16] %v1911, 128
      %1944 = vxpose.xlu0.b32.cont [10/16] %v1912, 128
      %1945 = vxpose.xlu0.b32.cont [11/16] %v1913, 128
      %1946 = vxpose.xlu0.b32.cont [12/16] %v1914, 128
      %1947 = vxpose.xlu0.b32.cont [13/16] %v1915, 128
      %1948 = vxpose.xlu0.b32.cont [14/16] %v1916, 128
      %1949 = vxpose.xlu0.b32.cont [15/16] %v1917, 128
      %1950 = vxpose.xlu0.b32.end [16/16] %v1918, 128
      %v1951 = vpop.trf.xlu0
      %v1952 = vpop.trf.xlu0
      %v1953 = vpop.trf.xlu0
      %v1954 = vpop.trf.xlu0
      %v1955 = vpop.trf.xlu0
      %v1956 = vpop.trf.xlu0
      %v1957 = vpop.trf.xlu0
      %v1958 = vpop.trf.xlu0
      %v1959 = vpop.trf.xlu0
      %v1960 = vpop.trf.xlu0
      %v1961 = vpop.trf.xlu0
      %v1962 = vpop.trf.xlu0
      %v1963 = vpop.trf.xlu0
      %v1964 = vpop.trf.xlu0
      %v1965 = vpop.trf.xlu0
      %v1966 = vpop.trf.xlu0
      %1967 = vxpose.xlu0.b32.start [1/16] %v1919, 128
      %1968 = vxpose.xlu0.b32.cont [2/16] %v1920, 128
      %1969 = vxpose.xlu0.b32.cont [3/16] %v1921, 128
      %1970 = vxpose.xlu0.b32.cont [4/16] %v1922, 128
      %1971 = vxpose.xlu0.b32.cont [5/16] %v1923, 128
      %1972 = vxpose.xlu0.b32.cont [6/16] %v1924, 128
      %1973 = vxpose.xlu0.b32.cont [7/16] %v1925, 128
      %1974 = vxpose.xlu0.b32.cont [8/16] %v1926, 128
      %1975 = vxpose.xlu0.b32.cont [9/16] %v1927, 128
      %1976 = vxpose.xlu0.b32.cont [10/16] %v1928, 128
      %1977 = vxpose.xlu0.b32.cont [11/16] %v1929, 128
      %1978 = vxpose.xlu0.b32.cont [12/16] %v1930, 128
      %1979 = vxpose.xlu0.b32.cont [13/16] %v1931, 128
      %1980 = vxpose.xlu0.b32.cont [14/16] %v1932, 128
      %1981 = vxpose.xlu0.b32.cont [15/16] %v1933, 128
      %1982 = vxpose.xlu0.b32.end [16/16] %v1934, 128
      %v1983 = vpop.trf.xlu0
      %v1984 = vpop.trf.xlu0
      %v1985 = vpop.trf.xlu0
      %v1986 = vpop.trf.xlu0
      %v1987 = vpop.trf.xlu0
      %v1988 = vpop.trf.xlu0
      %v1989 = vpop.trf.xlu0
      %v1990 = vpop.trf.xlu0
      %v1991 = vpop.trf.xlu0
      %v1992 = vpop.trf.xlu0
      %v1993 = vpop.trf.xlu0
      %v1994 = vpop.trf.xlu0
      %v1995 = vpop.trf.xlu0
      %v1996 = vpop.trf.xlu0
      %v1997 = vpop.trf.xlu0
      %v1998 = vpop.trf.xlu0
      %1999 = vst [vmem:[%s170] sm:$0xff] %v1951
      %2000 = vst [vmem:[%s170 + $0x8] sm:$0xff] %v1983
      %2001 = vst [vmem:[%s170 + $0x10] sm:$0xff] %v1952
      %2002 = vst [vmem:[%s170 + $0x18] sm:$0xff] %v1984
      %2003 = vst [vmem:[%s170 + $0x20] sm:$0xff] %v1953
      %2004 = vst [vmem:[%s170 + $0x28] sm:$0xff] %v1985
      %2005 = vst [vmem:[%s170 + $0x30] sm:$0xff] %v1954
      %2006 = vst [vmem:[%s170 + $0x38] sm:$0xff] %v1986
      %p2007 = scmp.lt.s32.totalorder %s14, 1
      %s2008 = scalar_select %p2007, %s14, 1
      %s2009 = smul.addr %s2008, 8
      %s2010 = smul.addr %s2009, 8
      %s2011 = scalar_lea.vmem %s3, %s2010
      // Predicated region
      $region33: #{gain_forward.3} parent=31 // pred_check
        %p2012 = pneg %p100
      $region34: #{gain_forward.3} parent=31 // pred_check_branch
        %2014 = sbr.rel (%p2012) target = $region36
      $region35: #{gain_forward.3} parent=31 // pred_region
        _
      $region36: #{gain_forward.3} parent=31 // pred_fallthru
        _
    $region32: #{gain_forward.3} parent=5 // pred_fallthru
      _
    %p2015 = scmp.le.s32.totalorder 2, %s9
    // Predicated region
    $region37: #{gain_forward.3} parent=5 // pred_check
      %p2016 = pneg %p2015
    $region38: #{gain_forward.3} parent=5 // pred_check_branch
      %2018 = sbr.rel (%p2016) target = $region40
    $region39: #{gain_forward.3} parent=5 // pred_region
      %s2019 = ssub.s32 %s9, 2
      // Predicated region
      $region41: #{gain_forward.3} parent=39 // pred_check
        %p2020 = pneg %p106
      $region42: #{gain_forward.3} parent=39 // pred_check_branch
        %2022 = sbr.rel (%p2020) target = $region44
      $region43: #{gain_forward.3} parent=39 // pred_region
        %p2023 = scmp.lt.s32.totalorder %s15, 1
        %s2024 = scalar_select %p2023, %s15, 1
        %s2025 = smul.addr %s2024, 8
        %s2026 = smul.addr %s2025, 8
        %s2027 = scalar_lea.vmem %s3, %s2026
      $region44: #{gain_forward.3} parent=39 // pred_fallthru
        _
    $region40: #{gain_forward.3} parent=5 // pred_fallthru
      _
  $region6: #{gain_forward.3} parent=0 // loop_footer
    %s13 = sadd.s32 1, %s9
  $region7: #{gain_forward.3} parent=0 // loop_footer_branch
    %8 = sbr.rel target = $region3
  $region8: #{gain_forward.3} parent=0 // loop_exit
    _

// kernel: gain_forward.5
$region0: #{gain_forward.5}
  #allocation0 [shape = 'u32[]', space=smem, size = 0x4, offset = 0x4, fixed_abs, tag = 'smem constant byte address 0x4 - core index']
  #allocation1 [shape = 'u32[144,128]{1,0:T(1,128)}', space=vmem, size = 0x12000, scoped, tag = 'internal scratch']
  #allocation2 [shape = 'f32[18,18,4]{2,1,0:T(8,128)}', space=vmem, size = 0x36000, scoped, tag = 'scratch operand']
  #allocation3 [shape = 'f32[1,1]{1,0:T(1,128)S(1)}', space=vmem, size = 0x200, scoped, tag = 'scoped memory for gain_forward.5']
  #allocation4 [shape = 'f32[1,1]{1,0:T(1,128)S(1)}', space=vmem, size = 0x200, scoped, tag = 'scoped memory for gain_forward.5']
  %s0 = inlined_call_operand.vmem [shape: f32[2,1,256], index: 0, kind: input, shape index: {}]
  %s1 = inlined_call_operand.<no memory space> [shape: f32[1,1], index: 1, kind: input, shape index: {}]
  %s2 = inlined_call_operand.<no memory space> [shape: f32[1,1], index: 2, kind: input, shape index: {}]
  %s3 = inlined_call_operand.vmem [shape: bf16[2,16,16,4], index: 3, kind: input, shape index: {}]
  %s4 = inlined_call_operand.vmem [shape: bf16[36,32], index: 4, kind: input, shape index: {}]
  %s5 = inlined_call_operand.vmem [shape: f32[1,32], index: 5, kind: input, shape index: {}]
  %s6 = inlined_call_operand.vmem [shape: f32[2,32,256], index: 6, kind: output, shape index: {}]
  %s7 = sld [smem:[#allocation0]]
  $region57: #{gain_forward.5} parent=0
    _
  %s9 = ssub.s32 1, %s7
  %s10 = scalar_select 0, %s9, %s7
  %v11 = vstv %s1
  %12 = vst [vmem:[#allocation3] sm:$0x1] %v11
  %v13 = vstv %s2
  %14 = vst [vmem:[#allocation4] sm:$0x1] %v13
  loop: start=0, step=1, limit=4
  $region2: #{gain_forward.5} parent=0 // loop_pre_header
    _
  $region3: #{gain_forward.5} parent=0 // loop_header
    %s16 = sphi 0, %s20
    %p17 = scmp.ge.s32.totalorder %s16, 4
    %s26 = sphi 0, %s28
    %s29 = sphi 0, %s26
    %s30 = sphi 0, %s29
    %s46 = sphi 0, %s30
    %s50 = sphi 0, %s50
    %s52 = sphi 0, %s50
    %s53 = sphi 0, %s52
    %s67 = sphi 0, %s53
    %s71 = sphi 0, %s71
    %s73 = sphi 0, %s71
    %s74 = sphi 0, %s73
    %s88 = sphi 0, %s74
    %s94 = sphi 0, %s96
    %s97 = sphi 0, %s94
    %s98 = sphi 0, %s97
    %s114 = sphi 0, %s98
    %s118 = sphi 0, %s118
    %s120 = sphi 0, %s118
    %s121 = sphi 0, %s120
    %s135 = sphi 0, %s121
    %s139 = sphi 0, %s139
    %s141 = sphi 0, %s139
    %s142 = sphi 0, %s141
    %s156 = sphi 0, %s142
    %s162 = sphi 0, %s164
    %s165 = sphi 0, %s162
    %s166 = sphi 0, %s165
    %s182 = sphi 0, %s166
  $region4: #{gain_forward.5} parent=0 // loop_header_branch
    %19 = sbr.rel (%p17) target = $region8
  $region5: #{gain_forward.5} parent=0 // loop_body
    %s21 = ssub.s32 %s16, 1
    %s22 = ssub.s32 %s16, 2
    %s23 = sadd.s32 %s16, 1
    %s24 = ssub.s32 %s16, %s23
    %p25 = scmp.eq.s32.totalorder %s24, 0
    %s27 = sadd.s32 %s26, 1
    %s28 = scalar_select %p25, %s26, %s27
    %p31 = pneg %p25
    %p32 = scmp.eq.s32.totalorder %s16, 1
    %p33 = por %p31, %p32
    %p34 = scmp.ne.s32.totalorder %s26, %s29
    %p35 = scmp.eq.s32.totalorder %s16, 0
    %p36 = por %p34, %p35
    %p37 = scmp.ne.s32.totalorder %s26, %s29
    %p38 = scmp.eq.s32.totalorder %s21, 1
    %p39 = por %p37, %p38
    %p40 = scmp.ne.s32.totalorder %s29, %s30
    %p41 = scmp.eq.s32.totalorder %s21, 0
    %p42 = por %p40, %p41
    %p43 = scmp.ne.s32.totalorder %s29, %s30
    %p44 = scmp.eq.s32.totalorder %s22, 1
    %p45 = por %p43, %p44
    %p47 = scmp.ne.s32.totalorder %s30, %s46
    %p48 = scmp.eq.s32.totalorder %s22, 0
    %p49 = por %p47, %p48
    %s51 = sadd.s32 %s50, 1
    %p54 = scmp.eq.s32.totalorder %s16, 1
    %p55 = scmp.ne.s32.totalorder %s50, %s52
    %p56 = scmp.eq.s32.totalorder %s16, 0
    %p57 = por %p55, %p56
    %p58 = scmp.ne.s32.totalorder %s50, %s52
    %p59 = scmp.eq.s32.totalorder %s21, 1
    %p60 = por %p58, %p59
    %p61 = scmp.ne.s32.totalorder %s52, %s53
    %p62 = scmp.eq.s32.totalorder %s21, 0
    %p63 = por %p61, %p62
    %p64 = scmp.ne.s32.totalorder %s52, %s53
    %p65 = scmp.eq.s32.totalorder %s22, 1
    %p66 = por %p64, %p65
    %p68 = scmp.ne.s32.totalorder %s53, %s67
    %p69 = scmp.eq.s32.totalorder %s22, 0
    %p70 = por %p68, %p69
    %s72 = sadd.s32 %s71, 1
    %p75 = scmp.eq.s32.totalorder %s16, 1
    %p76 = scmp.ne.s32.totalorder %s71, %s73
    %p77 = scmp.eq.s32.totalorder %s16, 0
    %p78 = por %p76, %p77
    %p79 = scmp.ne.s32.totalorder %s71, %s73
    %p80 = scmp.eq.s32.totalorder %s21, 1
    %p81 = por %p79, %p80
    %p82 = scmp.ne.s32.totalorder %s73, %s74
    %p83 = scmp.eq.s32.totalorder %s21, 0
    %p84 = por %p82, %p83
    %p85 = scmp.ne.s32.totalorder %s73, %s74
    %p86 = scmp.eq.s32.totalorder %s22, 1
    %p87 = por %p85, %p86
    %p89 = scmp.ne.s32.totalorder %s74, %s88
    %p90 = scmp.eq.s32.totalorder %s22, 0
    %p91 = por %p89, %p90
    %s92 = ssub.s32 %s16, %s23
    %p93 = scmp.eq.s32.totalorder %s92, 0
    %s95 = sadd.s32 %s94, 1
    %s96 = scalar_select %p93, %s94, %s95
    %p99 = pneg %p93
    %p100 = scmp.eq.s32.totalorder %s16, 1
    %p101 = por %p99, %p100
    %p102 = scmp.ne.s32.totalorder %s94, %s97
    %p103 = scmp.eq.s32.totalorder %s16, 0
    %p104 = por %p102, %p103
    %p105 = scmp.ne.s32.totalorder %s94, %s97
    %p106 = scmp.eq.s32.totalorder %s21, 1
    %p107 = por %p105, %p106
    %p108 = scmp.ne.s32.totalorder %s97, %s98
    %p109 = scmp.eq.s32.totalorder %s21, 0
    %p110 = por %p108, %p109
    %p111 = scmp.ne.s32.totalorder %s97, %s98
    %p112 = scmp.eq.s32.totalorder %s22, 1
    %p113 = por %p111, %p112
    %p115 = scmp.ne.s32.totalorder %s98, %s114
    %p116 = scmp.eq.s32.totalorder %s22, 0
    %p117 = por %p115, %p116
    %s119 = sadd.s32 %s118, 1
    %p122 = scmp.eq.s32.totalorder %s16, 1
    %p123 = scmp.ne.s32.totalorder %s118, %s120
    %p124 = scmp.eq.s32.totalorder %s16, 0
    %p125 = por %p123, %p124
    %p126 = scmp.ne.s32.totalorder %s118, %s120
    %p127 = scmp.eq.s32.totalorder %s21, 1
    %p128 = por %p126, %p127
    %p129 = scmp.ne.s32.totalorder %s120, %s121
    %p130 = scmp.eq.s32.totalorder %s21, 0
    %p131 = por %p129, %p130
    %p132 = scmp.ne.s32.totalorder %s120, %s121
    %p133 = scmp.eq.s32.totalorder %s22, 1
    %p134 = por %p132, %p133
    %p136 = scmp.ne.s32.totalorder %s121, %s135
    %p137 = scmp.eq.s32.totalorder %s22, 0
    %p138 = por %p136, %p137
    %s140 = sadd.s32 %s139, 1
    %p143 = scmp.eq.s32.totalorder %s16, 1
    %p144 = scmp.ne.s32.totalorder %s139, %s141
    %p145 = scmp.eq.s32.totalorder %s16, 0
    %p146 = por %p144, %p145
    %p147 = scmp.ne.s32.totalorder %s139, %s141
    %p148 = scmp.eq.s32.totalorder %s21, 1
    %p149 = por %p147, %p148
    %p150 = scmp.ne.s32.totalorder %s141, %s142
    %p151 = scmp.eq.s32.totalorder %s21, 0
    %p152 = por %p150, %p151
    %p153 = scmp.ne.s32.totalorder %s141, %s142
    %p154 = scmp.eq.s32.totalorder %s22, 1
    %p155 = por %p153, %p154
    %p157 = scmp.ne.s32.totalorder %s142, %s156
    %p158 = scmp.eq.s32.totalorder %s22, 0
    %p159 = por %p157, %p158
    %s160 = ssub.s32 %s16, %s23
    %p161 = scmp.eq.s32.totalorder %s160, 0
    %s163 = sadd.s32 %s162, 1
    %s164 = scalar_select %p161, %s162, %s163
    %p167 = pneg %p161
    %p168 = scmp.eq.s32.totalorder %s16, 1
    %p169 = por %p167, %p168
    %p170 = scmp.ne.s32.totalorder %s162, %s165
    %p171 = scmp.eq.s32.totalorder %s16, 0
    %p172 = por %p170, %p171
    %p173 = scmp.ne.s32.totalorder %s162, %s165
    %p174 = scmp.eq.s32.totalorder %s21, 1
    %p175 = por %p173, %p174
    %p176 = scmp.ne.s32.totalorder %s165, %s166
    %p177 = scmp.eq.s32.totalorder %s21, 0
    %p178 = por %p176, %p177
    %p179 = scmp.ne.s32.totalorder %s165, %s166
    %p180 = scmp.eq.s32.totalorder %s22, 1
    %p181 = por %p179, %p180
    %p183 = scmp.ne.s32.totalorder %s166, %s182
    %p184 = scmp.eq.s32.totalorder %s22, 0
    %p185 = por %p183, %p184
    %p186 = scmp.le.s32.totalorder 1, %s16
    %p187 = scmp.lt.s32.totalorder %s16, 3
    %p188 = pnand %p186, %p187
    %p189 = pneg %p188
    // Predicated region
    $region9: #{gain_forward.5} parent=5 // pred_check
      _
    $region10: #{gain_forward.5} parent=5 // pred_check_branch
      %191 = sbr.rel (%p188) target = $region12
    $region11: #{gain_forward.5} parent=5 // pred_region
      %s192 = ssub.s32 %s16, 1
      // Predicated region
      $region13: #{gain_forward.5} parent=11 // pred_check
        %p193 = pneg %p63
      $region14: #{gain_forward.5} parent=11 // pred_check_branch
        %195 = sbr.rel (%p193) target = $region16
      $region15: #{gain_forward.5} parent=11 // pred_region
        _
      $region16: #{gain_forward.5} parent=11 // pred_fallthru
        _
      // Predicated region
      $region17: #{gain_forward.5} parent=11 // pred_check
        %p196 = pneg %p84
      $region18: #{gain_forward.5} parent=11 // pred_check_branch
        %198 = sbr.rel (%p196) target = $region20
      $region19: #{gain_forward.5} parent=11 // pred_region
        _
      $region20: #{gain_forward.5} parent=11 // pred_fallthru
        _
      // Predicated region
      $region21: #{gain_forward.5} parent=11 // pred_check
        %p199 = pneg %p131
      $region22: #{gain_forward.5} parent=11 // pred_check_branch
        %201 = sbr.rel (%p199) target = $region24
      $region23: #{gain_forward.5} parent=11 // pred_region
        _
      $region24: #{gain_forward.5} parent=11 // pred_fallthru
        _
      // Predicated region
      $region25: #{gain_forward.5} parent=11 // pred_check
        %p202 = pneg %p152
      $region26: #{gain_forward.5} parent=11 // pred_check_branch
        %204 = sbr.rel (%p202) target = $region28
      $region27: #{gain_forward.5} parent=11 // pred_region
        _
      $region28: #{gain_forward.5} parent=11 // pred_fallthru
        _
    $region12: #{gain_forward.5} parent=5 // pred_fallthru
      _
    %p205 = scmp.lt.s32.totalorder %s16, 2
    // Predicated region
    $region29: #{gain_forward.5} parent=5 // pred_check
      %p206 = pneg %p205
    $region30: #{gain_forward.5} parent=5 // pred_check_branch
      %208 = sbr.rel (%p206) target = $region32
    $region31: #{gain_forward.5} parent=5 // pred_region
      // Predicated region
      $region33: #{gain_forward.5} parent=31 // pred_check
        %p209 = pneg %p36
      $region34: #{gain_forward.5} parent=31 // pred_check_branch
        %211 = sbr.rel (%p209) target = $region36
      $region35: #{gain_forward.5} parent=31 // pred_region
        %p212 = scmp.lt.s32.totalorder %s16, 1
        %s213 = scalar_select %p212, %s16, 1
        %s214 = smul.addr %s213, 2
        %s215 = scalar_lea.vmem %s0, %s214
      $region36: #{gain_forward.5} parent=31 // pred_fallthru
        _
      // Predicated region
      $region37: #{gain_forward.5} parent=31 // pred_check
        %p216 = pneg %p104
      $region38: #{gain_forward.5} parent=31 // pred_check_branch
        %218 = sbr.rel (%p216) target = $region40
      $region39: #{gain_forward.5} parent=31 // pred_region
        %p219 = scmp.lt.s32.totalorder %s16, 1
        %s220 = scalar_select %p219, %s16, 1
        %s221 = smul.addr %s220, 32
        %s222 = smul.addr %s221, 4
        %s223 = scalar_lea.vmem %s3, %s222
      $region40: #{gain_forward.5} parent=31 // pred_fallthru
        _
    $region32: #{gain_forward.5} parent=5 // pred_fallthru
      _
    %p224 = scmp.le.s32.totalorder 1, %s16
    %p225 = scmp.lt.s32.totalorder %s16, 3
    %p226 = pnand %p224, %p225
    %p227 = pneg %p226
    // Predicated region
    $region41: #{gain_forward.5} parent=5 // pred_check
      _
    $region42: #{gain_forward.5} parent=5 // pred_check_branch
      %229 = sbr.rel (%p226) target = $region44
    $region43: #{gain_forward.5} parent=5 // pred_region
      %s230 = ssub.s32 %s16, 1
      %p231 = scmp.lt.s32.totalorder %s21, 1
      %s232 = scalar_select %p231, %s21, 1
      %s233 = smul.addr %s232, 2
      %s234 = scalar_lea.vmem %s0, %s233
      %p235 = pneg %p42
      %p236 = pneg %p39
      %p237 = pneg %p63
      %p238 = pneg %p60
      %p239 = pneg %p84
      %p240 = pneg %p81
      %p241 = scmp.lt.s32.totalorder %s21, 1
      %s242 = scalar_select %p241, %s21, 1
      %s243 = smul.addr %s242, 32
      %s244 = smul.addr %s243, 4
      %s245 = scalar_lea.vmem %s3, %s244
      %p246 = pneg %p110
      %p247 = pneg %p107
      %p248 = pneg %p131
      %p249 = pneg %p128
      %p250 = pneg %p152
      %p251 = pneg %p149
      %p252 = pneg %p178
      %p253 = pneg %p175
      %p254 = scmp.lt.s32.totalorder %s21, 1
      %s255 = scalar_select %p254, %s21, 1
      %s256 = smul.addr %s255, 8
      %s257 = smul.addr %s256, 8
      %s258 = scalar_lea.vmem %s6, %s257
      %p259 = scmp.lt.s32.totalorder %s21, 1
      %s260 = scalar_select %p259, %s21, 1
      %s261 = smul.addr %s260, 2
      %s262 = scalar_lea.vmem %s0, %s261
      %p263 = scmp.lt.s32.totalorder %s21, 1
      %s264 = scalar_select %p263, %s21, 1
      %s265 = smul.addr %s264, 32
      %s266 = smul.addr %s265, 4
      %s267 = scalar_lea.vmem %s3, %s266
      %p268 = scmp.lt.s32.totalorder %s21, 1
      %s269 = scalar_select %p268, %s21, 1
      %s270 = smul.addr %s269, 8
      %s271 = smul.addr %s270, 8
      %s272 = scalar_lea.vmem %s6, %s271
      %v274 = vld [vmem:[%s262] sm:$0x3]
      %v276 = vlaneseq
      %v277 = vshrl.u32 %v276, 7
      %v278 = vsub.s32 0, %v277
      %v279 = vrot.slane %v274, %v278
      %v280 = vlaneseq
      %v281 = vshrl.u32 %v280, 7
      %v282 = vsub.s32 1, %v281
      %v283 = vrot.slane %v274, %v282
      %286 = vxpose.xlu0.b32.start [1/16] %v279, 128
      %287 = vxpose.xlu0.b32.cont [2/16] 0.0, 128
      %288 = vxpose.xlu0.b32.cont [3/16] 0.0, 128
      %289 = vxpose.xlu0.b32.cont [4/16] 0.0, 128
      %290 = vxpose.xlu0.b32.cont [5/16] 0.0, 128
      %291 = vxpose.xlu0.b32.cont [6/16] 0.0, 128
      %292 = vxpose.xlu0.b32.cont [7/16] 0.0, 128
      %293 = vxpose.xlu0.b32.cont [8/16] 0.0, 128
      %294 = vxpose.xlu0.b32.cont [9/16] 0.0, 128
      %295 = vxpose.xlu0.b32.cont [10/16] 0.0, 128
      %296 = vxpose.xlu0.b32.cont [11/16] 0.0, 128
      %297 = vxpose.xlu0.b32.cont [12/16] 0.0, 128
      %298 = vxpose.xlu0.b32.cont [13/16] 0.0, 128
      %299 = vxpose.xlu0.b32.cont [14/16] 0.0, 128
      %300 = vxpose.xlu0.b32.cont [15/16] 0.0, 128
      %301 = vxpose.xlu0.b32.end [16/16] 0.0, 128
      %v302 = vpop.trf.xlu0
      %v303 = vpop.trf.xlu0
      %v304 = vpop.trf.xlu0
      %v305 = vpop.trf.xlu0
      %v306 = vpop.trf.xlu0
      %v307 = vpop.trf.xlu0
      %v308 = vpop.trf.xlu0
      %v309 = vpop.trf.xlu0
      %v310 = vpop.trf.xlu0
      %v311 = vpop.trf.xlu0
      %v312 = vpop.trf.xlu0
      %v313 = vpop.trf.xlu0
      %v314 = vpop.trf.xlu0
      %v315 = vpop.trf.xlu0
      %v316 = vpop.trf.xlu0
      %v317 = vpop.trf.xlu0
      %318 = vxpose.xlu0.b32.start [1/16] %v283, 128
      %319 = vxpose.xlu0.b32.cont [2/16] 0.0, 128
      %320 = vxpose.xlu0.b32.cont [3/16] 0.0, 128
      %321 = vxpose.xlu0.b32.cont [4/16] 0.0, 128
      %322 = vxpose.xlu0.b32.cont [5/16] 0.0, 128
      %323 = vxpose.xlu0.b32.cont [6/16] 0.0, 128
      %324 = vxpose.xlu0.b32.cont [7/16] 0.0, 128
      %325 = vxpose.xlu0.b32.cont [8/16] 0.0, 128
      %326 = vxpose.xlu0.b32.cont [9/16] 0.0, 128
      %327 = vxpose.xlu0.b32.cont [10/16] 0.0, 128
      %328 = vxpose.xlu0.b32.cont [11/16] 0.0, 128
      %329 = vxpose.xlu0.b32.cont [12/16] 0.0, 128
      %330 = vxpose.xlu0.b32.cont [13/16] 0.0, 128
      %331 = vxpose.xlu0.b32.cont [14/16] 0.0, 128
      %332 = vxpose.xlu0.b32.cont [15/16] 0.0, 128
      %333 = vxpose.xlu0.b32.end [16/16] 0.0, 128
      %v334 = vpop.trf.xlu0
      %v335 = vpop.trf.xlu0
      %v336 = vpop.trf.xlu0
      %v337 = vpop.trf.xlu0
      %v338 = vpop.trf.xlu0
      %v339 = vpop.trf.xlu0
      %v340 = vpop.trf.xlu0
      %v341 = vpop.trf.xlu0
      %v342 = vpop.trf.xlu0
      %v343 = vpop.trf.xlu0
      %v344 = vpop.trf.xlu0
      %v345 = vpop.trf.xlu0
      %v346 = vpop.trf.xlu0
      %v347 = vpop.trf.xlu0
      %v348 = vpop.trf.xlu0
      %v349 = vpop.trf.xlu0
      %v350 = vld [vmem:[#allocation4] sm:$0x1]
      %v351 = vld [vmem:[#allocation3] sm:$0x1]
      %v352 = vsub.f32 %v350, %v351
      %v353 = vadd.f32 %v352, 1e-08
      %v355 = vlaneseq
      %v356 = vshrl.u32 %v355, 7
      %v357 = vsub.s32 0, %v356
      %v358 = vrot.slane %v351, %v357
      %v360 = vsub.f32 %v302, %v358
      %v361 = vsub.f32 %v303, %v358
      %v362 = vsub.f32 %v304, %v358
      %v363 = vsub.f32 %v305, %v358
      %v364 = vsub.f32 %v306, %v358
      %v365 = vsub.f32 %v307, %v358
      %v366 = vsub.f32 %v308, %v358
      %v367 = vsub.f32 %v309, %v358
      %v368 = vsub.f32 %v310, %v358
      %v369 = vsub.f32 %v311, %v358
      %v370 = vsub.f32 %v312, %v358
      %v371 = vsub.f32 %v313, %v358
      %v372 = vsub.f32 %v314, %v358
      %v373 = vsub.f32 %v315, %v358
      %v374 = vsub.f32 %v316, %v358
      %v375 = vsub.f32 %v317, %v358
      %v376 = vsub.f32 %v334, %v358
      %v377 = vsub.f32 %v335, %v358
      %v378 = vsub.f32 %v336, %v358
      %v379 = vsub.f32 %v337, %v358
      %v380 = vsub.f32 %v338, %v358
      %v381 = vsub.f32 %v339, %v358
      %v382 = vsub.f32 %v340, %v358
      %v383 = vsub.f32 %v341, %v358
      %v384 = vsub.f32 %v342, %v358
      %v385 = vsub.f32 %v343, %v358
      %v386 = vsub.f32 %v344, %v358
      %v387 = vsub.f32 %v345, %v358
      %v388 = vsub.f32 %v346, %v358
      %v389 = vsub.f32 %v347, %v358
      %v390 = vsub.f32 %v348, %v358
      %v391 = vsub.f32 %v349, %v358
      %v393 = vlaneseq
      %v394 = vshrl.u32 %v393, 7
      %v395 = vsub.s32 0, %v394
      %v396 = vrot.slane %v353, %v395
      %v398 = vrcp.pop %v396
      %v399 = vmul.f32 %v360, %v398
      %v400 = vmul.f32 %v361, %v398
      %v401 = vmul.f32 %v362, %v398
      %v402 = vmul.f32 %v363, %v398
      %v403 = vmul.f32 %v364, %v398
      %v404 = vmul.f32 %v365, %v398
      %v405 = vmul.f32 %v366, %v398
      %v406 = vmul.f32 %v367, %v398
      %v407 = vmul.f32 %v368, %v398
      %v408 = vmul.f32 %v369, %v398
      %v409 = vmul.f32 %v370, %v398
      %v410 = vmul.f32 %v371, %v398
      %v411 = vmul.f32 %v372, %v398
      %v412 = vmul.f32 %v373, %v398
      %v413 = vmul.f32 %v374, %v398
      %v414 = vmul.f32 %v375, %v398
      %v415 = vmul.f32 %v376, %v398
      %v416 = vmul.f32 %v377, %v398
      %v417 = vmul.f32 %v378, %v398
      %v418 = vmul.f32 %v379, %v398
      %v419 = vmul.f32 %v380, %v398
      %v420 = vmul.f32 %v381, %v398
      %v421 = vmul.f32 %v382, %v398
      %v422 = vmul.f32 %v383, %v398
      %v423 = vmul.f32 %v384, %v398
      %v424 = vmul.f32 %v385, %v398
      %v425 = vmul.f32 %v386, %v398
      %v426 = vmul.f32 %v387, %v398
      %v427 = vmul.f32 %v388, %v398
      %v428 = vmul.f32 %v389, %v398
      %v429 = vmul.f32 %v390, %v398
      %v430 = vmul.f32 %v391, %v398
      %v431 = vsub.f32 %v399, 0.25
      %v432 = vsub.f32 %v400, 0.25
      %v433 = vsub.f32 %v401, 0.25
      %v434 = vsub.f32 %v402, 0.25
      %v435 = vsub.f32 %v403, 0.25
      %v436 = vsub.f32 %v404, 0.25
      %v437 = vsub.f32 %v405, 0.25
      %v438 = vsub.f32 %v406, 0.25
      %v439 = vsub.f32 %v407, 0.25
      %v440 = vsub.f32 %v408, 0.25
      %v441 = vsub.f32 %v409, 0.25
      %v442 = vsub.f32 %v410, 0.25
      %v443 = vsub.f32 %v411, 0.25
      %v444 = vsub.f32 %v412, 0.25
      %v445 = vsub.f32 %v413, 0.25
      %v446 = vsub.f32 %v414, 0.25
      %v447 = vsub.f32 %v415, 0.25
      %v448 = vsub.f32 %v416, 0.25
      %v449 = vsub.f32 %v417, 0.25
      %v450 = vsub.f32 %v418, 0.25
      %v451 = vsub.f32 %v419, 0.25
      %v452 = vsub.f32 %v420, 0.25
      %v453 = vsub.f32 %v421, 0.25
      %v454 = vsub.f32 %v422, 0.25
      %v455 = vsub.f32 %v423, 0.25
      %v456 = vsub.f32 %v424, 0.25
      %v457 = vsub.f32 %v425, 0.25
      %v458 = vsub.f32 %v426, 0.25
      %v459 = vsub.f32 %v427, 0.25
      %v460 = vsub.f32 %v428, 0.25
      %v461 = vsub.f32 %v429, 0.25
      %v462 = vsub.f32 %v430, 0.25
      %v463 = vmul.f32 %v431, 100.0
      %v464 = vmul.f32 %v432, 100.0
      %v465 = vmul.f32 %v433, 100.0
      %v466 = vmul.f32 %v434, 100.0
      %v467 = vmul.f32 %v435, 100.0
      %v468 = vmul.f32 %v436, 100.0
      %v469 = vmul.f32 %v437, 100.0
      %v470 = vmul.f32 %v438, 100.0
      %v471 = vmul.f32 %v439, 100.0
      %v472 = vmul.f32 %v440, 100.0
      %v473 = vmul.f32 %v441, 100.0
      %v474 = vmul.f32 %v442, 100.0
      %v475 = vmul.f32 %v443, 100.0
      %v476 = vmul.f32 %v444, 100.0
      %v477 = vmul.f32 %v445, 100.0
      %v478 = vmul.f32 %v446, 100.0
      %v479 = vmul.f32 %v447, 100.0
      %v480 = vmul.f32 %v448, 100.0
      %v481 = vmul.f32 %v449, 100.0
      %v482 = vmul.f32 %v450, 100.0
      %v483 = vmul.f32 %v451, 100.0
      %v484 = vmul.f32 %v452, 100.0
      %v485 = vmul.f32 %v453, 100.0
      %v486 = vmul.f32 %v454, 100.0
      %v487 = vmul.f32 %v455, 100.0
      %v488 = vmul.f32 %v456, 100.0
      %v489 = vmul.f32 %v457, 100.0
      %v490 = vmul.f32 %v458, 100.0
      %v491 = vmul.f32 %v459, 100.0
      %v492 = vmul.f32 %v460, 100.0
      %v493 = vmul.f32 %v461, 100.0
      %v494 = vmul.f32 %v462, 100.0
      %v495 = vxor.u32 %v463, 2147483648
      %v496 = vxor.u32 %v464, 2147483648
      %v497 = vxor.u32 %v465, 2147483648
      %v498 = vxor.u32 %v466, 2147483648
      %v499 = vxor.u32 %v467, 2147483648
      %v500 = vxor.u32 %v468, 2147483648
      %v501 = vxor.u32 %v469, 2147483648
      %v502 = vxor.u32 %v470, 2147483648
      %v503 = vxor.u32 %v471, 2147483648
      %v504 = vxor.u32 %v472, 2147483648
      %v505 = vxor.u32 %v473, 2147483648
      %v506 = vxor.u32 %v474, 2147483648
      %v507 = vxor.u32 %v475, 2147483648
      %v508 = vxor.u32 %v476, 2147483648
      %v509 = vxor.u32 %v477, 2147483648
      %v510 = vxor.u32 %v478, 2147483648
      %v511 = vxor.u32 %v479, 2147483648
      %v512 = vxor.u32 %v480, 2147483648
      %v513 = vxor.u32 %v481, 2147483648
      %v514 = vxor.u32 %v482, 2147483648
      %v515 = vxor.u32 %v483, 2147483648
      %v516 = vxor.u32 %v484, 2147483648
      %v517 = vxor.u32 %v485, 2147483648
      %v518 = vxor.u32 %v486, 2147483648
      %v519 = vxor.u32 %v487, 2147483648
      %v520 = vxor.u32 %v488, 2147483648
      %v521 = vxor.u32 %v489, 2147483648
      %v522 = vxor.u32 %v490, 2147483648
      %v523 = vxor.u32 %v491, 2147483648
      %v524 = vxor.u32 %v492, 2147483648
      %v525 = vxor.u32 %v493, 2147483648
      %v526 = vxor.u32 %v494, 2147483648
      %v527 = vmul.f32 %v495, 1.442695
      %v528 = vpow.pop %v527
      %v529 = vmul.f32 %v496, 1.442695
      %v530 = vpow.pop %v529
      %v531 = vmul.f32 %v497, 1.442695
      %v532 = vpow.pop %v531
      %v533 = vmul.f32 %v498, 1.442695
      %v534 = vpow.pop %v533
      %v535 = vmul.f32 %v499, 1.442695
      %v536 = vpow.pop %v535
      %v537 = vmul.f32 %v500, 1.442695
      %v538 = vpow.pop %v537
      %v539 = vmul.f32 %v501, 1.442695
      %v540 = vpow.pop %v539
      %v541 = vmul.f32 %v502, 1.442695
      %v542 = vpow.pop %v541
      %v543 = vmul.f32 %v503, 1.442695
      %v544 = vpow.pop %v543
      %v545 = vmul.f32 %v504, 1.442695
      %v546 = vpow.pop %v545
      %v547 = vmul.f32 %v505, 1.442695
      %v548 = vpow.pop %v547
      %v549 = vmul.f32 %v506, 1.442695
      %v550 = vpow.pop %v549
      %v551 = vmul.f32 %v507, 1.442695
      %v552 = vpow.pop %v551
      %v553 = vmul.f32 %v508, 1.442695
      %v554 = vpow.pop %v553
      %v555 = vmul.f32 %v509, 1.442695
      %v556 = vpow.pop %v555
      %v557 = vmul.f32 %v510, 1.442695
      %v558 = vpow.pop %v557
      %v559 = vmul.f32 %v511, 1.442695
      %v560 = vpow.pop %v559
      %v561 = vmul.f32 %v512, 1.442695
      %v562 = vpow.pop %v561
      %v563 = vmul.f32 %v513, 1.442695
      %v564 = vpow.pop %v563
      %v565 = vmul.f32 %v514, 1.442695
      %v566 = vpow.pop %v565
      %v567 = vmul.f32 %v515, 1.442695
      %v568 = vpow.pop %v567
      %v569 = vmul.f32 %v516, 1.442695
      %v570 = vpow.pop %v569
      %v571 = vmul.f32 %v517, 1.442695
      %v572 = vpow.pop %v571
      %v573 = vmul.f32 %v518, 1.442695
      %v574 = vpow.pop %v573
      %v575 = vmul.f32 %v519, 1.442695
      %v576 = vpow.pop %v575
      %v577 = vmul.f32 %v520, 1.442695
      %v578 = vpow.pop %v577
      %v579 = vmul.f32 %v521, 1.442695
      %v580 = vpow.pop %v579
      %v581 = vmul.f32 %v522, 1.442695
      %v582 = vpow.pop %v581
      %v583 = vmul.f32 %v523, 1.442695
      %v584 = vpow.pop %v583
      %v585 = vmul.f32 %v524, 1.442695
      %v586 = vpow.pop %v585
      %v587 = vmul.f32 %v525, 1.442695
      %v588 = vpow.pop %v587
      %v589 = vmul.f32 %v526, 1.442695
      %v590 = vpow.pop %v589
      %v591 = vadd.f32 %v528, 1.0
      %v592 = vadd.f32 %v530, 1.0
      %v593 = vadd.f32 %v532, 1.0
      %v594 = vadd.f32 %v534, 1.0
      %v595 = vadd.f32 %v536, 1.0
      %v596 = vadd.f32 %v538, 1.0
      %v597 = vadd.f32 %v540, 1.0
      %v598 = vadd.f32 %v542, 1.0
      %v599 = vadd.f32 %v544, 1.0
      %v600 = vadd.f32 %v546, 1.0
      %v601 = vadd.f32 %v548, 1.0
      %v602 = vadd.f32 %v550, 1.0
      %v603 = vadd.f32 %v552, 1.0
      %v604 = vadd.f32 %v554, 1.0
      %v605 = vadd.f32 %v556, 1.0
      %v606 = vadd.f32 %v558, 1.0
      %v607 = vadd.f32 %v560, 1.0
      %v608 = vadd.f32 %v562, 1.0
      %v609 = vadd.f32 %v564, 1.0
      %v610 = vadd.f32 %v566, 1.0
      %v611 = vadd.f32 %v568, 1.0
      %v612 = vadd.f32 %v570, 1.0
      %v613 = vadd.f32 %v572, 1.0
      %v614 = vadd.f32 %v574, 1.0
      %v615 = vadd.f32 %v576, 1.0
      %v616 = vadd.f32 %v578, 1.0
      %v617 = vadd.f32 %v580, 1.0
      %v618 = vadd.f32 %v582, 1.0
      %v619 = vadd.f32 %v584, 1.0
      %v620 = vadd.f32 %v586, 1.0
      %v621 = vadd.f32 %v588, 1.0
      %v622 = vadd.f32 %v590, 1.0
      %v623 = vrcp.pop %v591
      %v624 = vmul.f32 1.0, %v623
      %v625 = vrcp.pop %v592
      %v626 = vmul.f32 1.0, %v625
      %v627 = vrcp.pop %v593
      %v628 = vmul.f32 1.0, %v627
      %v629 = vrcp.pop %v594
      %v630 = vmul.f32 1.0, %v629
      %v631 = vrcp.pop %v595
      %v632 = vmul.f32 1.0, %v631
      %v633 = vrcp.pop %v596
      %v634 = vmul.f32 1.0, %v633
      %v635 = vrcp.pop %v597
      %v636 = vmul.f32 1.0, %v635
      %v637 = vrcp.pop %v598
      %v638 = vmul.f32 1.0, %v637
      %v639 = vrcp.pop %v599
      %v640 = vmul.f32 1.0, %v639
      %v641 = vrcp.pop %v600
      %v642 = vmul.f32 1.0, %v641
      %v643 = vrcp.pop %v601
      %v644 = vmul.f32 1.0, %v643
      %v645 = vrcp.pop %v602
      %v646 = vmul.f32 1.0, %v645
      %v647 = vrcp.pop %v603
      %v648 = vmul.f32 1.0, %v647
      %v649 = vrcp.pop %v604
      %v650 = vmul.f32 1.0, %v649
      %v651 = vrcp.pop %v605
      %v652 = vmul.f32 1.0, %v651
      %v653 = vrcp.pop %v606
      %v654 = vmul.f32 1.0, %v653
      %v655 = vrcp.pop %v607
      %v656 = vmul.f32 1.0, %v655
      %v657 = vrcp.pop %v608
      %v658 = vmul.f32 1.0, %v657
      %v659 = vrcp.pop %v609
      %v660 = vmul.f32 1.0, %v659
      %v661 = vrcp.pop %v610
      %v662 = vmul.f32 1.0, %v661
      %v663 = vrcp.pop %v611
      %v664 = vmul.f32 1.0, %v663
      %v665 = vrcp.pop %v612
      %v666 = vmul.f32 1.0, %v665
      %v667 = vrcp.pop %v613
      %v668 = vmul.f32 1.0, %v667
      %v669 = vrcp.pop %v614
      %v670 = vmul.f32 1.0, %v669
      %v671 = vrcp.pop %v615
      %v672 = vmul.f32 1.0, %v671
      %v673 = vrcp.pop %v616
      %v674 = vmul.f32 1.0, %v673
      %v675 = vrcp.pop %v617
      %v676 = vmul.f32 1.0, %v675
      %v677 = vrcp.pop %v618
      %v678 = vmul.f32 1.0, %v677
      %v679 = vrcp.pop %v619
      %v680 = vmul.f32 1.0, %v679
      %v681 = vrcp.pop %v620
      %v682 = vmul.f32 1.0, %v681
      %v683 = vrcp.pop %v621
      %v684 = vmul.f32 1.0, %v683
      %v685 = vrcp.pop %v622
      %v686 = vmul.f32 1.0, %v685
      %v687 = vsub.f32 1.0, %v624
      %v688 = vsub.f32 1.0, %v626
      %v689 = vsub.f32 1.0, %v628
      %v690 = vsub.f32 1.0, %v630
      %v691 = vsub.f32 1.0, %v632
      %v692 = vsub.f32 1.0, %v634
      %v693 = vsub.f32 1.0, %v636
      %v694 = vsub.f32 1.0, %v638
      %v695 = vsub.f32 1.0, %v640
      %v696 = vsub.f32 1.0, %v642
      %v697 = vsub.f32 1.0, %v644
      %v698 = vsub.f32 1.0, %v646
      %v699 = vsub.f32 1.0, %v648
      %v700 = vsub.f32 1.0, %v650
      %v701 = vsub.f32 1.0, %v652
      %v702 = vsub.f32 1.0, %v654
      %v703 = vsub.f32 1.0, %v656
      %v704 = vsub.f32 1.0, %v658
      %v705 = vsub.f32 1.0, %v660
      %v706 = vsub.f32 1.0, %v662
      %v707 = vsub.f32 1.0, %v664
      %v708 = vsub.f32 1.0, %v666
      %v709 = vsub.f32 1.0, %v668
      %v710 = vsub.f32 1.0, %v670
      %v711 = vsub.f32 1.0, %v672
      %v712 = vsub.f32 1.0, %v674
      %v713 = vsub.f32 1.0, %v676
      %v714 = vsub.f32 1.0, %v678
      %v715 = vsub.f32 1.0, %v680
      %v716 = vsub.f32 1.0, %v682
      %v717 = vsub.f32 1.0, %v684
      %v718 = vsub.f32 1.0, %v686
      %v719 = vld [vmem:[%s267] sm:$0xf]
      %v720 = vld [vmem:[%s267 + $0x4] sm:$0xf]
      %v721 = vld [vmem:[%s267 + $0x8] sm:$0xf]
      %v722 = vld [vmem:[%s267 + $0xc] sm:$0xf]
      %v723 = vld [vmem:[%s267 + $0x10] sm:$0xf]
      %v724 = vld [vmem:[%s267 + $0x14] sm:$0xf]
      %v725 = vld [vmem:[%s267 + $0x18] sm:$0xf]
      %v726 = vld [vmem:[%s267 + $0x1c] sm:$0xf]
      %v727 = vld [vmem:[%s267 + $0x20] sm:$0xf]
      %v728 = vld [vmem:[%s267 + $0x24] sm:$0xf]
      %v729 = vld [vmem:[%s267 + $0x28] sm:$0xf]
      %v730 = vld [vmem:[%s267 + $0x2c] sm:$0xf]
      %v731 = vld [vmem:[%s267 + $0x30] sm:$0xf]
      %v732 = vld [vmem:[%s267 + $0x34] sm:$0xf]
      %v733 = vld [vmem:[%s267 + $0x38] sm:$0xf]
      %v734 = vld [vmem:[%s267 + $0x3c] sm:$0xf]
      %v735 = vld [vmem:[%s267 + $0x40] sm:$0xf]
      %v736 = vld [vmem:[%s267 + $0x44] sm:$0xf]
      %v737 = vld [vmem:[%s267 + $0x48] sm:$0xf]
      %v738 = vld [vmem:[%s267 + $0x4c] sm:$0xf]
      %v739 = vld [vmem:[%s267 + $0x50] sm:$0xf]
      %v740 = vld [vmem:[%s267 + $0x54] sm:$0xf]
      %v741 = vld [vmem:[%s267 + $0x58] sm:$0xf]
      %v742 = vld [vmem:[%s267 + $0x5c] sm:$0xf]
      %v743 = vld [vmem:[%s267 + $0x60] sm:$0xf]
      %v744 = vld [vmem:[%s267 + $0x64] sm:$0xf]
      %v745 = vld [vmem:[%s267 + $0x68] sm:$0xf]
      %v746 = vld [vmem:[%s267 + $0x6c] sm:$0xf]
      %v747 = vld [vmem:[%s267 + $0x70] sm:$0xf]
      %v748 = vld [vmem:[%s267 + $0x74] sm:$0xf]
      %v749 = vld [vmem:[%s267 + $0x78] sm:$0xf]
      %v750 = vld [vmem:[%s267 + $0x7c] sm:$0xf]
      %v751 = vunpack.c.l.bf16 %v719
      %v752 = vunpack.c.l.bf16 %v720
      %v753 = vunpack.c.l.bf16 %v721
      %v754 = vunpack.c.l.bf16 %v722
      %v755 = vunpack.c.l.bf16 %v723
      %v756 = vunpack.c.l.bf16 %v724
      %v757 = vunpack.c.l.bf16 %v725
      %v758 = vunpack.c.l.bf16 %v726
      %v759 = vunpack.c.l.bf16 %v727
      %v760 = vunpack.c.l.bf16 %v728
      %v761 = vunpack.c.l.bf16 %v729
      %v762 = vunpack.c.l.bf16 %v730
      %v763 = vunpack.c.l.bf16 %v731
      %v764 = vunpack.c.l.bf16 %v732
      %v765 = vunpack.c.l.bf16 %v733
      %v766 = vunpack.c.l.bf16 %v734
      %v767 = vunpack.c.l.bf16 %v735
      %v768 = vunpack.c.l.bf16 %v736
      %v769 = vunpack.c.l.bf16 %v737
      %v770 = vunpack.c.l.bf16 %v738
      %v771 = vunpack.c.l.bf16 %v739
      %v772 = vunpack.c.l.bf16 %v740
      %v773 = vunpack.c.l.bf16 %v741
      %v774 = vunpack.c.l.bf16 %v742
      %v775 = vunpack.c.l.bf16 %v743
      %v776 = vunpack.c.l.bf16 %v744
      %v777 = vunpack.c.l.bf16 %v745
      %v778 = vunpack.c.l.bf16 %v746
      %v779 = vunpack.c.l.bf16 %v747
      %v780 = vunpack.c.l.bf16 %v748
      %v781 = vunpack.c.l.bf16 %v749
      %v782 = vunpack.c.l.bf16 %v750
      %784 = vset.pattern.permute.xlu0 0
      %785 = vperm.xlu0 %784, %v687
      %v786 = vpop.permute.xlu0 %785
      %789 = vset.pattern.permute.xlu0 0
      %790 = vperm.xlu0 %789, %v688
      %v791 = vpop.permute.xlu0 %790
      %794 = vset.pattern.permute.xlu0 0
      %795 = vperm.xlu0 %794, %v689
      %v796 = vpop.permute.xlu0 %795
      %799 = vset.pattern.permute.xlu0 0
      %800 = vperm.xlu0 %799, %v690
      %v801 = vpop.permute.xlu0 %800
      %804 = vset.pattern.permute.xlu0 0
      %805 = vperm.xlu0 %804, %v691
      %v806 = vpop.permute.xlu0 %805
      %809 = vset.pattern.permute.xlu0 0
      %810 = vperm.xlu0 %809, %v692
      %v811 = vpop.permute.xlu0 %810
      %814 = vset.pattern.permute.xlu0 0
      %815 = vperm.xlu0 %814, %v693
      %v816 = vpop.permute.xlu0 %815
      %819 = vset.pattern.permute.xlu0 0
      %820 = vperm.xlu0 %819, %v694
      %v821 = vpop.permute.xlu0 %820
      %824 = vset.pattern.permute.xlu0 0
      %825 = vperm.xlu0 %824, %v695
      %v826 = vpop.permute.xlu0 %825
      %829 = vset.pattern.permute.xlu0 0
      %830 = vperm.xlu0 %829, %v696
      %v831 = vpop.permute.xlu0 %830
      %834 = vset.pattern.permute.xlu0 0
      %835 = vperm.xlu0 %834, %v697
      %v836 = vpop.permute.xlu0 %835
      %839 = vset.pattern.permute.xlu0 0
      %840 = vperm.xlu0 %839, %v698
      %v841 = vpop.permute.xlu0 %840
      %844 = vset.pattern.permute.xlu0 0
      %845 = vperm.xlu0 %844, %v699
      %v846 = vpop.permute.xlu0 %845
      %849 = vset.pattern.permute.xlu0 0
      %850 = vperm.xlu0 %849, %v700
      %v851 = vpop.permute.xlu0 %850
      %854 = vset.pattern.permute.xlu0 0
      %855 = vperm.xlu0 %854, %v701
      %v856 = vpop.permute.xlu0 %855
      %859 = vset.pattern.permute.xlu0 0
      %860 = vperm.xlu0 %859, %v702
      %v861 = vpop.permute.xlu0 %860
      %864 = vset.pattern.permute.xlu0 0
      %865 = vperm.xlu0 %864, %v703
      %v866 = vpop.permute.xlu0 %865
      %869 = vset.pattern.permute.xlu0 0
      %870 = vperm.xlu0 %869, %v704
      %v871 = vpop.permute.xlu0 %870
      %874 = vset.pattern.permute.xlu0 0
      %875 = vperm.xlu0 %874, %v705
      %v876 = vpop.permute.xlu0 %875
      %879 = vset.pattern.permute.xlu0 0
      %880 = vperm.xlu0 %879, %v706
      %v881 = vpop.permute.xlu0 %880
      %884 = vset.pattern.permute.xlu0 0
      %885 = vperm.xlu0 %884, %v707
      %v886 = vpop.permute.xlu0 %885
      %889 = vset.pattern.permute.xlu0 0
      %890 = vperm.xlu0 %889, %v708
      %v891 = vpop.permute.xlu0 %890
      %894 = vset.pattern.permute.xlu0 0
      %895 = vperm.xlu0 %894, %v709
      %v896 = vpop.permute.xlu0 %895
      %899 = vset.pattern.permute.xlu0 0
      %900 = vperm.xlu0 %899, %v710
      %v901 = vpop.permute.xlu0 %900
      %904 = vset.pattern.permute.xlu0 0
      %905 = vperm.xlu0 %904, %v711
      %v906 = vpop.permute.xlu0 %905
      %909 = vset.pattern.permute.xlu0 0
      %910 = vperm.xlu0 %909, %v712
      %v911 = vpop.permute.xlu0 %910
      %914 = vset.pattern.permute.xlu0 0
      %915 = vperm.xlu0 %914, %v713
      %v916 = vpop.permute.xlu0 %915
      %919 = vset.pattern.permute.xlu0 0
      %920 = vperm.xlu0 %919, %v714
      %v921 = vpop.permute.xlu0 %920
      %924 = vset.pattern.permute.xlu0 0
      %925 = vperm.xlu0 %924, %v715
      %v926 = vpop.permute.xlu0 %925
      %929 = vset.pattern.permute.xlu0 0
      %930 = vperm.xlu0 %929, %v716
      %v931 = vpop.permute.xlu0 %930
      %934 = vset.pattern.permute.xlu0 0
      %935 = vperm.xlu0 %934, %v717
      %v936 = vpop.permute.xlu0 %935
      %939 = vset.pattern.permute.xlu0 0
      %940 = vperm.xlu0 %939, %v718
      %v941 = vpop.permute.xlu0 %940
      %v943 = vmul.f32 %v751, %v786
      %v944 = vmul.f32 %v752, %v791
      %v945 = vmul.f32 %v753, %v796
      %v946 = vmul.f32 %v754, %v801
      %v947 = vmul.f32 %v755, %v806
      %v948 = vmul.f32 %v756, %v811
      %v949 = vmul.f32 %v757, %v816
      %v950 = vmul.f32 %v758, %v821
      %v951 = vmul.f32 %v759, %v826
      %v952 = vmul.f32 %v760, %v831
      %v953 = vmul.f32 %v761, %v836
      %v954 = vmul.f32 %v762, %v841
      %v955 = vmul.f32 %v763, %v846
      %v956 = vmul.f32 %v764, %v851
      %v957 = vmul.f32 %v765, %v856
      %v958 = vmul.f32 %v766, %v861
      %v959 = vmul.f32 %v767, %v866
      %v960 = vmul.f32 %v768, %v871
      %v961 = vmul.f32 %v769, %v876
      %v962 = vmul.f32 %v770, %v881
      %v963 = vmul.f32 %v771, %v886
      %v964 = vmul.f32 %v772, %v891
      %v965 = vmul.f32 %v773, %v896
      %v966 = vmul.f32 %v774, %v901
      %v967 = vmul.f32 %v775, %v906
      %v968 = vmul.f32 %v776, %v911
      %v969 = vmul.f32 %v777, %v916
      %v970 = vmul.f32 %v778, %v921
      %v971 = vmul.f32 %v779, %v926
      %v972 = vmul.f32 %v780, %v931
      %v973 = vmul.f32 %v781, %v936
      %v974 = vmul.f32 %v782, %v941
      %vm975 = vcmask 31744
      %976 = vst.msk [vmem:[#allocation2] sm:$0xff] %vm975, 0.0
      %977 = vst.msk [vmem:[#allocation2 + $0x8] sm:$0xff] %vm975, 0.0
      %vm978 = vcmask 25600
      %979 = vst.msk [vmem:[#allocation2 + $0x10] sm:$0x3] %vm978, 0.0
      %980 = vst.msk [vmem:[#allocation2 + $0x18] sm:$0xff] %vm975, 0.0
      %981 = vst.msk [vmem:[#allocation2 + $0x20] sm:$0xff] %vm975, 0.0
      %982 = vst.msk [vmem:[#allocation2 + $0x28] sm:$0x3] %vm978, 0.0
      %983 = vst.msk [vmem:[#allocation2 + $0x30] sm:$0xff] %vm975, 0.0
      %984 = vst.msk [vmem:[#allocation2 + $0x38] sm:$0xff] %vm975, 0.0
      %985 = vst.msk [vmem:[#allocation2 + $0x40] sm:$0x3] %vm978, 0.0
      %986 = vst.msk [vmem:[#allocation2 + $0x48] sm:$0xff] %vm975, 0.0
      %987 = vst.msk [vmem:[#allocation2 + $0x50] sm:$0xff] %vm975, 0.0
      %988 = vst.msk [vmem:[#allocation2 + $0x58] sm:$0x3] %vm978, 0.0
      %989 = vst.msk [vmem:[#allocation2 + $0x60] sm:$0xff] %vm975, 0.0
      %990 = vst.msk [vmem:[#allocation2 + $0x68] sm:$0xff] %vm975, 0.0
      %991 = vst.msk [vmem:[#allocation2 + $0x70] sm:$0x3] %vm978, 0.0
      %992 = vst.msk [vmem:[#allocation2 + $0x78] sm:$0xff] %vm975, 0.0
      %993 = vst.msk [vmem:[#allocation2 + $0x80] sm:$0xff] %vm975, 0.0
      %994 = vst.msk [vmem:[#allocation2 + $0x88] sm:$0x3] %vm978, 0.0
      %995 = vst.msk [vmem:[#allocation2 + $0x90] sm:$0xff] %vm975, 0.0
      %996 = vst.msk [vmem:[#allocation2 + $0x98] sm:$0xff] %vm975, 0.0
      %997 = vst.msk [vmem:[#allocation2 + $0xa0] sm:$0x3] %vm978, 0.0
      %998 = vst.msk [vmem:[#allocation2 + $0xa8] sm:$0xff] %vm975, 0.0
      %999 = vst.msk [vmem:[#allocation2 + $0xb0] sm:$0xff] %vm975, 0.0
      %1000 = vst.msk [vmem:[#allocation2 + $0xb8] sm:$0x3] %vm978, 0.0
      %1001 = vst.msk [vmem:[#allocation2 + $0xc0] sm:$0xff] %vm975, 0.0
      %1002 = vst.msk [vmem:[#allocation2 + $0xc8] sm:$0xff] %vm975, 0.0
      %1003 = vst.msk [vmem:[#allocation2 + $0xd0] sm:$0x3] %vm978, 0.0
      %1004 = vst.msk [vmem:[#allocation2 + $0xd8] sm:$0xff] %vm975, 0.0
      %1005 = vst.msk [vmem:[#allocation2 + $0xe0] sm:$0xff] %vm975, 0.0
      %1006 = vst.msk [vmem:[#allocation2 + $0xe8] sm:$0x3] %vm978, 0.0
      %1007 = vst.msk [vmem:[#allocation2 + $0xf0] sm:$0xff] %vm975, 0.0
      %1008 = vst.msk [vmem:[#allocation2 + $0xf8] sm:$0xff] %vm975, 0.0
      %1009 = vst.msk [vmem:[#allocation2 + $0x100] sm:$0x3] %vm978, 0.0
      %1010 = vst.msk [vmem:[#allocation2 + $0x108] sm:$0xff] %vm975, 0.0
      %1011 = vst.msk [vmem:[#allocation2 + $0x110] sm:$0xff] %vm975, 0.0
      %1012 = vst.msk [vmem:[#allocation2 + $0x118] sm:$0x3] %vm978, 0.0
      %1013 = vst.msk [vmem:[#allocation2 + $0x120] sm:$0xff] %vm975, 0.0
      %1014 = vst.msk [vmem:[#allocation2 + $0x128] sm:$0xff] %vm975, 0.0
      %1015 = vst.msk [vmem:[#allocation2 + $0x130] sm:$0x3] %vm978, 0.0
      %1016 = vst.msk [vmem:[#allocation2 + $0x138] sm:$0xff] %vm975, 0.0
      %1017 = vst.msk [vmem:[#allocation2 + $0x140] sm:$0xff] %vm975, 0.0
      %1018 = vst.msk [vmem:[#allocation2 + $0x148] sm:$0x3] %vm978, 0.0
      %1019 = vst.msk [vmem:[#allocation2 + $0x150] sm:$0xff] %vm975, 0.0
      %1020 = vst.msk [vmem:[#allocation2 + $0x158] sm:$0xff] %vm975, 0.0
      %1021 = vst.msk [vmem:[#allocation2 + $0x160] sm:$0x3] %vm978, 0.0
      %1022 = vst.msk [vmem:[#allocation2 + $0x168] sm:$0xff] %vm975, 0.0
      %1023 = vst.msk [vmem:[#allocation2 + $0x170] sm:$0xff] %vm975, 0.0
      %1024 = vst.msk [vmem:[#allocation2 + $0x178] sm:$0x3] %vm978, 0.0
      %1025 = vst.msk [vmem:[#allocation2 + $0x180] sm:$0xff] %vm975, 0.0
      %1026 = vst.msk [vmem:[#allocation2 + $0x188] sm:$0xff] %vm975, 0.0
      %1027 = vst.msk [vmem:[#allocation2 + $0x190] sm:$0x3] %vm978, 0.0
      %1028 = vst.msk [vmem:[#allocation2 + $0x198] sm:$0xff] %vm975, 0.0
      %1029 = vst.msk [vmem:[#allocation2 + $0x1a0] sm:$0xff] %vm975, 0.0
      %1030 = vst.msk [vmem:[#allocation2 + $0x1a8] sm:$0x3] %vm978, 0.0
      %s1031 = scalar_lea.vmem [#allocation2], 24
      %1032 = vst.msk [vmem:[%s1031 + $0x1] sm:$0xff] %vm975, %v943
      %1033 = vst.msk [vmem:[%s1031 + $0x9] sm:$0xff] %vm975, %v944
      %1034 = vst.msk [vmem:[%s1031 + $0x19] sm:$0xff] %vm975, %v945
      %1035 = vst.msk [vmem:[%s1031 + $0x21] sm:$0xff] %vm975, %v946
      %1036 = vst.msk [vmem:[%s1031 + $0x31] sm:$0xff] %vm975, %v947
      %1037 = vst.msk [vmem:[%s1031 + $0x39] sm:$0xff] %vm975, %v948
      %1038 = vst.msk [vmem:[%s1031 + $0x49] sm:$0xff] %vm975, %v949
      %1039 = vst.msk [vmem:[%s1031 + $0x51] sm:$0xff] %vm975, %v950
      %1040 = vst.msk [vmem:[%s1031 + $0x61] sm:$0xff] %vm975, %v951
      %1041 = vst.msk [vmem:[%s1031 + $0x69] sm:$0xff] %vm975, %v952
      %1042 = vst.msk [vmem:[%s1031 + $0x79] sm:$0xff] %vm975, %v953
      %1043 = vst.msk [vmem:[%s1031 + $0x81] sm:$0xff] %vm975, %v954
      %1044 = vst.msk [vmem:[%s1031 + $0x91] sm:$0xff] %vm975, %v955
      %1045 = vst.msk [vmem:[%s1031 + $0x99] sm:$0xff] %vm975, %v956
      %1046 = vst.msk [vmem:[%s1031 + $0xa9] sm:$0xff] %vm975, %v957
      %1047 = vst.msk [vmem:[%s1031 + $0xb1] sm:$0xff] %vm975, %v958
      %1048 = vst.msk [vmem:[%s1031 + $0xc1] sm:$0xff] %vm975, %v959
      %1049 = vst.msk [vmem:[%s1031 + $0xc9] sm:$0xff] %vm975, %v960
      %1050 = vst.msk [vmem:[%s1031 + $0xd9] sm:$0xff] %vm975, %v961
      %1051 = vst.msk [vmem:[%s1031 + $0xe1] sm:$0xff] %vm975, %v962
      %1052 = vst.msk [vmem:[%s1031 + $0xf1] sm:$0xff] %vm975, %v963
      %1053 = vst.msk [vmem:[%s1031 + $0xf9] sm:$0xff] %vm975, %v964
      %1054 = vst.msk [vmem:[%s1031 + $0x109] sm:$0xff] %vm975, %v965
      %1055 = vst.msk [vmem:[%s1031 + $0x111] sm:$0xff] %vm975, %v966
      %1056 = vst.msk [vmem:[%s1031 + $0x121] sm:$0xff] %vm975, %v967
      %1057 = vst.msk [vmem:[%s1031 + $0x129] sm:$0xff] %vm975, %v968
      %1058 = vst.msk [vmem:[%s1031 + $0x139] sm:$0xff] %vm975, %v969
      %1059 = vst.msk [vmem:[%s1031 + $0x141] sm:$0xff] %vm975, %v970
      %1060 = vst.msk [vmem:[%s1031 + $0x151] sm:$0xff] %vm975, %v971
      %1061 = vst.msk [vmem:[%s1031 + $0x159] sm:$0xff] %vm975, %v972
      %1062 = vst.msk [vmem:[%s1031 + $0x169] sm:$0xff] %vm975, %v973
      %1063 = vst.msk [vmem:[%s1031 + $0x171] sm:$0xff] %vm975, %v974
      %v1064 = vld [vmem:[#allocation2] sm:$0xff]
      %v1065 = vld [vmem:[#allocation2 + $0x8] sm:$0xff]
      %v1066 = vld [vmem:[#allocation2 + $0x10] sm:$0x3]
      %v1067 = vld [vmem:[#allocation2 + $0x18] sm:$0xff]
      %v1068 = vld [vmem:[#allocation2 + $0x20] sm:$0xff]
      %v1069 = vld [vmem:[#allocation2 + $0x28] sm:$0x3]
      %v1070 = vld [vmem:[#allocation2 + $0x30] sm:$0xff]
      %v1071 = vld [vmem:[#allocation2 + $0x38] sm:$0xff]
      %v1072 = vld [vmem:[#allocation2 + $0x40] sm:$0x3]
      %v1073 = vld [vmem:[#allocation2 + $0x48] sm:$0xff]
      %v1074 = vld [vmem:[#allocation2 + $0x50] sm:$0xff]
      %v1075 = vld [vmem:[#allocation2 + $0x58] sm:$0x3]
      %v1076 = vld [vmem:[#allocation2 + $0x60] sm:$0xff]
      %v1077 = vld [vmem:[#allocation2 + $0x68] sm:$0xff]
      %v1078 = vld [vmem:[#allocation2 + $0x70] sm:$0x3]
      %v1079 = vld [vmem:[#allocation2 + $0x78] sm:$0xff]
      %v1080 = vld [vmem:[#allocation2 + $0x80] sm:$0xff]
      %v1081 = vld [vmem:[#allocation2 + $0x88] sm:$0x3]
      %v1082 = vld [vmem:[#allocation2 + $0x90] sm:$0xff]
      %v1083 = vld [vmem:[#allocation2 + $0x98] sm:$0xff]
      %v1084 = vld [vmem:[#allocation2 + $0xa0] sm:$0x3]
      %v1085 = vld [vmem:[#allocation2 + $0xa8] sm:$0xff]
      %v1086 = vld [vmem:[#allocation2 + $0xb0] sm:$0xff]
      %v1087 = vld [vmem:[#allocation2 + $0xb8] sm:$0x3]
      %v1088 = vld [vmem:[#allocation2 + $0xc0] sm:$0xff]
      %v1089 = vld [vmem:[#allocation2 + $0xc8] sm:$0xff]
      %v1090 = vld [vmem:[#allocation2 + $0xd0] sm:$0x3]
      %v1091 = vld [vmem:[#allocation2 + $0xd8] sm:$0xff]
      %v1092 = vld [vmem:[#allocation2 + $0xe0] sm:$0xff]
      %v1093 = vld [vmem:[#allocation2 + $0xe8] sm:$0x3]
      %v1094 = vld [vmem:[#allocation2 + $0xf0] sm:$0xff]
      %v1095 = vld [vmem:[#allocation2 + $0xf8] sm:$0xff]
      %v1096 = vld [vmem:[#allocation2 + $0x100] sm:$0x3]
      %v1097 = vld [vmem:[#allocation2 + $0x108] sm:$0xff]
      %v1098 = vld [vmem:[#allocation2 + $0x110] sm:$0xff]
      %v1099 = vld [vmem:[#allocation2 + $0x118] sm:$0x3]
      %v1100 = vld [vmem:[#allocation2 + $0x120] sm:$0xff]
      %v1101 = vld [vmem:[#allocation2 + $0x128] sm:$0xff]
      %v1102 = vld [vmem:[#allocation2 + $0x130] sm:$0x3]
      %v1103 = vld [vmem:[#allocation2 + $0x138] sm:$0xff]
      %v1104 = vld [vmem:[#allocation2 + $0x140] sm:$0xff]
      %v1105 = vld [vmem:[#allocation2 + $0x148] sm:$0x3]
      %v1106 = vld [vmem:[#allocation2 + $0x150] sm:$0xff]
      %v1107 = vld [vmem:[#allocation2 + $0x158] sm:$0xff]
      %v1108 = vld [vmem:[#allocation2 + $0x160] sm:$0x3]
      %v1109 = vld [vmem:[#allocation2 + $0x168] sm:$0xff]
      %v1110 = vld [vmem:[#allocation2 + $0x170] sm:$0xff]
      %v1111 = vld [vmem:[#allocation2 + $0x178] sm:$0x3]
      %v1112 = vld [vmem:[#allocation2 + $0x180] sm:$0xff]
      %v1113 = vld [vmem:[#allocation2 + $0x188] sm:$0xff]
      %v1114 = vld [vmem:[#allocation2 + $0x190] sm:$0x3]
      %v1115 = vld [vmem:[#allocation2 + $0x198] sm:$0xff]
      %v1116 = vld [vmem:[#allocation2 + $0x1a0] sm:$0xff]
      %v1117 = vld [vmem:[#allocation2 + $0x1a8] sm:$0x3]
      %vm1166 = vcmask 1046528
      %v1167 = vrot.slane %v1064, 1
      %v1168 = vrot.slane %v1065, 1
      %v1169 = vsel %vm1166, %v1167, %v1168
      %v1170 = vrot.slane %v1066, 1
      %v1171 = vsel %vm1166, %v1168, %v1170
      %v1172 = vrot.slane %v1067, 1
      %v1173 = vrot.slane %v1068, 1
      %v1174 = vsel %vm1166, %v1172, %v1173
      %v1175 = vrot.slane %v1069, 1
      %v1176 = vsel %vm1166, %v1173, %v1175
      %v1177 = vrot.slane %v1070, 1
      %v1178 = vrot.slane %v1071, 1
      %v1179 = vsel %vm1166, %v1177, %v1178
      %v1180 = vrot.slane %v1072, 1
      %v1181 = vsel %vm1166, %v1178, %v1180
      %v1182 = vrot.slane %v1073, 1
      %v1183 = vrot.slane %v1074, 1
      %v1184 = vsel %vm1166, %v1182, %v1183
      %v1185 = vrot.slane %v1075, 1
      %v1186 = vsel %vm1166, %v1183, %v1185
      %v1187 = vrot.slane %v1076, 1
      %v1188 = vrot.slane %v1077, 1
      %v1189 = vsel %vm1166, %v1187, %v1188
      %v1190 = vrot.slane %v1078, 1
      %v1191 = vsel %vm1166, %v1188, %v1190
      %v1192 = vrot.slane %v1079, 1
      %v1193 = vrot.slane %v1080, 1
      %v1194 = vsel %vm1166, %v1192, %v1193
      %v1195 = vrot.slane %v1081, 1
      %v1196 = vsel %vm1166, %v1193, %v1195
      %v1197 = vrot.slane %v1082, 1
      %v1198 = vrot.slane %v1083, 1
      %v1199 = vsel %vm1166, %v1197, %v1198
      %v1200 = vrot.slane %v1084, 1
      %v1201 = vsel %vm1166, %v1198, %v1200
      %v1202 = vrot.slane %v1085, 1
      %v1203 = vrot.slane %v1086, 1
      %v1204 = vsel %vm1166, %v1202, %v1203
      %v1205 = vrot.slane %v1087, 1
      %v1206 = vsel %vm1166, %v1203, %v1205
      %v1207 = vrot.slane %v1088, 1
      %v1208 = vrot.slane %v1089, 1
      %v1209 = vsel %vm1166, %v1207, %v1208
      %v1210 = vrot.slane %v1090, 1
      %v1211 = vsel %vm1166, %v1208, %v1210
      %v1212 = vrot.slane %v1091, 1
      %v1213 = vrot.slane %v1092, 1
      %v1214 = vsel %vm1166, %v1212, %v1213
      %v1215 = vrot.slane %v1093, 1
      %v1216 = vsel %vm1166, %v1213, %v1215
      %v1217 = vrot.slane %v1094, 1
      %v1218 = vrot.slane %v1095, 1
      %v1219 = vsel %vm1166, %v1217, %v1218
      %v1220 = vrot.slane %v1096, 1
      %v1221 = vsel %vm1166, %v1218, %v1220
      %v1222 = vrot.slane %v1097, 1
      %v1223 = vrot.slane %v1098, 1
      %v1224 = vsel %vm1166, %v1222, %v1223
      %v1225 = vrot.slane %v1099, 1
      %v1226 = vsel %vm1166, %v1223, %v1225
      %v1227 = vrot.slane %v1100, 1
      %v1228 = vrot.slane %v1101, 1
      %v1229 = vsel %vm1166, %v1227, %v1228
      %v1230 = vrot.slane %v1102, 1
      %v1231 = vsel %vm1166, %v1228, %v1230
      %v1232 = vrot.slane %v1103, 1
      %v1233 = vrot.slane %v1104, 1
      %v1234 = vsel %vm1166, %v1232, %v1233
      %v1235 = vrot.slane %v1105, 1
      %v1236 = vsel %vm1166, %v1233, %v1235
      %v1237 = vrot.slane %v1106, 1
      %v1238 = vrot.slane %v1107, 1
      %v1239 = vsel %vm1166, %v1237, %v1238
      %v1240 = vrot.slane %v1108, 1
      %v1241 = vsel %vm1166, %v1238, %v1240
      %v1242 = vrot.slane %v1109, 1
      %v1243 = vrot.slane %v1110, 1
      %v1244 = vsel %vm1166, %v1242, %v1243
      %v1245 = vrot.slane %v1111, 1
      %v1246 = vsel %vm1166, %v1243, %v1245
      %1247 = vrot.lane.b32.xlu0 %v1169, 4
      %v1248 = vpop.permute.xlu0 %1247
      %1249 = vrot.lane.b32.xlu0 %v1171, 4
      %v1250 = vpop.permute.xlu0 %1249
      %1251 = vrot.lane.b32.xlu0 %v1174, 4
      %v1252 = vpop.permute.xlu0 %1251
      %1253 = vrot.lane.b32.xlu0 %v1176, 4
      %v1254 = vpop.permute.xlu0 %1253
      %1255 = vrot.lane.b32.xlu0 %v1179, 4
      %v1256 = vpop.permute.xlu0 %1255
      %1257 = vrot.lane.b32.xlu0 %v1181, 4
      %v1258 = vpop.permute.xlu0 %1257
      %1259 = vrot.lane.b32.xlu0 %v1184, 4
      %v1260 = vpop.permute.xlu0 %1259
      %1261 = vrot.lane.b32.xlu0 %v1186, 4
      %v1262 = vpop.permute.xlu0 %1261
      %1263 = vrot.lane.b32.xlu0 %v1189, 4
      %v1264 = vpop.permute.xlu0 %1263
      %1265 = vrot.lane.b32.xlu0 %v1191, 4
      %v1266 = vpop.permute.xlu0 %1265
      %1267 = vrot.lane.b32.xlu0 %v1194, 4
      %v1268 = vpop.permute.xlu0 %1267
      %1269 = vrot.lane.b32.xlu0 %v1196, 4
      %v1270 = vpop.permute.xlu0 %1269
      %1271 = vrot.lane.b32.xlu0 %v1199, 4
      %v1272 = vpop.permute.xlu0 %1271
      %1273 = vrot.lane.b32.xlu0 %v1201, 4
      %v1274 = vpop.permute.xlu0 %1273
      %1275 = vrot.lane.b32.xlu0 %v1204, 4
      %v1276 = vpop.permute.xlu0 %1275
      %1277 = vrot.lane.b32.xlu0 %v1206, 4
      %v1278 = vpop.permute.xlu0 %1277
      %1279 = vrot.lane.b32.xlu0 %v1209, 4
      %v1280 = vpop.permute.xlu0 %1279
      %1281 = vrot.lane.b32.xlu0 %v1211, 4
      %v1282 = vpop.permute.xlu0 %1281
      %1283 = vrot.lane.b32.xlu0 %v1214, 4
      %v1284 = vpop.permute.xlu0 %1283
      %1285 = vrot.lane.b32.xlu0 %v1216, 4
      %v1286 = vpop.permute.xlu0 %1285
      %1287 = vrot.lane.b32.xlu0 %v1219, 4
      %v1288 = vpop.permute.xlu0 %1287
      %1289 = vrot.lane.b32.xlu0 %v1221, 4
      %v1290 = vpop.permute.xlu0 %1289
      %1291 = vrot.lane.b32.xlu0 %v1224, 4
      %v1292 = vpop.permute.xlu0 %1291
      %1293 = vrot.lane.b32.xlu0 %v1226, 4
      %v1294 = vpop.permute.xlu0 %1293
      %1295 = vrot.lane.b32.xlu0 %v1229, 4
      %v1296 = vpop.permute.xlu0 %1295
      %1297 = vrot.lane.b32.xlu0 %v1231, 4
      %v1298 = vpop.permute.xlu0 %1297
      %1299 = vrot.lane.b32.xlu0 %v1234, 4
      %v1300 = vpop.permute.xlu0 %1299
      %1301 = vrot.lane.b32.xlu0 %v1236, 4
      %v1302 = vpop.permute.xlu0 %1301
      %1303 = vrot.lane.b32.xlu0 %v1239, 4
      %v1304 = vpop.permute.xlu0 %1303
      %1305 = vrot.lane.b32.xlu0 %v1241, 4
      %v1306 = vpop.permute.xlu0 %1305
      %1307 = vrot.lane.b32.xlu0 %v1244, 4
      %v1308 = vpop.permute.xlu0 %1307
      %1309 = vrot.lane.b32.xlu0 %v1246, 4
      %v1310 = vpop.permute.xlu0 %1309
      %vm1343 = vcmask 1045504
      %v1344 = vrot.slane %v1064, 2
      %v1345 = vrot.slane %v1065, 2
      %v1346 = vsel %vm1343, %v1344, %v1345
      %v1347 = vrot.slane %v1066, 2
      %v1348 = vsel %vm1343, %v1345, %v1347
      %v1349 = vrot.slane %v1067, 2
      %v1350 = vrot.slane %v1068, 2
      %v1351 = vsel %vm1343, %v1349, %v1350
      %v1352 = vrot.slane %v1069, 2
      %v1353 = vsel %vm1343, %v1350, %v1352
      %v1354 = vrot.slane %v1070, 2
      %v1355 = vrot.slane %v1071, 2
      %v1356 = vsel %vm1343, %v1354, %v1355
      %v1357 = vrot.slane %v1072, 2
      %v1358 = vsel %vm1343, %v1355, %v1357
      %v1359 = vrot.slane %v1073, 2
      %v1360 = vrot.slane %v1074, 2
      %v1361 = vsel %vm1343, %v1359, %v1360
      %v1362 = vrot.slane %v1075, 2
      %v1363 = vsel %vm1343, %v1360, %v1362
      %v1364 = vrot.slane %v1076, 2
      %v1365 = vrot.slane %v1077, 2
      %v1366 = vsel %vm1343, %v1364, %v1365
      %v1367 = vrot.slane %v1078, 2
      %v1368 = vsel %vm1343, %v1365, %v1367
      %v1369 = vrot.slane %v1079, 2
      %v1370 = vrot.slane %v1080, 2
      %v1371 = vsel %vm1343, %v1369, %v1370
      %v1372 = vrot.slane %v1081, 2
      %v1373 = vsel %vm1343, %v1370, %v1372
      %v1374 = vrot.slane %v1082, 2
      %v1375 = vrot.slane %v1083, 2
      %v1376 = vsel %vm1343, %v1374, %v1375
      %v1377 = vrot.slane %v1084, 2
      %v1378 = vsel %vm1343, %v1375, %v1377
      %v1379 = vrot.slane %v1085, 2
      %v1380 = vrot.slane %v1086, 2
      %v1381 = vsel %vm1343, %v1379, %v1380
      %v1382 = vrot.slane %v1087, 2
      %v1383 = vsel %vm1343, %v1380, %v1382
      %v1384 = vrot.slane %v1088, 2
      %v1385 = vrot.slane %v1089, 2
      %v1386 = vsel %vm1343, %v1384, %v1385
      %v1387 = vrot.slane %v1090, 2
      %v1388 = vsel %vm1343, %v1385, %v1387
      %v1389 = vrot.slane %v1091, 2
      %v1390 = vrot.slane %v1092, 2
      %v1391 = vsel %vm1343, %v1389, %v1390
      %v1392 = vrot.slane %v1093, 2
      %v1393 = vsel %vm1343, %v1390, %v1392
      %v1394 = vrot.slane %v1094, 2
      %v1395 = vrot.slane %v1095, 2
      %v1396 = vsel %vm1343, %v1394, %v1395
      %v1397 = vrot.slane %v1096, 2
      %v1398 = vsel %vm1343, %v1395, %v1397
      %v1399 = vrot.slane %v1097, 2
      %v1400 = vrot.slane %v1098, 2
      %v1401 = vsel %vm1343, %v1399, %v1400
      %v1402 = vrot.slane %v1099, 2
      %v1403 = vsel %vm1343, %v1400, %v1402
      %v1404 = vrot.slane %v1100, 2
      %v1405 = vrot.slane %v1101, 2
      %v1406 = vsel %vm1343, %v1404, %v1405
      %v1407 = vrot.slane %v1102, 2
      %v1408 = vsel %vm1343, %v1405, %v1407
      %v1409 = vrot.slane %v1103, 2
      %v1410 = vrot.slane %v1104, 2
      %v1411 = vsel %vm1343, %v1409, %v1410
      %v1412 = vrot.slane %v1105, 2
      %v1413 = vsel %vm1343, %v1410, %v1412
      %v1414 = vrot.slane %v1106, 2
      %v1415 = vrot.slane %v1107, 2
      %v1416 = vsel %vm1343, %v1414, %v1415
      %v1417 = vrot.slane %v1108, 2
      %v1418 = vsel %vm1343, %v1415, %v1417
      %v1419 = vrot.slane %v1109, 2
      %v1420 = vrot.slane %v1110, 2
      %v1421 = vsel %vm1343, %v1419, %v1420
      %v1422 = vrot.slane %v1111, 2
      %v1423 = vsel %vm1343, %v1420, %v1422
      %1424 = vrot.lane.b32.xlu0 %v1346, 8
      %v1425 = vpop.permute.xlu0 %1424
      %1426 = vrot.lane.b32.xlu0 %v1348, 8
      %v1427 = vpop.permute.xlu0 %1426
      %1428 = vrot.lane.b32.xlu0 %v1351, 8
      %v1429 = vpop.permute.xlu0 %1428
      %1430 = vrot.lane.b32.xlu0 %v1353, 8
      %v1431 = vpop.permute.xlu0 %1430
      %1432 = vrot.lane.b32.xlu0 %v1356, 8
      %v1433 = vpop.permute.xlu0 %1432
      %1434 = vrot.lane.b32.xlu0 %v1358, 8
      %v1435 = vpop.permute.xlu0 %1434
      %1436 = vrot.lane.b32.xlu0 %v1361, 8
      %v1437 = vpop.permute.xlu0 %1436
      %1438 = vrot.lane.b32.xlu0 %v1363, 8
      %v1439 = vpop.permute.xlu0 %1438
      %1440 = vrot.lane.b32.xlu0 %v1366, 8
      %v1441 = vpop.permute.xlu0 %1440
      %1442 = vrot.lane.b32.xlu0 %v1368, 8
      %v1443 = vpop.permute.xlu0 %1442
      %1444 = vrot.lane.b32.xlu0 %v1371, 8
      %v1445 = vpop.permute.xlu0 %1444
      %1446 = vrot.lane.b32.xlu0 %v1373, 8
      %v1447 = vpop.permute.xlu0 %1446
      %1448 = vrot.lane.b32.xlu0 %v1376, 8
      %v1449 = vpop.permute.xlu0 %1448
      %1450 = vrot.lane.b32.xlu0 %v1378, 8
      %v1451 = vpop.permute.xlu0 %1450
      %1452 = vrot.lane.b32.xlu0 %v1381, 8
      %v1453 = vpop.permute.xlu0 %1452
      %1454 = vrot.lane.b32.xlu0 %v1383, 8
      %v1455 = vpop.permute.xlu0 %1454
      %1456 = vrot.lane.b32.xlu0 %v1386, 8
      %v1457 = vpop.permute.xlu0 %1456
      %1458 = vrot.lane.b32.xlu0 %v1388, 8
      %v1459 = vpop.permute.xlu0 %1458
      %1460 = vrot.lane.b32.xlu0 %v1391, 8
      %v1461 = vpop.permute.xlu0 %1460
      %1462 = vrot.lane.b32.xlu0 %v1393, 8
      %v1463 = vpop.permute.xlu0 %1462
      %1464 = vrot.lane.b32.xlu0 %v1396, 8
      %v1465 = vpop.permute.xlu0 %1464
      %1466 = vrot.lane.b32.xlu0 %v1398, 8
      %v1467 = vpop.permute.xlu0 %1466
      %1468 = vrot.lane.b32.xlu0 %v1401, 8
      %v1469 = vpop.permute.xlu0 %1468
      %1470 = vrot.lane.b32.xlu0 %v1403, 8
      %v1471 = vpop.permute.xlu0 %1470
      %1472 = vrot.lane.b32.xlu0 %v1406, 8
      %v1473 = vpop.permute.xlu0 %1472
      %1474 = vrot.lane.b32.xlu0 %v1408, 8
      %v1475 = vpop.permute.xlu0 %1474
      %1476 = vrot.lane.b32.xlu0 %v1411, 8
      %v1477 = vpop.permute.xlu0 %1476
      %1478 = vrot.lane.b32.xlu0 %v1413, 8
      %v1479 = vpop.permute.xlu0 %1478
      %1480 = vrot.lane.b32.xlu0 %v1416, 8
      %v1481 = vpop.permute.xlu0 %1480
      %1482 = vrot.lane.b32.xlu0 %v1418, 8
      %v1483 = vpop.permute.xlu0 %1482
      %1484 = vrot.lane.b32.xlu0 %v1421, 8
      %v1485 = vpop.permute.xlu0 %1484
      %1486 = vrot.lane.b32.xlu0 %v1423, 8
      %v1487 = vpop.permute.xlu0 %1486
      %1522 = vrot.lane.b32.xlu0 %v1067, 12
      %v1523 = vpop.permute.xlu0 %1522
      %1524 = vrot.lane.b32.xlu0 %v1068, 12
      %v1525 = vpop.permute.xlu0 %1524
      %1526 = vrot.lane.b32.xlu0 %v1070, 12
      %v1527 = vpop.permute.xlu0 %1526
      %1528 = vrot.lane.b32.xlu0 %v1071, 12
      %v1529 = vpop.permute.xlu0 %1528
      %1530 = vrot.lane.b32.xlu0 %v1073, 12
      %v1531 = vpop.permute.xlu0 %1530
      %1532 = vrot.lane.b32.xlu0 %v1074, 12
      %v1533 = vpop.permute.xlu0 %1532
      %1534 = vrot.lane.b32.xlu0 %v1076, 12
      %v1535 = vpop.permute.xlu0 %1534
      %1536 = vrot.lane.b32.xlu0 %v1077, 12
      %v1537 = vpop.permute.xlu0 %1536
      %1538 = vrot.lane.b32.xlu0 %v1079, 12
      %v1539 = vpop.permute.xlu0 %1538
      %1540 = vrot.lane.b32.xlu0 %v1080, 12
      %v1541 = vpop.permute.xlu0 %1540
      %1542 = vrot.lane.b32.xlu0 %v1082, 12
      %v1543 = vpop.permute.xlu0 %1542
      %1544 = vrot.lane.b32.xlu0 %v1083, 12
      %v1545 = vpop.permute.xlu0 %1544
      %1546 = vrot.lane.b32.xlu0 %v1085, 12
      %v1547 = vpop.permute.xlu0 %1546
      %1548 = vrot.lane.b32.xlu0 %v1086, 12
      %v1549 = vpop.permute.xlu0 %1548
      %1550 = vrot.lane.b32.xlu0 %v1088, 12
      %v1551 = vpop.permute.xlu0 %1550
      %1552 = vrot.lane.b32.xlu0 %v1089, 12
      %v1553 = vpop.permute.xlu0 %1552
      %1554 = vrot.lane.b32.xlu0 %v1091, 12
      %v1555 = vpop.permute.xlu0 %1554
      %1556 = vrot.lane.b32.xlu0 %v1092, 12
      %v1557 = vpop.permute.xlu0 %1556
      %1558 = vrot.lane.b32.xlu0 %v1094, 12
      %v1559 = vpop.permute.xlu0 %1558
      %1560 = vrot.lane.b32.xlu0 %v1095, 12
      %v1561 = vpop.permute.xlu0 %1560
      %1562 = vrot.lane.b32.xlu0 %v1097, 12
      %v1563 = vpop.permute.xlu0 %1562
      %1564 = vrot.lane.b32.xlu0 %v1098, 12
      %v1565 = vpop.permute.xlu0 %1564
      %1566 = vrot.lane.b32.xlu0 %v1100, 12
      %v1567 = vpop.permute.xlu0 %1566
      %1568 = vrot.lane.b32.xlu0 %v1101, 12
      %v1569 = vpop.permute.xlu0 %1568
      %1570 = vrot.lane.b32.xlu0 %v1103, 12
      %v1571 = vpop.permute.xlu0 %1570
      %1572 = vrot.lane.b32.xlu0 %v1104, 12
      %v1573 = vpop.permute.xlu0 %1572
      %1574 = vrot.lane.b32.xlu0 %v1106, 12
      %v1575 = vpop.permute.xlu0 %1574
      %1576 = vrot.lane.b32.xlu0 %v1107, 12
      %v1577 = vpop.permute.xlu0 %1576
      %1578 = vrot.lane.b32.xlu0 %v1109, 12
      %v1579 = vpop.permute.xlu0 %1578
      %1580 = vrot.lane.b32.xlu0 %v1110, 12
      %v1581 = vpop.permute.xlu0 %1580
      %1582 = vrot.lane.b32.xlu0 %v1112, 12
      %v1583 = vpop.permute.xlu0 %1582
      %1584 = vrot.lane.b32.xlu0 %v1113, 12
      %v1585 = vpop.permute.xlu0 %1584
      %v1619 = vrot.slane %v1112, 1
      %v1620 = vrot.slane %v1113, 1
      %v1621 = vsel %vm1166, %v1619, %v1620
      %v1622 = vrot.slane %v1114, 1
      %v1623 = vsel %vm1166, %v1620, %v1622
      %1624 = vrot.lane.b32.xlu0 %v1174, 16
      %v1625 = vpop.permute.xlu0 %1624
      %1626 = vrot.lane.b32.xlu0 %v1176, 16
      %v1627 = vpop.permute.xlu0 %1626
      %1628 = vrot.lane.b32.xlu0 %v1179, 16
      %v1629 = vpop.permute.xlu0 %1628
      %1630 = vrot.lane.b32.xlu0 %v1181, 16
      %v1631 = vpop.permute.xlu0 %1630
      %1632 = vrot.lane.b32.xlu0 %v1184, 16
      %v1633 = vpop.permute.xlu0 %1632
      %1634 = vrot.lane.b32.xlu0 %v1186, 16
      %v1635 = vpop.permute.xlu0 %1634
      %1636 = vrot.lane.b32.xlu0 %v1189, 16
      %v1637 = vpop.permute.xlu0 %1636
      %1638 = vrot.lane.b32.xlu0 %v1191, 16
      %v1639 = vpop.permute.xlu0 %1638
      %1640 = vrot.lane.b32.xlu0 %v1194, 16
      %v1641 = vpop.permute.xlu0 %1640
      %1642 = vrot.lane.b32.xlu0 %v1196, 16
      %v1643 = vpop.permute.xlu0 %1642
      %1644 = vrot.lane.b32.xlu0 %v1199, 16
      %v1645 = vpop.permute.xlu0 %1644
      %1646 = vrot.lane.b32.xlu0 %v1201, 16
      %v1647 = vpop.permute.xlu0 %1646
      %1648 = vrot.lane.b32.xlu0 %v1204, 16
      %v1649 = vpop.permute.xlu0 %1648
      %1650 = vrot.lane.b32.xlu0 %v1206, 16
      %v1651 = vpop.permute.xlu0 %1650
      %1652 = vrot.lane.b32.xlu0 %v1209, 16
      %v1653 = vpop.permute.xlu0 %1652
      %1654 = vrot.lane.b32.xlu0 %v1211, 16
      %v1655 = vpop.permute.xlu0 %1654
      %1656 = vrot.lane.b32.xlu0 %v1214, 16
      %v1657 = vpop.permute.xlu0 %1656
      %1658 = vrot.lane.b32.xlu0 %v1216, 16
      %v1659 = vpop.permute.xlu0 %1658
      %1660 = vrot.lane.b32.xlu0 %v1219, 16
      %v1661 = vpop.permute.xlu0 %1660
      %1662 = vrot.lane.b32.xlu0 %v1221, 16
      %v1663 = vpop.permute.xlu0 %1662
      %1664 = vrot.lane.b32.xlu0 %v1224, 16
      %v1665 = vpop.permute.xlu0 %1664
      %1666 = vrot.lane.b32.xlu0 %v1226, 16
      %v1667 = vpop.permute.xlu0 %1666
      %1668 = vrot.lane.b32.xlu0 %v1229, 16
      %v1669 = vpop.permute.xlu0 %1668
      %1670 = vrot.lane.b32.xlu0 %v1231, 16
      %v1671 = vpop.permute.xlu0 %1670
      %1672 = vrot.lane.b32.xlu0 %v1234, 16
      %v1673 = vpop.permute.xlu0 %1672
      %1674 = vrot.lane.b32.xlu0 %v1236, 16
      %v1675 = vpop.permute.xlu0 %1674
      %1676 = vrot.lane.b32.xlu0 %v1239, 16
      %v1677 = vpop.permute.xlu0 %1676
      %1678 = vrot.lane.b32.xlu0 %v1241, 16
      %v1679 = vpop.permute.xlu0 %1678
      %1680 = vrot.lane.b32.xlu0 %v1244, 16
      %v1681 = vpop.permute.xlu0 %1680
      %1682 = vrot.lane.b32.xlu0 %v1246, 16
      %v1683 = vpop.permute.xlu0 %1682
      %1684 = vrot.lane.b32.xlu0 %v1621, 16
      %v1685 = vpop.permute.xlu0 %1684
      %1686 = vrot.lane.b32.xlu0 %v1623, 16
      %v1687 = vpop.permute.xlu0 %1686
      %v1720 = vrot.slane %v1112, 2
      %v1721 = vrot.slane %v1113, 2
      %v1722 = vsel %vm1343, %v1720, %v1721
      %v1723 = vrot.slane %v1114, 2
      %v1724 = vsel %vm1343, %v1721, %v1723
      %1725 = vrot.lane.b32.xlu0 %v1351, 20
      %v1726 = vpop.permute.xlu0 %1725
      %1727 = vrot.lane.b32.xlu0 %v1353, 20
      %v1728 = vpop.permute.xlu0 %1727
      %1729 = vrot.lane.b32.xlu0 %v1356, 20
      %v1730 = vpop.permute.xlu0 %1729
      %1731 = vrot.lane.b32.xlu0 %v1358, 20
      %v1732 = vpop.permute.xlu0 %1731
      %1733 = vrot.lane.b32.xlu0 %v1361, 20
      %v1734 = vpop.permute.xlu0 %1733
      %1735 = vrot.lane.b32.xlu0 %v1363, 20
      %v1736 = vpop.permute.xlu0 %1735
      %1737 = vrot.lane.b32.xlu0 %v1366, 20
      %v1738 = vpop.permute.xlu0 %1737
      %1739 = vrot.lane.b32.xlu0 %v1368, 20
      %v1740 = vpop.permute.xlu0 %1739
      %1741 = vrot.lane.b32.xlu0 %v1371, 20
      %v1742 = vpop.permute.xlu0 %1741
      %1743 = vrot.lane.b32.xlu0 %v1373, 20
      %v1744 = vpop.permute.xlu0 %1743
      %1745 = vrot.lane.b32.xlu0 %v1376, 20
      %v1746 = vpop.permute.xlu0 %1745
      %1747 = vrot.lane.b32.xlu0 %v1378, 20
      %v1748 = vpop.permute.xlu0 %1747
      %1749 = vrot.lane.b32.xlu0 %v1381, 20
      %v1750 = vpop.permute.xlu0 %1749
      %1751 = vrot.lane.b32.xlu0 %v1383, 20
      %v1752 = vpop.permute.xlu0 %1751
      %1753 = vrot.lane.b32.xlu0 %v1386, 20
      %v1754 = vpop.permute.xlu0 %1753
      %1755 = vrot.lane.b32.xlu0 %v1388, 20
      %v1756 = vpop.permute.xlu0 %1755
      %1757 = vrot.lane.b32.xlu0 %v1391, 20
      %v1758 = vpop.permute.xlu0 %1757
      %1759 = vrot.lane.b32.xlu0 %v1393, 20
      %v1760 = vpop.permute.xlu0 %1759
      %1761 = vrot.lane.b32.xlu0 %v1396, 20
      %v1762 = vpop.permute.xlu0 %1761
      %1763 = vrot.lane.b32.xlu0 %v1398, 20
      %v1764 = vpop.permute.xlu0 %1763
      %1765 = vrot.lane.b32.xlu0 %v1401, 20
      %v1766 = vpop.permute.xlu0 %1765
      %1767 = vrot.lane.b32.xlu0 %v1403, 20
      %v1768 = vpop.permute.xlu0 %1767
      %1769 = vrot.lane.b32.xlu0 %v1406, 20
      %v1770 = vpop.permute.xlu0 %1769
      %1771 = vrot.lane.b32.xlu0 %v1408, 20
      %v1772 = vpop.permute.xlu0 %1771
      %1773 = vrot.lane.b32.xlu0 %v1411, 20
      %v1774 = vpop.permute.xlu0 %1773
      %1775 = vrot.lane.b32.xlu0 %v1413, 20
      %v1776 = vpop.permute.xlu0 %1775
      %1777 = vrot.lane.b32.xlu0 %v1416, 20
      %v1778 = vpop.permute.xlu0 %1777
      %1779 = vrot.lane.b32.xlu0 %v1418, 20
      %v1780 = vpop.permute.xlu0 %1779
      %1781 = vrot.lane.b32.xlu0 %v1421, 20
      %v1782 = vpop.permute.xlu0 %1781
      %1783 = vrot.lane.b32.xlu0 %v1423, 20
      %v1784 = vpop.permute.xlu0 %1783
      %1785 = vrot.lane.b32.xlu0 %v1722, 20
      %v1786 = vpop.permute.xlu0 %1785
      %1787 = vrot.lane.b32.xlu0 %v1724, 20
      %v1788 = vpop.permute.xlu0 %1787
      %1823 = vrot.lane.b32.xlu0 %v1070, 24
      %v1824 = vpop.permute.xlu0 %1823
      %1825 = vrot.lane.b32.xlu0 %v1071, 24
      %v1826 = vpop.permute.xlu0 %1825
      %1827 = vrot.lane.b32.xlu0 %v1073, 24
      %v1828 = vpop.permute.xlu0 %1827
      %1829 = vrot.lane.b32.xlu0 %v1074, 24
      %v1830 = vpop.permute.xlu0 %1829
      %1831 = vrot.lane.b32.xlu0 %v1076, 24
      %v1832 = vpop.permute.xlu0 %1831
      %1833 = vrot.lane.b32.xlu0 %v1077, 24
      %v1834 = vpop.permute.xlu0 %1833
      %1835 = vrot.lane.b32.xlu0 %v1079, 24
      %v1836 = vpop.permute.xlu0 %1835
      %1837 = vrot.lane.b32.xlu0 %v1080, 24
      %v1838 = vpop.permute.xlu0 %1837
      %1839 = vrot.lane.b32.xlu0 %v1082, 24
      %v1840 = vpop.permute.xlu0 %1839
      %1841 = vrot.lane.b32.xlu0 %v1083, 24
      %v1842 = vpop.permute.xlu0 %1841
      %1843 = vrot.lane.b32.xlu0 %v1085, 24
      %v1844 = vpop.permute.xlu0 %1843
      %1845 = vrot.lane.b32.xlu0 %v1086, 24
      %v1846 = vpop.permute.xlu0 %1845
      %1847 = vrot.lane.b32.xlu0 %v1088, 24
      %v1848 = vpop.permute.xlu0 %1847
      %1849 = vrot.lane.b32.xlu0 %v1089, 24
      %v1850 = vpop.permute.xlu0 %1849
      %1851 = vrot.lane.b32.xlu0 %v1091, 24
      %v1852 = vpop.permute.xlu0 %1851
      %1853 = vrot.lane.b32.xlu0 %v1092, 24
      %v1854 = vpop.permute.xlu0 %1853
      %1855 = vrot.lane.b32.xlu0 %v1094, 24
      %v1856 = vpop.permute.xlu0 %1855
      %1857 = vrot.lane.b32.xlu0 %v1095, 24
      %v1858 = vpop.permute.xlu0 %1857
      %1859 = vrot.lane.b32.xlu0 %v1097, 24
      %v1860 = vpop.permute.xlu0 %1859
      %1861 = vrot.lane.b32.xlu0 %v1098, 24
      %v1862 = vpop.permute.xlu0 %1861
      %1863 = vrot.lane.b32.xlu0 %v1100, 24
      %v1864 = vpop.permute.xlu0 %1863
      %1865 = vrot.lane.b32.xlu0 %v1101, 24
      %v1866 = vpop.permute.xlu0 %1865
      %1867 = vrot.lane.b32.xlu0 %v1103, 24
      %v1868 = vpop.permute.xlu0 %1867
      %1869 = vrot.lane.b32.xlu0 %v1104, 24
      %v1870 = vpop.permute.xlu0 %1869
      %1871 = vrot.lane.b32.xlu0 %v1106, 24
      %v1872 = vpop.permute.xlu0 %1871
      %1873 = vrot.lane.b32.xlu0 %v1107, 24
      %v1874 = vpop.permute.xlu0 %1873
      %1875 = vrot.lane.b32.xlu0 %v1109, 24
      %v1876 = vpop.permute.xlu0 %1875
      %1877 = vrot.lane.b32.xlu0 %v1110, 24
      %v1878 = vpop.permute.xlu0 %1877
      %1879 = vrot.lane.b32.xlu0 %v1112, 24
      %v1880 = vpop.permute.xlu0 %1879
      %1881 = vrot.lane.b32.xlu0 %v1113, 24
      %v1882 = vpop.permute.xlu0 %1881
      %1883 = vrot.lane.b32.xlu0 %v1115, 24
      %v1884 = vpop.permute.xlu0 %1883
      %1885 = vrot.lane.b32.xlu0 %v1116, 24
      %v1886 = vpop.permute.xlu0 %1885
      %v1920 = vrot.slane %v1115, 1
      %v1921 = vrot.slane %v1116, 1
      %v1922 = vsel %vm1166, %v1920, %v1921
      %v1923 = vrot.slane %v1117, 1
      %v1924 = vsel %vm1166, %v1921, %v1923
      %1925 = vrot.lane.b32.xlu0 %v1179, 28
      %v1926 = vpop.permute.xlu0 %1925
      %1927 = vrot.lane.b32.xlu0 %v1181, 28
      %v1928 = vpop.permute.xlu0 %1927
      %1929 = vrot.lane.b32.xlu0 %v1184, 28
      %v1930 = vpop.permute.xlu0 %1929
      %1931 = vrot.lane.b32.xlu0 %v1186, 28
      %v1932 = vpop.permute.xlu0 %1931
      %1933 = vrot.lane.b32.xlu0 %v1189, 28
      %v1934 = vpop.permute.xlu0 %1933
      %1935 = vrot.lane.b32.xlu0 %v1191, 28
      %v1936 = vpop.permute.xlu0 %1935
      %1937 = vrot.lane.b32.xlu0 %v1194, 28
      %v1938 = vpop.permute.xlu0 %1937
      %1939 = vrot.lane.b32.xlu0 %v1196, 28
      %v1940 = vpop.permute.xlu0 %1939
      %1941 = vrot.lane.b32.xlu0 %v1199, 28
      %v1942 = vpop.permute.xlu0 %1941
      %1943 = vrot.lane.b32.xlu0 %v1201, 28
      %v1944 = vpop.permute.xlu0 %1943
      %1945 = vrot.lane.b32.xlu0 %v1204, 28
      %v1946 = vpop.permute.xlu0 %1945
      %1947 = vrot.lane.b32.xlu0 %v1206, 28
      %v1948 = vpop.permute.xlu0 %1947
      %1949 = vrot.lane.b32.xlu0 %v1209, 28
      %v1950 = vpop.permute.xlu0 %1949
      %1951 = vrot.lane.b32.xlu0 %v1211, 28
      %v1952 = vpop.permute.xlu0 %1951
      %1953 = vrot.lane.b32.xlu0 %v1214, 28
      %v1954 = vpop.permute.xlu0 %1953
      %1955 = vrot.lane.b32.xlu0 %v1216, 28
      %v1956 = vpop.permute.xlu0 %1955
      %1957 = vrot.lane.b32.xlu0 %v1219, 28
      %v1958 = vpop.permute.xlu0 %1957
      %1959 = vrot.lane.b32.xlu0 %v1221, 28
      %v1960 = vpop.permute.xlu0 %1959
      %1961 = vrot.lane.b32.xlu0 %v1224, 28
      %v1962 = vpop.permute.xlu0 %1961
      %1963 = vrot.lane.b32.xlu0 %v1226, 28
      %v1964 = vpop.permute.xlu0 %1963
      %1965 = vrot.lane.b32.xlu0 %v1229, 28
      %v1966 = vpop.permute.xlu0 %1965
      %1967 = vrot.lane.b32.xlu0 %v1231, 28
      %v1968 = vpop.permute.xlu0 %1967
      %1969 = vrot.lane.b32.xlu0 %v1234, 28
      %v1970 = vpop.permute.xlu0 %1969
      %1971 = vrot.lane.b32.xlu0 %v1236, 28
      %v1972 = vpop.permute.xlu0 %1971
      %1973 = vrot.lane.b32.xlu0 %v1239, 28
      %v1974 = vpop.permute.xlu0 %1973
      %1975 = vrot.lane.b32.xlu0 %v1241, 28
      %v1976 = vpop.permute.xlu0 %1975
      %1977 = vrot.lane.b32.xlu0 %v1244, 28
      %v1978 = vpop.permute.xlu0 %1977
      %1979 = vrot.lane.b32.xlu0 %v1246, 28
      %v1980 = vpop.permute.xlu0 %1979
      %1981 = vrot.lane.b32.xlu0 %v1621, 28
      %v1982 = vpop.permute.xlu0 %1981
      %1983 = vrot.lane.b32.xlu0 %v1623, 28
      %v1984 = vpop.permute.xlu0 %1983
      %1985 = vrot.lane.b32.xlu0 %v1922, 28
      %v1986 = vpop.permute.xlu0 %1985
      %1987 = vrot.lane.b32.xlu0 %v1924, 28
      %v1988 = vpop.permute.xlu0 %1987
      %v2021 = vrot.slane %v1115, 2
      %v2022 = vrot.slane %v1116, 2
      %v2023 = vsel %vm1343, %v2021, %v2022
      %v2024 = vrot.slane %v1117, 2
      %v2025 = vsel %vm1343, %v2022, %v2024
      %2026 = vrot.lane.b32.xlu0 %v1356, 32
      %v2027 = vpop.permute.xlu0 %2026
      %2028 = vrot.lane.b32.xlu0 %v1358, 32
      %v2029 = vpop.permute.xlu0 %2028
      %2030 = vrot.lane.b32.xlu0 %v1361, 32
      %v2031 = vpop.permute.xlu0 %2030
      %2032 = vrot.lane.b32.xlu0 %v1363, 32
      %v2033 = vpop.permute.xlu0 %2032
      %2034 = vrot.lane.b32.xlu0 %v1366, 32
      %v2035 = vpop.permute.xlu0 %2034
      %2036 = vrot.lane.b32.xlu0 %v1368, 32
      %v2037 = vpop.permute.xlu0 %2036
      %2038 = vrot.lane.b32.xlu0 %v1371, 32
      %v2039 = vpop.permute.xlu0 %2038
      %2040 = vrot.lane.b32.xlu0 %v1373, 32
      %v2041 = vpop.permute.xlu0 %2040
      %2042 = vrot.lane.b32.xlu0 %v1376, 32
      %v2043 = vpop.permute.xlu0 %2042
      %2044 = vrot.lane.b32.xlu0 %v1378, 32
      %v2045 = vpop.permute.xlu0 %2044
      %2046 = vrot.lane.b32.xlu0 %v1381, 32
      %v2047 = vpop.permute.xlu0 %2046
      %2048 = vrot.lane.b32.xlu0 %v1383, 32
      %v2049 = vpop.permute.xlu0 %2048
      %2050 = vrot.lane.b32.xlu0 %v1386, 32
      %v2051 = vpop.permute.xlu0 %2050
      %2052 = vrot.lane.b32.xlu0 %v1388, 32
      %v2053 = vpop.permute.xlu0 %2052
      %2054 = vrot.lane.b32.xlu0 %v1391, 32
      %v2055 = vpop.permute.xlu0 %2054
      %2056 = vrot.lane.b32.xlu0 %v1393, 32
      %v2057 = vpop.permute.xlu0 %2056
      %2058 = vrot.lane.b32.xlu0 %v1396, 32
      %v2059 = vpop.permute.xlu0 %2058
      %2060 = vrot.lane.b32.xlu0 %v1398, 32
      %v2061 = vpop.permute.xlu0 %2060
      %2062 = vrot.lane.b32.xlu0 %v1401, 32
      %v2063 = vpop.permute.xlu0 %2062
      %2064 = vrot.lane.b32.xlu0 %v1403, 32
      %v2065 = vpop.permute.xlu0 %2064
      %2066 = vrot.lane.b32.xlu0 %v1406, 32
      %v2067 = vpop.permute.xlu0 %2066
      %2068 = vrot.lane.b32.xlu0 %v1408, 32
      %v2069 = vpop.permute.xlu0 %2068
      %2070 = vrot.lane.b32.xlu0 %v1411, 32
      %v2071 = vpop.permute.xlu0 %2070
      %2072 = vrot.lane.b32.xlu0 %v1413, 32
      %v2073 = vpop.permute.xlu0 %2072
      %2074 = vrot.lane.b32.xlu0 %v1416, 32
      %v2075 = vpop.permute.xlu0 %2074
      %2076 = vrot.lane.b32.xlu0 %v1418, 32
      %v2077 = vpop.permute.xlu0 %2076
      %2078 = vrot.lane.b32.xlu0 %v1421, 32
      %v2079 = vpop.permute.xlu0 %2078
      %2080 = vrot.lane.b32.xlu0 %v1423, 32
      %v2081 = vpop.permute.xlu0 %2080
      %2082 = vrot.lane.b32.xlu0 %v1722, 32
      %v2083 = vpop.permute.xlu0 %2082
      %2084 = vrot.lane.b32.xlu0 %v1724, 32
      %v2085 = vpop.permute.xlu0 %2084
      %2086 = vrot.lane.b32.xlu0 %v2023, 32
      %v2087 = vpop.permute.xlu0 %2086
      %2088 = vrot.lane.b32.xlu0 %v2025, 32
      %v2089 = vpop.permute.xlu0 %2088
      %v2122 = vsel %vm975, %v1064, %v1248
      %v2123 = vsel %vm975, %v1065, %v1250
      %v2124 = vsel %vm975, %v1067, %v1252
      %v2125 = vsel %vm975, %v1068, %v1254
      %v2126 = vsel %vm975, %v1070, %v1256
      %v2127 = vsel %vm975, %v1071, %v1258
      %v2128 = vsel %vm975, %v1073, %v1260
      %v2129 = vsel %vm975, %v1074, %v1262
      %v2130 = vsel %vm975, %v1076, %v1264
      %v2131 = vsel %vm975, %v1077, %v1266
      %v2132 = vsel %vm975, %v1079, %v1268
      %v2133 = vsel %vm975, %v1080, %v1270
      %v2134 = vsel %vm975, %v1082, %v1272
      %v2135 = vsel %vm975, %v1083, %v1274
      %v2136 = vsel %vm975, %v1085, %v1276
      %v2137 = vsel %vm975, %v1086, %v1278
      %v2138 = vsel %vm975, %v1088, %v1280
      %v2139 = vsel %vm975, %v1089, %v1282
      %v2140 = vsel %vm975, %v1091, %v1284
      %v2141 = vsel %vm975, %v1092, %v1286
      %v2142 = vsel %vm975, %v1094, %v1288
      %v2143 = vsel %vm975, %v1095, %v1290
      %v2144 = vsel %vm975, %v1097, %v1292
      %v2145 = vsel %vm975, %v1098, %v1294
      %v2146 = vsel %vm975, %v1100, %v1296
      %v2147 = vsel %vm975, %v1101, %v1298
      %v2148 = vsel %vm975, %v1103, %v1300
      %v2149 = vsel %vm975, %v1104, %v1302
      %v2150 = vsel %vm975, %v1106, %v1304
      %v2151 = vsel %vm975, %v1107, %v1306
      %v2152 = vsel %vm975, %v1109, %v1308
      %v2153 = vsel %vm975, %v1110, %v1310
      %vm2154 = vcmask 64512
      %v2155 = vsel %vm2154, %v2122, %v1425
      %v2156 = vsel %vm2154, %v2123, %v1427
      %v2157 = vsel %vm2154, %v2124, %v1429
      %v2158 = vsel %vm2154, %v2125, %v1431
      %v2159 = vsel %vm2154, %v2126, %v1433
      %v2160 = vsel %vm2154, %v2127, %v1435
      %v2161 = vsel %vm2154, %v2128, %v1437
      %v2162 = vsel %vm2154, %v2129, %v1439
      %v2163 = vsel %vm2154, %v2130, %v1441
      %v2164 = vsel %vm2154, %v2131, %v1443
      %v2165 = vsel %vm2154, %v2132, %v1445
      %v2166 = vsel %vm2154, %v2133, %v1447
      %v2167 = vsel %vm2154, %v2134, %v1449
      %v2168 = vsel %vm2154, %v2135, %v1451
      %v2169 = vsel %vm2154, %v2136, %v1453
      %v2170 = vsel %vm2154, %v2137, %v1455
      %v2171 = vsel %vm2154, %v2138, %v1457
      %v2172 = vsel %vm2154, %v2139, %v1459
      %v2173 = vsel %vm2154, %v2140, %v1461
      %v2174 = vsel %vm2154, %v2141, %v1463
      %v2175 = vsel %vm2154, %v2142, %v1465
      %v2176 = vsel %vm2154, %v2143, %v1467
      %v2177 = vsel %vm2154, %v2144, %v1469
      %v2178 = vsel %vm2154, %v2145, %v1471
      %v2179 = vsel %vm2154, %v2146, %v1473
      %v2180 = vsel %vm2154, %v2147, %v1475
      %v2181 = vsel %vm2154, %v2148, %v1477
      %v2182 = vsel %vm2154, %v2149, %v1479
      %v2183 = vsel %vm2154, %v2150, %v1481
      %v2184 = vsel %vm2154, %v2151, %v1483
      %v2185 = vsel %vm2154, %v2152, %v1485
      %v2186 = vsel %vm2154, %v2153, %v1487
      %vm2187 = vcmask 97280
      %v2188 = vsel %vm2187, %v2155, %v1523
      %v2189 = vsel %vm2187, %v2156, %v1525
      %v2190 = vsel %vm2187, %v2157, %v1527
      %v2191 = vsel %vm2187, %v2158, %v1529
      %v2192 = vsel %vm2187, %v2159, %v1531
      %v2193 = vsel %vm2187, %v2160, %v1533
      %v2194 = vsel %vm2187, %v2161, %v1535
      %v2195 = vsel %vm2187, %v2162, %v1537
      %v2196 = vsel %vm2187, %v2163, %v1539
      %v2197 = vsel %vm2187, %v2164, %v1541
      %v2198 = vsel %vm2187, %v2165, %v1543
      %v2199 = vsel %vm2187, %v2166, %v1545
      %v2200 = vsel %vm2187, %v2167, %v1547
      %v2201 = vsel %vm2187, %v2168, %v1549
      %v2202 = vsel %vm2187, %v2169, %v1551
      %v2203 = vsel %vm2187, %v2170, %v1553
      %v2204 = vsel %vm2187, %v2171, %v1555
      %v2205 = vsel %vm2187, %v2172, %v1557
      %v2206 = vsel %vm2187, %v2173, %v1559
      %v2207 = vsel %vm2187, %v2174, %v1561
      %v2208 = vsel %vm2187, %v2175, %v1563
      %v2209 = vsel %vm2187, %v2176, %v1565
      %v2210 = vsel %vm2187, %v2177, %v1567
      %v2211 = vsel %vm2187, %v2178, %v1569
      %v2212 = vsel %vm2187, %v2179, %v1571
      %v2213 = vsel %vm2187, %v2180, %v1573
      %v2214 = vsel %vm2187, %v2181, %v1575
      %v2215 = vsel %vm2187, %v2182, %v1577
      %v2216 = vsel %vm2187, %v2183, %v1579
      %v2217 = vsel %vm2187, %v2184, %v1581
      %v2218 = vsel %vm2187, %v2185, %v1583
      %v2219 = vsel %vm2187, %v2186, %v1585
      %vm2220 = vcmask 130048
      %v2221 = vsel %vm2220, %v2188, %v1625
      %v2222 = vsel %vm2220, %v2189, %v1627
      %v2223 = vsel %vm2220, %v2190, %v1629
      %v2224 = vsel %vm2220, %v2191, %v1631
      %v2225 = vsel %vm2220, %v2192, %v1633
      %v2226 = vsel %vm2220, %v2193, %v1635
      %v2227 = vsel %vm2220, %v2194, %v1637
      %v2228 = vsel %vm2220, %v2195, %v1639
      %v2229 = vsel %vm2220, %v2196, %v1641
      %v2230 = vsel %vm2220, %v2197, %v1643
      %v2231 = vsel %vm2220, %v2198, %v1645
      %v2232 = vsel %vm2220, %v2199, %v1647
      %v2233 = vsel %vm2220, %v2200, %v1649
      %v2234 = vsel %vm2220, %v2201, %v1651
      %v2235 = vsel %vm2220, %v2202, %v1653
      %v2236 = vsel %vm2220, %v2203, %v1655
      %v2237 = vsel %vm2220, %v2204, %v1657
      %v2238 = vsel %vm2220, %v2205, %v1659
      %v2239 = vsel %vm2220, %v2206, %v1661
      %v2240 = vsel %vm2220, %v2207, %v1663
      %v2241 = vsel %vm2220, %v2208, %v1665
      %v2242 = vsel %vm2220, %v2209, %v1667
      %v2243 = vsel %vm2220, %v2210, %v1669
      %v2244 = vsel %vm2220, %v2211, %v1671
      %v2245 = vsel %vm2220, %v2212, %v1673
      %v2246 = vsel %vm2220, %v2213, %v1675
      %v2247 = vsel %vm2220, %v2214, %v1677
      %v2248 = vsel %vm2220, %v2215, %v1679
      %v2249 = vsel %vm2220, %v2216, %v1681
      %v2250 = vsel %vm2220, %v2217, %v1683
      %v2251 = vsel %vm2220, %v2218, %v1685
      %v2252 = vsel %vm2220, %v2219, %v1687
      %vm2253 = vcmask 162816
      %v2254 = vsel %vm2253, %v2221, %v1726
      %v2255 = vsel %vm2253, %v2222, %v1728
      %v2256 = vsel %vm2253, %v2223, %v1730
      %v2257 = vsel %vm2253, %v2224, %v1732
      %v2258 = vsel %vm2253, %v2225, %v1734
      %v2259 = vsel %vm2253, %v2226, %v1736
      %v2260 = vsel %vm2253, %v2227, %v1738
      %v2261 = vsel %vm2253, %v2228, %v1740
      %v2262 = vsel %vm2253, %v2229, %v1742
      %v2263 = vsel %vm2253, %v2230, %v1744
      %v2264 = vsel %vm2253, %v2231, %v1746
      %v2265 = vsel %vm2253, %v2232, %v1748
      %v2266 = vsel %vm2253, %v2233, %v1750
      %v2267 = vsel %vm2253, %v2234, %v1752
      %v2268 = vsel %vm2253, %v2235, %v1754
      %v2269 = vsel %vm2253, %v2236, %v1756
      %v2270 = vsel %vm2253, %v2237, %v1758
      %v2271 = vsel %vm2253, %v2238, %v1760
      %v2272 = vsel %vm2253, %v2239, %v1762
      %v2273 = vsel %vm2253, %v2240, %v1764
      %v2274 = vsel %vm2253, %v2241, %v1766
      %v2275 = vsel %vm2253, %v2242, %v1768
      %v2276 = vsel %vm2253, %v2243, %v1770
      %v2277 = vsel %vm2253, %v2244, %v1772
      %v2278 = vsel %vm2253, %v2245, %v1774
      %v2279 = vsel %vm2253, %v2246, %v1776
      %v2280 = vsel %vm2253, %v2247, %v1778
      %v2281 = vsel %vm2253, %v2248, %v1780
      %v2282 = vsel %vm2253, %v2249, %v1782
      %v2283 = vsel %vm2253, %v2250, %v1784
      %v2284 = vsel %vm2253, %v2251, %v1786
      %v2285 = vsel %vm2253, %v2252, %v1788
      %vm2286 = vcmask 195584
      %v2287 = vsel %vm2286, %v2254, %v1824
      %v2288 = vsel %vm2286, %v2255, %v1826
      %v2289 = vsel %vm2286, %v2256, %v1828
      %v2290 = vsel %vm2286, %v2257, %v1830
      %v2291 = vsel %vm2286, %v2258, %v1832
      %v2292 = vsel %vm2286, %v2259, %v1834
      %v2293 = vsel %vm2286, %v2260, %v1836
      %v2294 = vsel %vm2286, %v2261, %v1838
      %v2295 = vsel %vm2286, %v2262, %v1840
      %v2296 = vsel %vm2286, %v2263, %v1842
      %v2297 = vsel %vm2286, %v2264, %v1844
      %v2298 = vsel %vm2286, %v2265, %v1846
      %v2299 = vsel %vm2286, %v2266, %v1848
      %v2300 = vsel %vm2286, %v2267, %v1850
      %v2301 = vsel %vm2286, %v2268, %v1852
      %v2302 = vsel %vm2286, %v2269, %v1854
      %v2303 = vsel %vm2286, %v2270, %v1856
      %v2304 = vsel %vm2286, %v2271, %v1858
      %v2305 = vsel %vm2286, %v2272, %v1860
      %v2306 = vsel %vm2286, %v2273, %v1862
      %v2307 = vsel %vm2286, %v2274, %v1864
      %v2308 = vsel %vm2286, %v2275, %v1866
      %v2309 = vsel %vm2286, %v2276, %v1868
      %v2310 = vsel %vm2286, %v2277, %v1870
      %v2311 = vsel %vm2286, %v2278, %v1872
      %v2312 = vsel %vm2286, %v2279, %v1874
      %v2313 = vsel %vm2286, %v2280, %v1876
      %v2314 = vsel %vm2286, %v2281, %v1878
      %v2315 = vsel %vm2286, %v2282, %v1880
      %v2316 = vsel %vm2286, %v2283, %v1882
      %v2317 = vsel %vm2286, %v2284, %v1884
      %v2318 = vsel %vm2286, %v2285, %v1886
      %vm2319 = vcmask 228352
      %v2320 = vsel %vm2319, %v2287, %v1926
      %v2321 = vsel %vm2319, %v2288, %v1928
      %v2322 = vsel %vm2319, %v2289, %v1930
      %v2323 = vsel %vm2319, %v2290, %v1932
      %v2324 = vsel %vm2319, %v2291, %v1934
      %v2325 = vsel %vm2319, %v2292, %v1936
      %v2326 = vsel %vm2319, %v2293, %v1938
      %v2327 = vsel %vm2319, %v2294, %v1940
      %v2328 = vsel %vm2319, %v2295, %v1942
      %v2329 = vsel %vm2319, %v2296, %v1944
      %v2330 = vsel %vm2319, %v2297, %v1946
      %v2331 = vsel %vm2319, %v2298, %v1948
      %v2332 = vsel %vm2319, %v2299, %v1950
      %v2333 = vsel %vm2319, %v2300, %v1952
      %v2334 = vsel %vm2319, %v2301, %v1954
      %v2335 = vsel %vm2319, %v2302, %v1956
      %v2336 = vsel %vm2319, %v2303, %v1958
      %v2337 = vsel %vm2319, %v2304, %v1960
      %v2338 = vsel %vm2319, %v2305, %v1962
      %v2339 = vsel %vm2319, %v2306, %v1964
      %v2340 = vsel %vm2319, %v2307, %v1966
      %v2341 = vsel %vm2319, %v2308, %v1968
      %v2342 = vsel %vm2319, %v2309, %v1970
      %v2343 = vsel %vm2319, %v2310, %v1972
      %v2344 = vsel %vm2319, %v2311, %v1974
      %v2345 = vsel %vm2319, %v2312, %v1976
      %v2346 = vsel %vm2319, %v2313, %v1978
      %v2347 = vsel %vm2319, %v2314, %v1980
      %v2348 = vsel %vm2319, %v2315, %v1982
      %v2349 = vsel %vm2319, %v2316, %v1984
      %v2350 = vsel %vm2319, %v2317, %v1986
      %v2351 = vsel %vm2319, %v2318, %v1988
      %vm2352 = vcmask 261120
      %v2353 = vsel %vm2352, %v2320, %v2027
      %v2354 = vsel %vm2352, %v2321, %v2029
      %v2355 = vsel %vm2352, %v2322, %v2031
      %v2356 = vsel %vm2352, %v2323, %v2033
      %v2357 = vsel %vm2352, %v2324, %v2035
      %v2358 = vsel %vm2352, %v2325, %v2037
      %v2359 = vsel %vm2352, %v2326, %v2039
      %v2360 = vsel %vm2352, %v2327, %v2041
      %v2361 = vsel %vm2352, %v2328, %v2043
      %v2362 = vsel %vm2352, %v2329, %v2045
      %v2363 = vsel %vm2352, %v2330, %v2047
      %v2364 = vsel %vm2352, %v2331, %v2049
      %v2365 = vsel %vm2352, %v2332, %v2051
      %v2366 = vsel %vm2352, %v2333, %v2053
      %v2367 = vsel %vm2352, %v2334, %v2055
      %v2368 = vsel %vm2352, %v2335, %v2057
      %v2369 = vsel %vm2352, %v2336, %v2059
      %v2370 = vsel %vm2352, %v2337, %v2061
      %v2371 = vsel %vm2352, %v2338, %v2063
      %v2372 = vsel %vm2352, %v2339, %v2065
      %v2373 = vsel %vm2352, %v2340, %v2067
      %v2374 = vsel %vm2352, %v2341, %v2069
      %v2375 = vsel %vm2352, %v2342, %v2071
      %v2376 = vsel %vm2352, %v2343, %v2073
      %v2377 = vsel %vm2352, %v2344, %v2075
      %v2378 = vsel %vm2352, %v2345, %v2077
      %v2379 = vsel %vm2352, %v2346, %v2079
      %v2380 = vsel %vm2352, %v2347, %v2081
      %v2381 = vsel %vm2352, %v2348, %v2083
      %v2382 = vsel %vm2352, %v2349, %v2085
      %v2383 = vsel %vm2352, %v2350, %v2087
      %v2384 = vsel %vm2352, %v2351, %v2089
      %v2385 = vpack.c.bf16 %v2354, %v2353
      %v2386 = vpack.c.bf16 %v2356, %v2355
      %v2387 = vpack.c.bf16 %v2358, %v2357
      %v2388 = vpack.c.bf16 %v2360, %v2359
      %v2389 = vpack.c.bf16 %v2362, %v2361
      %v2390 = vpack.c.bf16 %v2364, %v2363
      %v2391 = vpack.c.bf16 %v2366, %v2365
      %v2392 = vpack.c.bf16 %v2368, %v2367
      %v2393 = vpack.c.bf16 %v2370, %v2369
      %v2394 = vpack.c.bf16 %v2372, %v2371
      %v2395 = vpack.c.bf16 %v2374, %v2373
      %v2396 = vpack.c.bf16 %v2376, %v2375
      %v2397 = vpack.c.bf16 %v2378, %v2377
      %v2398 = vpack.c.bf16 %v2380, %v2379
      %v2399 = vpack.c.bf16 %v2382, %v2381
      %v2400 = vpack.c.bf16 %v2384, %v2383
      %v2401 = vld [vmem:[%s4] sm:$0xf]
      %v2402 = vld [vmem:[%s4 + $0x4] sm:$0xf]
      %v2403 = vld [vmem:[%s4 + $0x8] sm:$0xf]
      %v2404 = vld [vmem:[%s4 + $0xc] sm:$0xf]
      %v2405 = vld [vmem:[%s4 + $0x10] sm:$0x3]
      %v2406 = vld [vmem:[%s5] sm:$0x1]
      %v2408 = vlaneseq
      %v2409 = vshrl.u32 %v2408, 7
      %v2410 = vsub.s32 0, %v2409
      %v2411 = vrot.slane %v2406, %v2410
      %v2418 = vunpack.c.l.b16 %v2401
      %v2419 = vunpack.c.l.b16 %v2402
      %v2420 = vunpack.c.l.b16 %v2403
      %v2421 = vunpack.c.l.b16 %v2404
      %v2422 = vunpack.c.l.b16 %v2405
      %v2423 = vpack.c.b16 %v2419, %v2418
      %v2424 = vpack.c.b16 %v2421, %v2420
      %v2425 = vpack.c.b16 %v2422, %v2422
      %vm2428 = vcmask 293888
      %v2430 = vsel %vm2428, %v2385, 0
      %v2433 = vsel %vm2428, %v2386, 0
      %v2436 = vsel %vm2428, %v2387, 0
      %v2439 = vsel %vm2428, %v2388, 0
      %v2442 = vsel %vm2428, %v2389, 0
      %v2445 = vsel %vm2428, %v2390, 0
      %v2448 = vsel %vm2428, %v2391, 0
      %v2451 = vsel %vm2428, %v2392, 0
      %v2454 = vsel %vm2428, %v2393, 0
      %v2457 = vsel %vm2428, %v2394, 0
      %v2460 = vsel %vm2428, %v2395, 0
      %v2463 = vsel %vm2428, %v2396, 0
      %v2466 = vsel %vm2428, %v2397, 0
      %v2469 = vsel %vm2428, %v2398, 0
      %v2472 = vsel %vm2428, %v2399, 0
      %v2475 = vsel %vm2428, %v2400, 0
      %vm2477 = vcmask 1041408
      %v2479 = vsel %vm2477, %v2425, 0
      %2481 = vmatprep.subr.bf16.mxu0 0
      %2482 = vmatpush1.bf16.msra.mxu0 %v2423
      %2483 = vmatprep.subr.bf16.mxu0 0
      %2484 = vmatpush1.bf16.msra.mxu0 %v2424
      %2485 = vmatprep.subr.bf16.mxu0 0
      %2486 = vmatpush1.bf16.msra.mxu0 %v2479
      %2487 = vmatprep.subr.bf16.mxu0 0
      %2488 = vmatpush1.bf16.msra.mxu0 0
      %2489 = vmatprep.subr.bf16.mxu0 0
      %2490 = vmatpush1.bf16.msra.mxu0 0
      %2491 = vmatprep.subr.bf16.mxu0 0
      %2492 = vmatpush1.bf16.msra.mxu0 0
      %2493 = vmatprep.subr.bf16.mxu0 0
      %2494 = vmatpush1.bf16.msra.mxu0 0
      %2495 = vmatprep.subr.bf16.mxu0 0
      %2496 = vmatpush1.bf16.msra.mxu0 0
      %2497 = vmatprep.subr.bf16.mxu0 0
      %2498 = vmatpush1.bf16.msra.mxu0 0
      %2499 = vmatprep.subr.bf16.mxu0 0
      %2500 = vmatpush1.bf16.msra.mxu0 0
      %2501 = vmatprep.subr.bf16.mxu0 0
      %2502 = vmatpush1.bf16.msra.mxu0 0
      %2503 = vmatprep.subr.bf16.mxu0 0
      %2504 = vmatpush1.bf16.msra.mxu0 0
      %2505 = vmatprep.subr.bf16.mxu0 0
      %2506 = vmatpush1.bf16.msra.mxu0 0
      %2507 = vmatprep.subr.bf16.mxu0 0
      %2508 = vmatpush1.bf16.msra.mxu0 0
      %2509 = vmatprep.subr.bf16.mxu0 0
      %2510 = vmatpush1.bf16.msra.mxu0 0
      %2511 = vmatprep.subr.bf16.mxu0 0
      %2512 = vmatpush1.bf16.msra.mxu0 0
      %2513 = vmatprep.mubr.bf16.mxu0 0
      %2514 = vmatmul.mubr.bf16.gmra.mrb[0].mxu0 %v2430
      %v2515 = vpop.f32.mrb[0].mxu0
      %v2516 = vadd.f32 %v2411, %v2515
      %v2517 = vpop.f32.mrb[0].mxu0
      %v2518 = vpop.f32.mrb[0].mxu0
      %v2519 = vadd.f32 %v2411, %v2518
      %v2520 = vpop.f32.mrb[0].mxu0
      %2521 = vmatprep.mubr.bf16.mxu0 0
      %2522 = vmatmul.mubr.bf16.gmra.mrb[0].mxu0 %v2433
      %v2523 = vpop.f32.mrb[0].mxu0
      %v2524 = vadd.f32 %v2411, %v2523
      %v2525 = vpop.f32.mrb[0].mxu0
      %v2526 = vpop.f32.mrb[0].mxu0
      %v2527 = vadd.f32 %v2411, %v2526
      %v2528 = vpop.f32.mrb[0].mxu0
      %2529 = vmatprep.mubr.bf16.mxu0 0
      %2530 = vmatmul.mubr.bf16.gmra.mrb[0].mxu0 %v2436
      %v2531 = vpop.f32.mrb[0].mxu0
      %v2532 = vadd.f32 %v2411, %v2531
      %v2533 = vpop.f32.mrb[0].mxu0
      %v2534 = vpop.f32.mrb[0].mxu0
      %v2535 = vadd.f32 %v2411, %v2534
      %v2536 = vpop.f32.mrb[0].mxu0
      %2537 = vmatprep.mubr.bf16.mxu0 0
      %2538 = vmatmul.mubr.bf16.gmra.mrb[0].mxu0 %v2439
      %v2539 = vpop.f32.mrb[0].mxu0
      %v2540 = vadd.f32 %v2411, %v2539
      %v2541 = vpop.f32.mrb[0].mxu0
      %v2542 = vpop.f32.mrb[0].mxu0
      %v2543 = vadd.f32 %v2411, %v2542
      %v2544 = vpop.f32.mrb[0].mxu0
      %2545 = vmatprep.mubr.bf16.mxu0 0
      %2546 = vmatmul.mubr.bf16.gmra.mrb[0].mxu0 %v2442
      %v2547 = vpop.f32.mrb[0].mxu0
      %v2548 = vadd.f32 %v2411, %v2547
      %v2549 = vpop.f32.mrb[0].mxu0
      %v2550 = vpop.f32.mrb[0].mxu0
      %v2551 = vadd.f32 %v2411, %v2550
      %v2552 = vpop.f32.mrb[0].mxu0
      %2553 = vmatprep.mubr.bf16.mxu0 0
      %2554 = vmatmul.mubr.bf16.gmra.mrb[0].mxu0 %v2445
      %v2555 = vpop.f32.mrb[0].mxu0
      %v2556 = vadd.f32 %v2411, %v2555
      %v2557 = vpop.f32.mrb[0].mxu0
      %v2558 = vpop.f32.mrb[0].mxu0
      %v2559 = vadd.f32 %v2411, %v2558
      %v2560 = vpop.f32.mrb[0].mxu0
      %2561 = vmatprep.mubr.bf16.mxu0 0
      %2562 = vmatmul.mubr.bf16.gmra.mrb[0].mxu0 %v2448
      %v2563 = vpop.f32.mrb[0].mxu0
      %v2564 = vadd.f32 %v2411, %v2563
      %v2565 = vpop.f32.mrb[0].mxu0
      %v2566 = vpop.f32.mrb[0].mxu0
      %v2567 = vadd.f32 %v2411, %v2566
      %v2568 = vpop.f32.mrb[0].mxu0
      %2569 = vmatprep.mubr.bf16.mxu0 0
      %2570 = vmatmul.mubr.bf16.gmra.mrb[0].mxu0 %v2451
      %v2571 = vpop.f32.mrb[0].mxu0
      %v2572 = vadd.f32 %v2411, %v2571
      %v2573 = vpop.f32.mrb[0].mxu0
      %v2574 = vpop.f32.mrb[0].mxu0
      %v2575 = vadd.f32 %v2411, %v2574
      %v2576 = vpop.f32.mrb[0].mxu0
      %2577 = vmatprep.mubr.bf16.mxu0 0
      %2578 = vmatmul.mubr.bf16.gmra.mrb[0].mxu0 %v2454
      %v2579 = vpop.f32.mrb[0].mxu0
      %v2580 = vadd.f32 %v2411, %v2579
      %v2581 = vpop.f32.mrb[0].mxu0
      %v2582 = vpop.f32.mrb[0].mxu0
      %v2583 = vadd.f32 %v2411, %v2582
      %v2584 = vpop.f32.mrb[0].mxu0
      %2585 = vmatprep.mubr.bf16.mxu0 0
      %2586 = vmatmul.mubr.bf16.gmra.mrb[0].mxu0 %v2457
      %v2587 = vpop.f32.mrb[0].mxu0
      %v2588 = vadd.f32 %v2411, %v2587
      %v2589 = vpop.f32.mrb[0].mxu0
      %v2590 = vpop.f32.mrb[0].mxu0
      %v2591 = vadd.f32 %v2411, %v2590
      %v2592 = vpop.f32.mrb[0].mxu0
      %2593 = vmatprep.mubr.bf16.mxu0 0
      %2594 = vmatmul.mubr.bf16.gmra.mrb[0].mxu0 %v2460
      %v2595 = vpop.f32.mrb[0].mxu0
      %v2596 = vadd.f32 %v2411, %v2595
      %v2597 = vpop.f32.mrb[0].mxu0
      %v2598 = vpop.f32.mrb[0].mxu0
      %v2599 = vadd.f32 %v2411, %v2598
      %v2600 = vpop.f32.mrb[0].mxu0
      %2601 = vmatprep.mubr.bf16.mxu0 0
      %2602 = vmatmul.mubr.bf16.gmra.mrb[0].mxu0 %v2463
      %v2603 = vpop.f32.mrb[0].mxu0
      %v2604 = vadd.f32 %v2411, %v2603
      %v2605 = vpop.f32.mrb[0].mxu0
      %v2606 = vpop.f32.mrb[0].mxu0
      %v2607 = vadd.f32 %v2411, %v2606
      %v2608 = vpop.f32.mrb[0].mxu0
      %2609 = vmatprep.mubr.bf16.mxu0 0
      %2610 = vmatmul.mubr.bf16.gmra.mrb[0].mxu0 %v2466
      %v2611 = vpop.f32.mrb[0].mxu0
      %v2612 = vadd.f32 %v2411, %v2611
      %v2613 = vpop.f32.mrb[0].mxu0
      %v2614 = vpop.f32.mrb[0].mxu0
      %v2615 = vadd.f32 %v2411, %v2614
      %v2616 = vpop.f32.mrb[0].mxu0
      %2617 = vmatprep.mubr.bf16.mxu0 0
      %2618 = vmatmul.mubr.bf16.gmra.mrb[0].mxu0 %v2469
      %v2619 = vpop.f32.mrb[0].mxu0
      %v2620 = vadd.f32 %v2411, %v2619
      %v2621 = vpop.f32.mrb[0].mxu0
      %v2622 = vpop.f32.mrb[0].mxu0
      %v2623 = vadd.f32 %v2411, %v2622
      %v2624 = vpop.f32.mrb[0].mxu0
      %2625 = vmatprep.mubr.bf16.mxu0 0
      %2626 = vmatmul.mubr.bf16.gmra.mrb[0].mxu0 %v2472
      %v2627 = vpop.f32.mrb[0].mxu0
      %v2628 = vadd.f32 %v2411, %v2627
      %v2629 = vpop.f32.mrb[0].mxu0
      %v2630 = vpop.f32.mrb[0].mxu0
      %v2631 = vadd.f32 %v2411, %v2630
      %v2632 = vpop.f32.mrb[0].mxu0
      %2633 = vmatprep.mubr.bf16.mxu0 0
      %2634 = vmatmul.mubr.bf16.gmra.mrb[0].mxu0 %v2475
      %v2635 = vpop.f32.mrb[0].mxu0
      %v2636 = vadd.f32 %v2411, %v2635
      %v2637 = vpop.f32.mrb[0].mxu0
      %v2638 = vpop.f32.mrb[0].mxu0
      %v2639 = vadd.f32 %v2411, %v2638
      %v2640 = vpop.f32.mrb[0].mxu0
      %2641 = vdwg.mxu0
      %v2642 = vmax.f32 %v2516, 0.0
      %v2643 = vmax.f32 %v2519, 0.0
      %v2644 = vmax.f32 %v2524, 0.0
      %v2645 = vmax.f32 %v2527, 0.0
      %v2646 = vmax.f32 %v2532, 0.0
      %v2647 = vmax.f32 %v2535, 0.0
      %v2648 = vmax.f32 %v2540, 0.0
      %v2649 = vmax.f32 %v2543, 0.0
      %v2650 = vmax.f32 %v2548, 0.0
      %v2651 = vmax.f32 %v2551, 0.0
      %v2652 = vmax.f32 %v2556, 0.0
      %v2653 = vmax.f32 %v2559, 0.0
      %v2654 = vmax.f32 %v2564, 0.0
      %v2655 = vmax.f32 %v2567, 0.0
      %v2656 = vmax.f32 %v2572, 0.0
      %v2657 = vmax.f32 %v2575, 0.0
      %v2658 = vmax.f32 %v2580, 0.0
      %v2659 = vmax.f32 %v2583, 0.0
      %v2660 = vmax.f32 %v2588, 0.0
      %v2661 = vmax.f32 %v2591, 0.0
      %v2662 = vmax.f32 %v2596, 0.0
      %v2663 = vmax.f32 %v2599, 0.0
      %v2664 = vmax.f32 %v2604, 0.0
      %v2665 = vmax.f32 %v2607, 0.0
      %v2666 = vmax.f32 %v2612, 0.0
      %v2667 = vmax.f32 %v2615, 0.0
      %v2668 = vmax.f32 %v2620, 0.0
      %v2669 = vmax.f32 %v2623, 0.0
      %v2670 = vmax.f32 %v2628, 0.0
      %v2671 = vmax.f32 %v2631, 0.0
      %v2672 = vmax.f32 %v2636, 0.0
      %v2673 = vmax.f32 %v2639, 0.0
      %2674 = vxpose.xlu0.b32.start [1/16] %v2642, 128
      %2675 = vxpose.xlu0.b32.cont [2/16] %v2643, 128
      %2676 = vxpose.xlu0.b32.cont [3/16] %v2644, 128
      %2677 = vxpose.xlu0.b32.cont [4/16] %v2645, 128
      %2678 = vxpose.xlu0.b32.cont [5/16] %v2646, 128
      %2679 = vxpose.xlu0.b32.cont [6/16] %v2647, 128
      %2680 = vxpose.xlu0.b32.cont [7/16] %v2648, 128
      %2681 = vxpose.xlu0.b32.cont [8/16] %v2649, 128
      %2682 = vxpose.xlu0.b32.cont [9/16] %v2650, 128
      %2683 = vxpose.xlu0.b32.cont [10/16] %v2651, 128
      %2684 = vxpose.xlu0.b32.cont [11/16] %v2652, 128
      %2685 = vxpose.xlu0.b32.cont [12/16] %v2653, 128
      %2686 = vxpose.xlu0.b32.cont [13/16] %v2654, 128
      %2687 = vxpose.xlu0.b32.cont [14/16] %v2655, 128
      %2688 = vxpose.xlu0.b32.cont [15/16] %v2656, 128
      %2689 = vxpose.xlu0.b32.end [16/16] %v2657, 128
      %v2690 = vpop.trf.xlu0
      %v2691 = vpop.trf.xlu0
      %v2692 = vpop.trf.xlu0
      %v2693 = vpop.trf.xlu0
      %v2694 = vpop.trf.xlu0
      %v2695 = vpop.trf.xlu0
      %v2696 = vpop.trf.xlu0
      %v2697 = vpop.trf.xlu0
      %v2698 = vpop.trf.xlu0
      %v2699 = vpop.trf.xlu0
      %v2700 = vpop.trf.xlu0
      %v2701 = vpop.trf.xlu0
      %v2702 = vpop.trf.xlu0
      %v2703 = vpop.trf.xlu0
      %v2704 = vpop.trf.xlu0
      %v2705 = vpop.trf.xlu0
      %2706 = vxpose.xlu0.b32.start [1/16] %v2658, 128
      %2707 = vxpose.xlu0.b32.cont [2/16] %v2659, 128
      %2708 = vxpose.xlu0.b32.cont [3/16] %v2660, 128
      %2709 = vxpose.xlu0.b32.cont [4/16] %v2661, 128
      %2710 = vxpose.xlu0.b32.cont [5/16] %v2662, 128
      %2711 = vxpose.xlu0.b32.cont [6/16] %v2663, 128
      %2712 = vxpose.xlu0.b32.cont [7/16] %v2664, 128
      %2713 = vxpose.xlu0.b32.cont [8/16] %v2665, 128
      %2714 = vxpose.xlu0.b32.cont [9/16] %v2666, 128
      %2715 = vxpose.xlu0.b32.cont [10/16] %v2667, 128
      %2716 = vxpose.xlu0.b32.cont [11/16] %v2668, 128
      %2717 = vxpose.xlu0.b32.cont [12/16] %v2669, 128
      %2718 = vxpose.xlu0.b32.cont [13/16] %v2670, 128
      %2719 = vxpose.xlu0.b32.cont [14/16] %v2671, 128
      %2720 = vxpose.xlu0.b32.cont [15/16] %v2672, 128
      %2721 = vxpose.xlu0.b32.end [16/16] %v2673, 128
      %v2722 = vpop.trf.xlu0
      %v2723 = vpop.trf.xlu0
      %v2724 = vpop.trf.xlu0
      %v2725 = vpop.trf.xlu0
      %v2726 = vpop.trf.xlu0
      %v2727 = vpop.trf.xlu0
      %v2728 = vpop.trf.xlu0
      %v2729 = vpop.trf.xlu0
      %v2730 = vpop.trf.xlu0
      %v2731 = vpop.trf.xlu0
      %v2732 = vpop.trf.xlu0
      %v2733 = vpop.trf.xlu0
      %v2734 = vpop.trf.xlu0
      %v2735 = vpop.trf.xlu0
      %v2736 = vpop.trf.xlu0
      %v2737 = vpop.trf.xlu0
      %2738 = vst [vmem:[%s272] sm:$0xff] %v2690
      %2739 = vst [vmem:[%s272 + $0x8] sm:$0xff] %v2722
      %2740 = vst [vmem:[%s272 + $0x10] sm:$0xff] %v2691
      %2741 = vst [vmem:[%s272 + $0x18] sm:$0xff] %v2723
      %2742 = vst [vmem:[%s272 + $0x20] sm:$0xff] %v2692
      %2743 = vst [vmem:[%s272 + $0x28] sm:$0xff] %v2724
      %2744 = vst [vmem:[%s272 + $0x30] sm:$0xff] %v2693
      %2745 = vst [vmem:[%s272 + $0x38] sm:$0xff] %v2725
      %p2746 = scmp.lt.s32.totalorder %s21, 1
      %s2747 = scalar_select %p2746, %s21, 1
      %s2748 = smul.addr %s2747, 8
      %s2749 = smul.addr %s2748, 8
      %s2750 = scalar_lea.vmem %s6, %s2749
      // Predicated region
      $region45: #{gain_forward.5} parent=43 // pred_check
        %p2751 = pneg %p175
      $region46: #{gain_forward.5} parent=43 // pred_check_branch
        %2753 = sbr.rel (%p2751) target = $region48
      $region47: #{gain_forward.5} parent=43 // pred_region
        _
      $region48: #{gain_forward.5} parent=43 // pred_fallthru
        _
    $region44: #{gain_forward.5} parent=5 // pred_fallthru
      _
    %p2754 = scmp.le.s32.totalorder 2, %s16
    // Predicated region
    $region49: #{gain_forward.5} parent=5 // pred_check
      %p2755 = pneg %p2754
    $region50: #{gain_forward.5} parent=5 // pred_check_branch
      %2757 = sbr.rel (%p2755) target = $region52
    $region51: #{gain_forward.5} parent=5 // pred_region
      %s2758 = ssub.s32 %s16, 2
      // Predicated region
      $region53: #{gain_forward.5} parent=51 // pred_check
        %p2759 = pneg %p181
      $region54: #{gain_forward.5} parent=51 // pred_check_branch
        %2761 = sbr.rel (%p2759) target = $region56
      $region55: #{gain_forward.5} parent=51 // pred_region
        %p2762 = scmp.lt.s32.totalorder %s22, 1
        %s2763 = scalar_select %p2762, %s22, 1
        %s2764 = smul.addr %s2763, 8
        %s2765 = smul.addr %s2764, 8
        %s2766 = scalar_lea.vmem %s6, %s2765
      $region56: #{gain_forward.5} parent=51 // pred_fallthru
        _
    $region52: #{gain_forward.5} parent=5 // pred_fallthru
      _
  $region6: #{gain_forward.5} parent=0 // loop_footer
    %s20 = sadd.s32 1, %s16
  $region7: #{gain_forward.5} parent=0 // loop_footer_branch
    %15 = sbr.rel target = $region3
  $region8: #{gain_forward.5} parent=0 // loop_exit
    _

</llo_original>
